<compile_context>
chip_gen: v5e
topology: v5e:2x2
jax: 0.10.0
libtpu: 0.0.40
codegen_flags: <defaults>
</compile_context>

<pallas_src>
import functools

import jax
import jax.numpy as jnp
from jax.experimental import pallas as pl
from jax.experimental.pallas import tpu as pltpu


# ---------------------------------------------------------------------------
# Helpers
# ---------------------------------------------------------------------------
def _round_up(x, m):
    return (x + m - 1) // m * m


def _pad2d(x, rows, cols):
    pr, pc = rows - x.shape[0], cols - x.shape[1]
    if pr == 0 and pc == 0:
        return x
    return jnp.pad(x, ((0, pr), (0, pc)))


def _pad_axis(x, axis, new_size):
    pad = new_size - x.shape[axis]
    if pad == 0:
        return x
    widths = [(0, 0)] * x.ndim
    widths[axis] = (0, pad)
    return jnp.pad(x, widths)


def _default_vmem_limit():
    # v5e/v6e: 128 MiB physical VMEM -> 96 MiB scoped; v7x: 64 MiB -> 48 MiB.
    try:
        cap = pltpu.get_tpu_info().vmem_capacity_bytes
        return int(min(cap * 3 // 4, 96 * 1024 * 1024))
    except Exception:
        return 48 * 1024 * 1024


_VMEM_LIMIT = _default_vmem_limit()


def _cparams(dim_sems):
    return pltpu.CompilerParams(dimension_semantics=dim_sems,
                                vmem_limit_bytes=_VMEM_LIMIT)


def _bound_tm_for_vmem(tm, D, tn, n_weights, x_bytes, w_bytes, o_bytes):
    """Shrink the row tile so (double-buffered x + xn scratch + weights + out)
    fits the generation's scoped VMEM (v5e/v6e keep big tiles, v7x halves)."""
    budget = int(_VMEM_LIMIT * 0.8)

    def est(t):
        return (3 * t * D * x_bytes                       # x (2 bufs) + xn scratch
                + 2 * n_weights * D * tn * w_bytes        # weight blocks (2 bufs)
                + 2 * t * tn * o_bytes * n_weights)       # output blocks (2 bufs)

    while tm > 256 and est(tm) > budget:
        tm = _round_up(tm // 2, 8)
    return tm


# ---------------------------------------------------------------------------
# Generic K/N/M-tiled matmul (optional fused residual add in the epilogue)
# ---------------------------------------------------------------------------
def _matmul_kernel(a_ref, b_ref, o_ref, acc_ref):
    @pl.when(pl.program_id(2) == 0)
    def _():
        acc_ref[...] = jnp.zeros_like(acc_ref)

    acc_ref[...] += jnp.dot(a_ref[...], b_ref[...],
                            preferred_element_type=jnp.float32)

    @pl.when(pl.program_id(2) == pl.num_programs(2) - 1)
    def _():
        o_ref[...] = acc_ref[...].astype(o_ref.dtype)


def _matmul_res_kernel(a_ref, b_ref, r_ref, o_ref, acc_ref):
    @pl.when(pl.program_id(2) == 0)
    def _():
        acc_ref[...] = jnp.zeros_like(acc_ref)

    acc_ref[...] += jnp.dot(a_ref[...], b_ref[...],
                            preferred_element_type=jnp.float32)

    @pl.when(pl.program_id(2) == pl.num_programs(2) - 1)
    def _():
        o_ref[...] = (acc_ref[...] + r_ref[...].astype(jnp.float32)
                      ).astype(o_ref.dtype)


def matmul(a, b, residual=None, *, out_dtype=None, bm=512, bn=1024, bk=1024):
    """a: (M, K), b: (K, N) -> (M, N); optionally adds `residual` (M, N)."""
    M, K = a.shape
    K2, N = b.shape
    assert K == K2
    out_dtype = out_dtype if out_dtype is not None else a.dtype

    tm = M if M <= bm else bm
    tn = N if N <= bn else bn
    tk = K if K <= bk else bk
    Mp, Kp, Np = _round_up(M, tm), _round_up(K, tk), _round_up(N, tn)

    a_p = _pad2d(a, Mp, Kp)
    b_p = _pad2d(b, Kp, Np)

    in_specs = [
        pl.BlockSpec((tm, tk), lambda i, j, k: (i, k)),
        pl.BlockSpec((tk, tn), lambda i, j, k: (k, j)),
    ]
    operands = [a_p, b_p]
    kernel = _matmul_kernel
    if residual is not None:
        in_specs.append(pl.BlockSpec((tm, tn), lambda i, j, k: (i, j)))
        operands.append(_pad2d(residual, Mp, Np))
        kernel = _matmul_res_kernel

    out = pl.pallas_call(
        kernel,
        out_shape=jax.ShapeDtypeStruct((Mp, Np), out_dtype),
        grid=(Mp // tm, Np // tn, Kp // tk),
        in_specs=in_specs,
        out_specs=pl.BlockSpec((tm, tn), lambda i, j, k: (i, j)),
        scratch_shapes=[pltpu.VMEM((tm, tn), jnp.float32)],
        compiler_params=_cparams(("parallel", "parallel", "arbitrary")),
    )(*operands)
    if (Mp, Np) != (M, N):
        out = out[:M, :N]
    return out


# ---------------------------------------------------------------------------
# RMSNorm fused into a matmul prologue (qkv projection, lm_head).
# The normalized activation block is computed once per row-block (j == 0) and
# cached in a VMEM scratch; all j > 0 weight tiles reuse it.
# ---------------------------------------------------------------------------
def _rms_matmul_kernel(x_ref, g_ref, w_ref, o_ref, xn_ref, *, eps, inv_d):
    @pl.when(pl.program_id(1) == 0)
    def _():
        x = x_ref[...].astype(jnp.float32)
        ms = jnp.sum(x * x, axis=-1, keepdims=True) * inv_d
        xn_ref[...] = ((x * jax.lax.rsqrt(ms + eps))
                       * g_ref[...].astype(jnp.float32)).astype(xn_ref.dtype)

    o_ref[...] = jnp.dot(xn_ref[...], w_ref[...],
                         preferred_element_type=jnp.float32).astype(o_ref.dtype)


def rms_matmul(x, gamma, w, *, out_dtype=None, eps=1e-6, bm=2048, bn=512):
    """RMSNorm(x) @ w.  x: (M, D), gamma: (D,), w: (D, N)."""
    M, D = x.shape
    _, N = w.shape
    out_dtype = out_dtype if out_dtype is not None else x.dtype

    tn = N if N <= bn else bn
    tm = M if M <= bm else bm
    tm = _bound_tm_for_vmem(tm, D, tn, n_weights=1,
                            x_bytes=x.dtype.itemsize, w_bytes=w.dtype.itemsize,
                            o_bytes=jnp.dtype(out_dtype).itemsize)
    Mp, Np = _round_up(M, tm), _round_up(N, tn)

    x_p = _pad2d(x, Mp, D)
    w_p = _pad2d(w, D, Np)
    g2 = gamma.reshape(1, D)

    kern = functools.partial(_rms_matmul_kernel, eps=eps, inv_d=1.0 / D)
    out = pl.pallas_call(
        kern,
        out_shape=jax.ShapeDtypeStruct((Mp, Np), out_dtype),
        grid=(Mp // tm, Np // tn),
        in_specs=[
            pl.BlockSpec((tm, D), lambda i, j: (i, 0)),
            pl.BlockSpec((1, D), lambda i, j: (0, 0)),
            pl.BlockSpec((D, tn), lambda i, j: (0, j)),
        ],
        out_specs=pl.BlockSpec((tm, tn), lambda i, j: (i, j)),
        scratch_shapes=[pltpu.VMEM((tm, D), x.dtype)],
        # j must stay "arbitrary": the cached xn scratch carries across j.
        compiler_params=_cparams(("parallel", "arbitrary")),
    )(x_p, g2, w_p)
    if (Mp, Np) != (M, N):
        out = out[:M, :N]
    return out


# ---------------------------------------------------------------------------
# RMSNorm + w1/w3 matmul + SwiGLU, all in one kernel (FFN up-projection)
# ---------------------------------------------------------------------------
def _rms_swiglu_kernel(x_ref, g_ref, w1_ref, w3_ref, o_ref, xn_ref, *, eps, inv_d):
    @pl.when(pl.program_id(1) == 0)
    def _():
        x = x_ref[...].astype(jnp.float32)
        ms = jnp.sum(x * x, axis=-1, keepdims=True) * inv_d
        xn_ref[...] = ((x * jax.lax.rsqrt(ms + eps))
                       * g_ref[...].astype(jnp.float32)).astype(xn_ref.dtype)

    xn = xn_ref[...]
    a = jnp.dot(xn, w1_ref[...], preferred_element_type=jnp.float32)
    b = jnp.dot(xn, w3_ref[...], preferred_element_type=jnp.float32)
    silu = a * (1.0 / (1.0 + jnp.exp(-a)))
    o_ref[...] = (silu * b).astype(o_ref.dtype)


def rms_swiglu(x, gamma, w1, w3, *, out_dtype=None, eps=1e-6, bm=2048, bn=512):
    """SiLU(RMSNorm(x) @ w1) * (RMSNorm(x) @ w3).  x: (M, D); w1, w3: (D, H)."""
    M, D = x.shape
    _, H = w1.shape
    out_dtype = out_dtype if out_dtype is not None else x.dtype

    tn = H if H <= bn else bn
    tm = M if M <= bm else bm
    tm = _bound_tm_for_vmem(tm, D, tn, n_weights=2,
                            x_bytes=x.dtype.itemsize, w_bytes=w1.dtype.itemsize,
                            o_bytes=jnp.dtype(out_dtype).itemsize)
    Mp, Np = _round_up(M, tm), _round_up(H, tn)

    x_p = _pad2d(x, Mp, D)
    w1_p = _pad2d(w1, D, Np)
    w3_p = _pad2d(w3, D, Np)
    g2 = gamma.reshape(1, D)

    kern = functools.partial(_rms_swiglu_kernel, eps=eps, inv_d=1.0 / D)
    out = pl.pallas_call(
        kern,
        out_shape=jax.ShapeDtypeStruct((Mp, Np), out_dtype),
        grid=(Mp // tm, Np // tn),
        in_specs=[
            pl.BlockSpec((tm, D), lambda i, j: (i, 0)),
            pl.BlockSpec((1, D), lambda i, j: (0, 0)),
            pl.BlockSpec((D, tn), lambda i, j: (0, j)),
            pl.BlockSpec((D, tn), lambda i, j: (0, j)),
        ],
        out_specs=pl.BlockSpec((tm, tn), lambda i, j: (i, j)),
        scratch_shapes=[pltpu.VMEM((tm, D), x.dtype)],
        compiler_params=_cparams(("parallel", "arbitrary")),
    )(x_p, g2, w1_p, w3_p)
    if (Mp, Np) != (M, H):
        out = out[:M, :H]
    return out


# ---------------------------------------------------------------------------
# Flash attention (online softmax, causal) with fused RoPE.
# grid = (B*H, T/tq, T/tk); K/V index maps are clamped so tiles above the
# causal diagonal are never DMA'd; the mask is only applied on diagonal tiles.
# RoPE uses the rotate-half form: out = x*cos_full + roll(x, Dh/2)*sin_signed,
# which is exactly the reference's interleaved (complex) RoPE under a fixed
# permutation of the Wq/Wk output columns (QK^T is invariant to it).
# ---------------------------------------------------------------------------
def _flash_kernel(q_ref, k_ref, v_ref, cq_ref, sq_ref, ck_ref, sk_ref, o_ref,
                  q_sc, m_sc, l_sc, acc_sc, *, scale, tq, tk, half):
    qi = pl.program_id(1)
    ki = pl.program_id(2)

    @pl.when(ki == 0)
    def _():
        m_sc[...] = jnp.full_like(m_sc, -1e30)
        l_sc[...] = jnp.zeros_like(l_sc)
        acc_sc[...] = jnp.zeros_like(acc_sc)
        # RoPE on the query tile, once per (b, i); scale folded in.
        q = q_ref[0].astype(jnp.float32)
        qr = q * cq_ref[...] + pltpu.roll(q, half, 1) * sq_ref[...]
        q_sc[...] = (qr * scale).astype(q_sc.dtype)

    def _step(apply_mask):
        # RoPE on the key tile (cheap VPU/XLU work, hides under the MXU).
        k = k_ref[0].astype(jnp.float32)
        kr = (k * ck_ref[...] + pltpu.roll(k, half, 1) * sk_ref[...]
              ).astype(k_ref.dtype)
        s = jax.lax.dot_general(q_sc[...], kr, (((1,), (1,)), ((), ())),
                                preferred_element_type=jnp.float32)
        if apply_mask:
            q_idx = qi * tq + jax.lax.broadcasted_iota(jnp.int32, (tq, tk), 0)
            k_idx = ki * tk + jax.lax.broadcasted_iota(jnp.int32, (tq, tk), 1)
            s = jnp.where(k_idx <= q_idx, s, -1e30)
        m_prev = m_sc[...]
        m_new = jnp.maximum(m_prev, jnp.max(s, axis=-1, keepdims=True))
        alpha = jnp.exp(m_prev - m_new)
        p = jnp.exp(s - m_new)
        l_sc[...] = alpha * l_sc[...] + jnp.sum(p, axis=-1, keepdims=True)
        acc_sc[...] = alpha * acc_sc[...] + jax.lax.dot_general(
            p.astype(v_ref.dtype), v_ref[0], (((1,), (0,)), ((), ())),
            preferred_element_type=jnp.float32)
        m_sc[...] = m_new

    @pl.when(ki < qi)          # strictly below the diagonal: no mask needed
    def _():
        _step(False)

    @pl.when(ki == qi)         # diagonal tile: apply the causal mask
    def _():
        _step(True)

    @pl.when(ki == pl.num_programs(2) - 1)
    def _():
        inv = pl.reciprocal(l_sc[...], approx=True)
        o_ref[0] = (acc_sc[...] * inv).astype(o_ref.dtype)


def flash_attention(q, k, v, cos, sin, *, tile=256):
    """q, k, v: (B*H, T, Dh); cos/sin: (T, Dh) rotate-half tables. Causal."""
    BH, T, Dh = q.shape
    t = T if T <= tile else tile
    Tp = _round_up(T, t)
    if Tp != T:
        q = _pad_axis(q, 1, Tp)
        k = _pad_axis(k, 1, Tp)
        v = _pad_axis(v, 1, Tp)
        cos = _pad_axis(cos, 0, Tp)
        sin = _pad_axis(sin, 0, Tp)
    nt = Tp // t
    scale = 1.0 / float(Dh) ** 0.5

    # Clamp K/V (and their rope tables) to the causal diagonal so skipped
    # tiles revisit the previous block and issue no new DMA.
    kv_idx = lambda b, i, j: (b, jnp.minimum(j, i), 0)
    kv_pos = lambda b, i, j: (jnp.minimum(j, i), 0)

    # TODO(synk): on v7x, pipeline_mode=pl.Buffered(3) on the K/V specs (or
    # tk=512) would hide the K/V copy under the shrunken per-tile compute.
    kern = functools.partial(_flash_kernel, scale=scale, tq=t, tk=t, half=Dh // 2)
    out = pl.pallas_call(
        kern,
        out_shape=jax.ShapeDtypeStruct((BH, Tp, Dh), q.dtype),
        grid=(BH, nt, nt),
        in_specs=[
            pl.BlockSpec((1, t, Dh), lambda b, i, j: (b, i, 0)),
            pl.BlockSpec((1, t, Dh), kv_idx),
            pl.BlockSpec((1, t, Dh), kv_idx),
            pl.BlockSpec((t, Dh), lambda b, i, j: (i, 0)),
            pl.BlockSpec((t, Dh), lambda b, i, j: (i, 0)),
            pl.BlockSpec((t, Dh), kv_pos),
            pl.BlockSpec((t, Dh), kv_pos),
        ],
        out_specs=pl.BlockSpec((1, t, Dh), lambda b, i, j: (b, i, 0)),
        scratch_shapes=[
            pltpu.VMEM((t, Dh), q.dtype),       # cached rotated/scaled Q tile
            pltpu.VMEM((t, 1), jnp.float32),    # running max
            pltpu.VMEM((t, 1), jnp.float32),    # running sum
            pltpu.VMEM((t, Dh), jnp.float32),   # output accumulator
        ],
        compiler_params=_cparams(("parallel", "parallel", "arbitrary")),
    )(q, k, v, cos, sin, cos, sin)
    if Tp != T:
        out = out[:, :T, :]
    return out


# ---------------------------------------------------------------------------
# JAX glue: RoPE tables, embedding lookup, layer / forward orchestration
# ---------------------------------------------------------------------------
def precompute_rope(dim, end, theta=10000.0):
    """Rotate-half RoPE tables: cos_full (end, dim), sin_signed (end, dim)."""
    freqs = 1.0 / (theta ** (jnp.arange(0, dim, 2, dtype=jnp.float32) / dim))
    t = jnp.arange(end, dtype=jnp.float32)
    ang = jnp.outer(t, freqs)                                   # (end, dim//2)
    cos = jnp.concatenate([jnp.cos(ang), jnp.cos(ang)], axis=-1)
    sin = jnp.concatenate([-jnp.sin(ang), jnp.sin(ang)], axis=-1)
    return cos, sin


def transformer_block(x, p, cos, sin, num_heads):
    B, T, D = x.shape
    Dh = D // num_heads
    M = B * T
    x2 = x.reshape(M, D)

    # --- attention sub-block: fused RMSNorm + qkv projection --------------
    qkv = rms_matmul(x2, p["attn_norm"], p["wqkv"])           # (M, 3D)
    qkv = qkv.reshape(B, T, 3, num_heads, Dh)
    # TODO(synk): at production shapes q/k/v can be read straight out of this
    # (B,T,3,H,Dh) slab by the flash kernel's BlockSpecs (head as a grid
    # axis), removing these transposes; kept in XLA glue for robustness.
    q = qkv[:, :, 0].transpose(0, 2, 1, 3).reshape(B * num_heads, T, Dh)
    k = qkv[:, :, 1].transpose(0, 2, 1, 3).reshape(B * num_heads, T, Dh)
    v = qkv[:, :, 2].transpose(0, 2, 1, 3).reshape(B * num_heads, T, Dh)

    o = flash_attention(q, k, v, cos, sin)                     # RoPE fused in-kernel
    o = o.reshape(B, num_heads, T, Dh).transpose(0, 2, 1, 3).reshape(M, D)
    x2 = matmul(o, p["wo"], residual=x2)                       # x + attn_out

    # --- FFN sub-block: fused RMSNorm + w1/w3 + SwiGLU, then down-proj -----
    f = rms_swiglu(x2, p["ffn_norm"], p["w1"], p["w3"])        # (M, hidden)
    x2 = matmul(f, p["w2"], residual=x2)                       # x + ffn_out
    return x2.reshape(B, T, D)


def transformer_forward(ids, params, cfg):
    B, T = ids.shape
    # TODO(synk): embedding gather has no rectangular BlockSpec form; kept in JAX.
    x = jnp.take(params["tok_embed"], ids, axis=0)             # (B, T, D) bf16
    cos = params["rope_cos"][:T]
    sin = params["rope_sin"][:T]
    for lp in params["layers"]:
        x = transformer_block(x, lp, cos, sin, cfg["num_heads"])
    # Final RMSNorm fused into the (vocab-tiled) lm_head matmul; logits in f32.
    logits = rms_matmul(x.reshape(B * T, cfg["d_model"]), params["final_norm"],
                        params["lm_head"], out_dtype=jnp.float32)
    logits = logits.reshape(B, T, cfg["vocab_size"])
    # targets=None path of the reference: ce_loss = 0.0; dense FFN => aux/z = 0.
    loss = jnp.float32(0.0)
    return logits, loss


# ---------------------------------------------------------------------------
# Deterministic parameter construction (bf16 weights, f32 norms).
# Note: to load PyTorch weights that used interleaved RoPE, permute the Wq/Wk
# output columns (even head-dim indices -> first half, odd -> second half);
# the attention logits are then bit-identical in exact arithmetic.
# ---------------------------------------------------------------------------
def init_params(key, cfg):
    D = cfg["d_model"]
    V = cfg["vocab_size"]
    H = cfg["hidden"]
    Dh = D // cfg["num_heads"]

    def normal(k, shape, scale=0.02):
        return (scale * jax.random.normal(k, shape, dtype=jnp.float32)
                ).astype(jnp.bfloat16)

    keys = jax.random.split(key, 2 + 5 * cfg["num_layer"])
    ki = iter(keys)

    layers = []
    for _ in range(cfg["num_layer"]):
        layers.append(
            dict(
                attn_norm=jnp.ones((D,), jnp.float32),
                wqkv=normal(next(ki), (D, 3 * D)),
                wo=normal(next(ki), (D, D)),
                ffn_norm=jnp.ones((D,), jnp.float32),
                w1=normal(next(ki), (D, H)),
                w3=normal(next(ki), (D, H)),
                w2=normal(next(ki), (H, D)),
            )
        )

    cos, sin = precompute_rope(Dh, cfg["seq_len"] * 2)
    return dict(
        tok_embed=normal(next(ki), (V, D)),
        layers=layers,
        final_norm=jnp.ones((D,), jnp.float32),
        lm_head=normal(next(ki), (D, V)),
        rope_cos=cos,
        rope_sin=sin,
    )


# ---------------------------------------------------------------------------
if __name__ == "__main__":
    cfg = dict(
        vocab_size=128,
        d_model=256,     # head_dim = 128 keeps the RoPE roll lane-aligned
        num_heads=2,
        num_layer=2,
        seq_len=8,
        hidden=512,
    )
    key = jax.random.PRNGKey(0)
    kp, kd = jax.random.split(key)
    params = init_params(kp, cfg)

    B, T = 2, cfg["seq_len"]
    ids = jax.random.randint(kd, (B, T), 0, cfg["vocab_size"], dtype=jnp.int32)

    fwd = jax.jit(functools.partial(transformer_forward, cfg=cfg))
    logits, loss = fwd(ids, params)
    jax.block_until_ready((logits, loss))

    assert logits.shape == (B, T, cfg["vocab_size"])
    assert logits.dtype == jnp.float32
    assert bool(jnp.all(jnp.isfinite(logits)))
    print("KERNEL_OK")
</pallas_src>

<mosaic_0001>
module attributes {stable_mosaic.version = 11 : i64} {
  func.func @_rms_swiglu_kernel(%arg0: i32, %arg1: i32, %arg2: memref<16x256xbf16, #tpu.memory_space<vmem>>, %arg3: memref<1x256xf32, #tpu.memory_space<vmem>>, %arg4: memref<256x512xbf16, #tpu.memory_space<vmem>>, %arg5: memref<256x512xbf16, #tpu.memory_space<vmem>>, %arg6: memref<16x512xbf16, #tpu.memory_space<vmem>>, %arg7: memref<16x256xbf16, #tpu.memory_space<vmem>>) attributes {dimension_semantics = [#tpu.dimension_semantics<parallel>, #tpu.dimension_semantics<arbitrary>], iteration_bounds = array<i64: 1, 1>, scalar_prefetch = 0 : i64, scratch_operands = 1 : i64, tpu.core_type = #tpu.core_type<tc>, window_params = [{transform_indices = @transform_0, window_bounds = array<i64: 16, 256>}, {pipeline_mode = #tpu.pipeline_mode<synchronous>, transform_indices = @transform_1, window_bounds = array<i64: 1, 256>}, {transform_indices = @transform_2, window_bounds = array<i64: 256, 512>}, {transform_indices = @transform_3, window_bounds = array<i64: 256, 512>}, {transform_indices = @transform_4, window_bounds = array<i64: 16, 512>}]} {
    %c0_i32 = arith.constant 0 : i32
    %0 = arith.cmpi eq, %arg1, %c0_i32 : i32
    %1 = arith.extui %0 : i1 to i32
    %c0_i32_0 = arith.constant 0 : i32
    %2 = arith.cmpi ne, %1, %c0_i32_0 : i32
    scf.if %2 {
      %c0_12 = arith.constant 0 : index
      %c0_13 = arith.constant 0 : index
      %19 = vector.load %arg2[%c0_12, %c0_13] : memref<16x256xbf16, #tpu.memory_space<vmem>>, vector<16x256xbf16>
      %20 = arith.extf %19 : vector<16x256xbf16> to vector<16x256xf32>
      %21 = arith.mulf %20, %20 : vector<16x256xf32>
      %cst_14 = arith.constant dense<0.000000e+00> : vector<16xf32>
      %22 = vector.multi_reduction <add>, %21, %cst_14 [1] : vector<16x256xf32> to vector<16xf32>
      %23 = vector.shape_cast %22 : vector<16xf32> to vector<16x1xf32>
      %cst_15 = arith.constant 3.906250e-03 : f32
      %24 = vector.broadcast %cst_15 : f32 to vector<16x1xf32>
      %25 = arith.mulf %23, %24 : vector<16x1xf32>
      %cst_16 = arith.constant 9.99999997E-7 : f32
      %26 = vector.broadcast %cst_16 : f32 to vector<16x1xf32>
      %27 = arith.addf %25, %26 : vector<16x1xf32>
      %28 = math.rsqrt %27 : vector<16x1xf32>
      %29 = vector.broadcast %28 : vector<16x1xf32> to vector<16x256xf32>
      %30 = arith.mulf %20, %29 : vector<16x256xf32>
      %c0_17 = arith.constant 0 : index
      %c0_18 = arith.constant 0 : index
      %31 = vector.load %arg3[%c0_17, %c0_18] : memref<1x256xf32, #tpu.memory_space<vmem>>, vector<1x256xf32>
      %32 = vector.broadcast %31 : vector<1x256xf32> to vector<16x256xf32>
      %33 = arith.mulf %30, %32 : vector<16x256xf32>
      %34 = arith.truncf %33 : vector<16x256xf32> to vector<16x256xbf16>
      %c0_19 = arith.constant 0 : index
      %c0_20 = arith.constant 0 : index
      %35 = vector.load %arg7[%c0_19, %c0_20] : memref<16x256xbf16, #tpu.memory_space<vmem>>, vector<16x256xbf16>
      tpu.vector_store %arg7[%c0_19, %c0_20], %34 {strides = array<i32>} : memref<16x256xbf16, #tpu.memory_space<vmem>>, vector<16x256xbf16>,
    } else {
    }
    %c0 = arith.constant 0 : index
    %c0_1 = arith.constant 0 : index
    %3 = vector.load %arg7[%c0, %c0_1] : memref<16x256xbf16, #tpu.memory_space<vmem>>, vector<16x256xbf16>
    %c0_2 = arith.constant 0 : index
    %c0_3 = arith.constant 0 : index
    %4 = vector.load %arg4[%c0_2, %c0_3] : memref<256x512xbf16, #tpu.memory_space<vmem>>, vector<256x512xbf16>
    %cst = arith.constant dense<0.000000e+00> : vector<16x512xf32>
    %5 = tpu.matmul %3, %4, %cst {dimension_numbers = #tpu.dot_dimension_numbers<[1], [0], [0], [1], [0, 0, 1, 1], [], []>} : vector<16x256xbf16>, vector<256x512xbf16>, vector<16x512xf32> -> vector<16x512xf32>
    %c0_4 = arith.constant 0 : index
    %c0_5 = arith.constant 0 : index
    %6 = vector.load %arg5[%c0_4, %c0_5] : memref<256x512xbf16, #tpu.memory_space<vmem>>, vector<256x512xbf16>
    %cst_6 = arith.constant dense<0.000000e+00> : vector<16x512xf32>
    %7 = tpu.matmul %3, %6, %cst_6 {dimension_numbers = #tpu.dot_dimension_numbers<[1], [0], [0], [1], [0, 0, 1, 1], [], []>} : vector<16x256xbf16>, vector<256x512xbf16>, vector<16x512xf32> -> vector<16x512xf32>
    %cst_7 = arith.constant 0.000000e+00 : f32
    %8 = vector.broadcast %cst_7 : f32 to vector<16x512xf32>
    %9 = arith.subf %8, %5 : vector<16x512xf32>
    %10 = math.exp %9 : vector<16x512xf32>
    %cst_8 = arith.constant 1.000000e+00 : f32
    %11 = vector.broadcast %cst_8 : f32 to vector<16x512xf32>
    %12 = arith.addf %11, %10 : vector<16x512xf32>
    %cst_9 = arith.constant 1.000000e+00 : f32
    %13 = vector.broadcast %cst_9 : f32 to vector<16x512xf32>
    %14 = arith.divf %13, %12 : vector<16x512xf32>
    %15 = arith.mulf %5, %14 : vector<16x512xf32>
    %16 = arith.mulf %15, %7 : vector<16x512xf32>
    %17 = arith.truncf %16 : vector<16x512xf32> to vector<16x512xbf16>
    %c0_10 = arith.constant 0 : index
    %c0_11 = arith.constant 0 : index
    %18 = vector.load %arg6[%c0_10, %c0_11] : memref<16x512xbf16, #tpu.memory_space<vmem>>, vector<16x512xbf16>
    tpu.vector_store %arg6[%c0_10, %c0_11], %17 {strides = array<i32>} : memref<16x512xbf16, #tpu.memory_space<vmem>>, vector<16x512xbf16>,
    return
  }
  func.func @transform_0(%arg0: i32, %arg1: i32) -> (i32, i32) {
    %c0_i32 = arith.constant 0 : i32
    %c0_i32_0 = arith.constant 0 : i32
    return %arg0, %c0_i32 : i32, i32
  }
  func.func @transform_1(%arg0: i32, %arg1: i32) -> (i32, i32) {
    %c0_i32 = arith.constant 0 : i32
    %c0_i32_0 = arith.constant 0 : i32
    %c0_i32_1 = arith.constant 0 : i32
    return %c0_i32, %c0_i32_0 : i32, i32
  }
  func.func @transform_2(%arg0: i32, %arg1: i32) -> (i32, i32) {
    %c0_i32 = arith.constant 0 : i32
    %c0_i32_0 = arith.constant 0 : i32
    return %c0_i32, %arg1 : i32, i32
  }
  func.func @transform_3(%arg0: i32, %arg1: i32) -> (i32, i32) {
    %c0_i32 = arith.constant 0 : i32
    %c0_i32_0 = arith.constant 0 : i32
    return %c0_i32, %arg1 : i32, i32
  }
  func.func @transform_4(%arg0: i32, %arg1: i32) -> (i32, i32) {
    %c0_i32 = arith.constant 0 : i32
    return %arg0, %arg1 : i32, i32
  }
}

module attributes {stable_mosaic.version = 11 : i64} {
  func.func @_rms_matmul_kernel(%arg0: i32, %arg1: i32, %arg2: memref<16x256xbf16, #tpu.memory_space<vmem>>, %arg3: memref<1x256xf32, #tpu.memory_space<vmem>>, %arg4: memref<256x512xbf16, #tpu.memory_space<vmem>>, %arg5: memref<16x512xbf16, #tpu.memory_space<vmem>>, %arg6: memref<16x256xbf16, #tpu.memory_space<vmem>>) attributes {dimension_semantics = [#tpu.dimension_semantics<parallel>, #tpu.dimension_semantics<arbitrary>], iteration_bounds = array<i64: 1, 2>, scalar_prefetch = 0 : i64, scratch_operands = 1 : i64, tpu.core_type = #tpu.core_type<tc>, window_params = [{transform_indices = @transform_0, window_bounds = array<i64: 16, 256>}, {pipeline_mode = #tpu.pipeline_mode<synchronous>, transform_indices = @transform_1, window_bounds = array<i64: 1, 256>}, {transform_indices = @transform_2, window_bounds = array<i64: 256, 512>}, {transform_indices = @transform_3, window_bounds = array<i64: 16, 512>}]} {
    %c0_i32 = arith.constant 0 : i32
    %0 = arith.cmpi eq, %arg1, %c0_i32 : i32
    %1 = arith.extui %0 : i1 to i32
    %c0_i32_0 = arith.constant 0 : i32
    %2 = arith.cmpi ne, %1, %c0_i32_0 : i32
    scf.if %2 {
      %c0_6 = arith.constant 0 : index
      %c0_7 = arith.constant 0 : index
      %8 = vector.load %arg2[%c0_6, %c0_7] : memref<16x256xbf16, #tpu.memory_space<vmem>>, vector<16x256xbf16>
      %9 = arith.extf %8 : vector<16x256xbf16> to vector<16x256xf32>
      %10 = arith.mulf %9, %9 : vector<16x256xf32>
      %cst_8 = arith.constant dense<0.000000e+00> : vector<16xf32>
      %11 = vector.multi_reduction <add>, %10, %cst_8 [1] : vector<16x256xf32> to vector<16xf32>
      %12 = vector.shape_cast %11 : vector<16xf32> to vector<16x1xf32>
      %cst_9 = arith.constant 3.906250e-03 : f32
      %13 = vector.broadcast %cst_9 : f32 to vector<16x1xf32>
      %14 = arith.mulf %12, %13 : vector<16x1xf32>
      %cst_10 = arith.constant 9.99999997E-7 : f32
      %15 = vector.broadcast %cst_10 : f32 to vector<16x1xf32>
      %16 = arith.addf %14, %15 : vector<16x1xf32>
      %17 = math.rsqrt %16 : vector<16x1xf32>
      %18 = vector.broadcast %17 : vector<16x1xf32> to vector<16x256xf32>
      %19 = arith.mulf %9, %18 : vector<16x256xf32>
      %c0_11 = arith.constant 0 : index
      %c0_12 = arith.constant 0 : index
      %20 = vector.load %arg3[%c0_11, %c0_12] : memref<1x256xf32, #tpu.memory_space<vmem>>, vector<1x256xf32>
      %21 = vector.broadcast %20 : vector<1x256xf32> to vector<16x256xf32>
      %22 = arith.mulf %19, %21 : vector<16x256xf32>
      %23 = arith.truncf %22 : vector<16x256xf32> to vector<16x256xbf16>
      %c0_13 = arith.constant 0 : index
      %c0_14 = arith.constant 0 : index
      %24 = vector.load %arg6[%c0_13, %c0_14] : memref<16x256xbf16, #tpu.memory_space<vmem>>, vector<16x256xbf16>
      tpu.vector_store %arg6[%c0_13, %c0_14], %23 {strides = array<i32>} : memref<16x256xbf16, #tpu.memory_space<vmem>>, vector<16x256xbf16>,
    } else {
    }
    %c0 = arith.constant 0 : index
    %c0_1 = arith.constant 0 : index
    %3 = vector.load %arg6[%c0, %c0_1] : memref<16x256xbf16, #tpu.memory_space<vmem>>, vector<16x256xbf16>
    %c0_2 = arith.constant 0 : index
    %c0_3 = arith.constant 0 : index
    %4 = vector.load %arg4[%c0_2, %c0_3] : memref<256x512xbf16, #tpu.memory_space<vmem>>, vector<256x512xbf16>
    %cst = arith.constant dense<0.000000e+00> : vector<16x512xf32>
    %5 = tpu.matmul %3, %4, %cst {dimension_numbers = #tpu.dot_dimension_numbers<[1], [0], [0], [1], [0, 0, 1, 1], [], []>} : vector<16x256xbf16>, vector<256x512xbf16>, vector<16x512xf32> -> vector<16x512xf32>
    %6 = arith.truncf %5 : vector<16x512xf32> to vector<16x512xbf16>
    %c0_4 = arith.constant 0 : index
    %c0_5 = arith.constant 0 : index
    %7 = vector.load %arg5[%c0_4, %c0_5] : memref<16x512xbf16, #tpu.memory_space<vmem>>, vector<16x512xbf16>
    tpu.vector_store %arg5[%c0_4, %c0_5], %6 {strides = array<i32>} : memref<16x512xbf16, #tpu.memory_space<vmem>>, vector<16x512xbf16>,
    return
  }
  func.func @transform_0(%arg0: i32, %arg1: i32) -> (i32, i32) {
    %c0_i32 = arith.constant 0 : i32
    %c0_i32_0 = arith.constant 0 : i32
    return %arg0, %c0_i32 : i32, i32
  }
  func.func @transform_1(%arg0: i32, %arg1: i32) -> (i32, i32) {
    %c0_i32 = arith.constant 0 : i32
    %c0_i32_0 = arith.constant 0 : i32
    %c0_i32_1 = arith.constant 0 : i32
    return %c0_i32, %c0_i32_0 : i32, i32
  }
  func.func @transform_2(%arg0: i32, %arg1: i32) -> (i32, i32) {
    %c0_i32 = arith.constant 0 : i32
    %c0_i32_0 = arith.constant 0 : i32
    return %c0_i32, %arg1 : i32, i32
  }
  func.func @transform_3(%arg0: i32, %arg1: i32) -> (i32, i32) {
    %c0_i32 = arith.constant 0 : i32
    return %arg0, %arg1 : i32, i32
  }
}

module attributes {stable_mosaic.version = 11 : i64} {
  func.func @_matmul_res_kernel(%arg0: i32, %arg1: i32, %arg2: i32, %arg3: memref<16x256xbf16, #tpu.memory_space<vmem>>, %arg4: memref<256x256xbf16, #tpu.memory_space<vmem>>, %arg5: memref<16x256xbf16, #tpu.memory_space<vmem>>, %arg6: memref<16x256xbf16, #tpu.memory_space<vmem>>, %arg7: memref<16x256xf32, #tpu.memory_space<vmem>>) attributes {dimension_semantics = [#tpu.dimension_semantics<parallel>, #tpu.dimension_semantics<parallel>, #tpu.dimension_semantics<arbitrary>], iteration_bounds = array<i64: 1, 1, 1>, scalar_prefetch = 0 : i64, scratch_operands = 1 : i64, tpu.core_type = #tpu.core_type<tc>, window_params = [{transform_indices = @transform_0, window_bounds = array<i64: 16, 256>}, {transform_indices = @transform_1, window_bounds = array<i64: 256, 256>}, {transform_indices = @transform_2, window_bounds = array<i64: 16, 256>}, {transform_indices = @transform_3, window_bounds = array<i64: 16, 256>}]} {
    %c0_i32 = arith.constant 0 : i32
    %0 = arith.cmpi eq, %arg2, %c0_i32 : i32
    %1 = arith.extui %0 : i1 to i32
    %c0_i32_0 = arith.constant 0 : i32
    %2 = arith.cmpi ne, %1, %c0_i32_0 : i32
    scf.if %2 {
      %cst_10 = arith.constant 0.000000e+00 : f32
      %12 = vector.broadcast %cst_10 : f32 to vector<16x256xf32>
      %c0_11 = arith.constant 0 : index
      %c0_12 = arith.constant 0 : index
      %13 = vector.load %arg7[%c0_11, %c0_12] : memref<16x256xf32, #tpu.memory_space<vmem>>, vector<16x256xf32>
      tpu.vector_store %arg7[%c0_11, %c0_12], %12 {strides = array<i32>} : memref<16x256xf32, #tpu.memory_space<vmem>>, vector<16x256xf32>,
    } else {
    }
    %c0 = arith.constant 0 : index
    %c0_1 = arith.constant 0 : index
    %3 = vector.load %arg7[%c0, %c0_1] : memref<16x256xf32, #tpu.memory_space<vmem>>, vector<16x256xf32>
    %c0_2 = arith.constant 0 : index
    %c0_3 = arith.constant 0 : index
    %4 = vector.load %arg3[%c0_2, %c0_3] : memref<16x256xbf16, #tpu.memory_space<vmem>>, vector<16x256xbf16>
    %c0_4 = arith.constant 0 : index
    %c0_5 = arith.constant 0 : index
    %5 = vector.load %arg4[%c0_4, %c0_5] : memref<256x256xbf16, #tpu.memory_space<vmem>>, vector<256x256xbf16>
    %cst = arith.constant dense<0.000000e+00> : vector<16x256xf32>
    %6 = tpu.matmul %4, %5, %cst {dimension_numbers = #tpu.dot_dimension_numbers<[1], [0], [0], [1], [0, 0, 1, 1], [], []>} : vector<16x256xbf16>, vector<256x256xbf16>, vector<16x256xf32> -> vector<16x256xf32>
    %7 = arith.addf %3, %6 : vector<16x256xf32>
    %c0_6 = arith.constant 0 : index
    %c0_7 = arith.constant 0 : index
    %8 = vector.load %arg7[%c0_6, %c0_7] : memref<16x256xf32, #tpu.memory_space<vmem>>, vector<16x256xf32>
    tpu.vector_store %arg7[%c0_6, %c0_7], %7 {strides = array<i32>} : memref<16x256xf32, #tpu.memory_space<vmem>>, vector<16x256xf32>,
    %c0_i32_8 = arith.constant 0 : i32
    %9 = arith.cmpi eq, %arg2, %c0_i32_8 : i32
    %10 = arith.extui %9 : i1 to i32
    %c0_i32_9 = arith.constant 0 : i32
    %11 = arith.cmpi ne, %10, %c0_i32_9 : i32
    scf.if %11 {
      %c0_10 = arith.constant 0 : index
      %c0_11 = arith.constant 0 : index
      %12 = vector.load %arg7[%c0_10, %c0_11] : memref<16x256xf32, #tpu.memory_space<vmem>>, vector<16x256xf32>
      %c0_12 = arith.constant 0 : index
      %c0_13 = arith.constant 0 : index
      %13 = vector.load %arg5[%c0_12, %c0_13] : memref<16x256xbf16, #tpu.memory_space<vmem>>, vector<16x256xbf16>
      %14 = arith.extf %13 : vector<16x256xbf16> to vector<16x256xf32>
      %15 = arith.addf %12, %14 : vector<16x256xf32>
      %16 = arith.truncf %15 : vector<16x256xf32> to vector<16x256xbf16>
      %c0_14 = arith.constant 0 : index
      %c0_15 = arith.constant 0 : index
      %17 = vector.load %arg6[%c0_14, %c0_15] : memref<16x256xbf16, #tpu.memory_space<vmem>>, vector<16x256xbf16>
      tpu.vector_store %arg6[%c0_14, %c0_15], %16 {strides = array<i32>} : memref<16x256xbf16, #tpu.memory_space<vmem>>, vector<16x256xbf16>,
    } else {
    }
    return
  }
  func.func @transform_0(%arg0: i32, %arg1: i32, %arg2: i32) -> (i32, i32) {
    %c0_i32 = arith.constant 0 : i32
    return %arg0, %arg2 : i32, i32
  }
  func.func @transform_1(%arg0: i32, %arg1: i32, %arg2: i32) -> (i32, i32) {
    %c0_i32 = arith.constant 0 : i32
    return %arg2, %arg1 : i32, i32
  }
  func.func @transform_2(%arg0: i32, %arg1: i32, %arg2: i32) -> (i32, i32) {
    %c0_i32 = arith.constant 0 : i32
    return %arg0, %arg1 : i32, i32
  }
  func.func @transform_3(%arg0: i32, %arg1: i32, %arg2: i32) -> (i32, i32) {
    %c0_i32 = arith.constant 0 : i32
    return %arg0, %arg1 : i32, i32
  }
}

module attributes {stable_mosaic.version = 11 : i64} {
  func.func @_flash_kernel(%arg0: i32, %arg1: i32, %arg2: i32, %arg3: memref<1x8x128xbf16, #tpu.memory_space<vmem>>, %arg4: memref<1x8x128xbf16, #tpu.memory_space<vmem>>, %arg5: memref<1x8x128xbf16, #tpu.memory_space<vmem>>, %arg6: memref<8x128xf32, #tpu.memory_space<vmem>>, %arg7: memref<8x128xf32, #tpu.memory_space<vmem>>, %arg8: memref<8x128xf32, #tpu.memory_space<vmem>>, %arg9: memref<8x128xf32, #tpu.memory_space<vmem>>, %arg10: memref<1x8x128xbf16, #tpu.memory_space<vmem>>, %arg11: memref<8x128xbf16, #tpu.memory_space<vmem>>, %arg12: memref<8x1xf32, #tpu.memory_space<vmem>>, %arg13: memref<8x1xf32, #tpu.memory_space<vmem>>, %arg14: memref<8x128xf32, #tpu.memory_space<vmem>>) attributes {dimension_semantics = [#tpu.dimension_semantics<parallel>, #tpu.dimension_semantics<parallel>, #tpu.dimension_semantics<arbitrary>], iteration_bounds = array<i64: 4, 1, 1>, scalar_prefetch = 0 : i64, scratch_operands = 4 : i64, tpu.core_type = #tpu.core_type<tc>, window_params = [{transform_indices = @transform_0, window_bounds = array<i64: 1, 8, 128>}, {transform_indices = @transform_1, window_bounds = array<i64: 1, 8, 128>}, {transform_indices = @transform_2, window_bounds = array<i64: 1, 8, 128>}, {transform_indices = @transform_3, window_bounds = array<i64: 8, 128>}, {transform_indices = @transform_4, window_bounds = array<i64: 8, 128>}, {transform_indices = @transform_5, window_bounds = array<i64: 8, 128>}, {transform_indices = @transform_6, window_bounds = array<i64: 8, 128>}, {transform_indices = @transform_7, window_bounds = array<i64: 1, 8, 128>}]} {
    %c0_i32 = arith.constant 0 : i32
    %0 = arith.cmpi eq, %arg2, %c0_i32 : i32
    %1 = arith.extui %0 : i1 to i32
    %c0_i32_0 = arith.constant 0 : i32
    %2 = arith.cmpi ne, %1, %c0_i32_0 : i32
    scf.if %2 {
      %cst = arith.constant -1.000000e+30 : f32
      %12 = vector.broadcast %cst : f32 to vector<8x1xf32>
      %c0 = arith.constant 0 : index
      %c0_5 = arith.constant 0 : index
      %13 = vector.load %arg12[%c0, %c0_5] : memref<8x1xf32, #tpu.memory_space<vmem>>, vector<8x1xf32>
      tpu.vector_store %arg12[%c0, %c0_5], %12 {strides = array<i32>} : memref<8x1xf32, #tpu.memory_space<vmem>>, vector<8x1xf32>,
      %cst_6 = arith.constant 0.000000e+00 : f32
      %14 = vector.broadcast %cst_6 : f32 to vector<8x1xf32>
      %c0_7 = arith.constant 0 : index
      %c0_8 = arith.constant 0 : index
      %15 = vector.load %arg13[%c0_7, %c0_8] : memref<8x1xf32, #tpu.memory_space<vmem>>, vector<8x1xf32>
      tpu.vector_store %arg13[%c0_7, %c0_8], %14 {strides = array<i32>} : memref<8x1xf32, #tpu.memory_space<vmem>>, vector<8x1xf32>,
      %cst_9 = arith.constant 0.000000e+00 : f32
      %16 = vector.broadcast %cst_9 : f32 to vector<8x128xf32>
      %c0_10 = arith.constant 0 : index
      %c0_11 = arith.constant 0 : index
      %17 = vector.load %arg14[%c0_10, %c0_11] : memref<8x128xf32, #tpu.memory_space<vmem>>, vector<8x128xf32>
      tpu.vector_store %arg14[%c0_10, %c0_11], %16 {strides = array<i32>} : memref<8x128xf32, #tpu.memory_space<vmem>>, vector<8x128xf32>,
      %c0_12 = arith.constant 0 : index
      %c0_13 = arith.constant 0 : index
      %c0_14 = arith.constant 0 : index
      %18 = vector.load %arg3[%c0_12, %c0_13, %c0_14] : memref<1x8x128xbf16, #tpu.memory_space<vmem>>, vector<1x8x128xbf16>
      %19 = vector.shape_cast %18 : vector<1x8x128xbf16> to vector<8x128xbf16>
      %20 = arith.extf %19 : vector<8x128xbf16> to vector<8x128xf32>
      %c0_15 = arith.constant 0 : index
      %c0_16 = arith.constant 0 : index
      %21 = vector.load %arg6[%c0_15, %c0_16] : memref<8x128xf32, #tpu.memory_space<vmem>>, vector<8x128xf32>
      %22 = arith.mulf %20, %21 : vector<8x128xf32>
      %c64_i32 = arith.constant 64 : i32
      %23 = tpu.dynamic_rotate %20 by %c64_i32 dim 1 : vector<8x128xf32>, i32 -> vector<8x128xf32>
      %c0_17 = arith.constant 0 : index
      %c0_18 = arith.constant 0 : index
      %24 = vector.load %arg7[%c0_17, %c0_18] : memref<8x128xf32, #tpu.memory_space<vmem>>, vector<8x128xf32>
      %25 = arith.mulf %23, %24 : vector<8x128xf32>
      %26 = arith.addf %22, %25 : vector<8x128xf32>
      %cst_19 = arith.constant 0.0883883461 : f32
      %27 = vector.broadcast %cst_19 : f32 to vector<8x128xf32>
      %28 = arith.mulf %26, %27 : vector<8x128xf32>
      %29 = arith.truncf %28 : vector<8x128xf32> to vector<8x128xbf16>
      %c0_20 = arith.constant 0 : index
      %c0_21 = arith.constant 0 : index
      %30 = vector.load %arg11[%c0_20, %c0_21] : memref<8x128xbf16, #tpu.memory_space<vmem>>, vector<8x128xbf16>
      tpu.vector_store %arg11[%c0_20, %c0_21], %29 {strides = array<i32>} : memref<8x128xbf16, #tpu.memory_space<vmem>>, vector<8x128xbf16>,
    } else {
    }
    %3 = arith.cmpi slt, %arg2, %arg1 : i32
    %4 = arith.extui %3 : i1 to i32
    %c0_i32_1 = arith.constant 0 : i32
    %5 = arith.cmpi ne, %4, %c0_i32_1 : i32
    scf.if %5 {
      %c0 = arith.constant 0 : index
      %c0_5 = arith.constant 0 : index
      %c0_6 = arith.constant 0 : index
      %12 = vector.load %arg4[%c0, %c0_5, %c0_6] : memref<1x8x128xbf16, #tpu.memory_space<vmem>>, vector<1x8x128xbf16>
      %13 = vector.shape_cast %12 : vector<1x8x128xbf16> to vector<8x128xbf16>
      %14 = arith.extf %13 : vector<8x128xbf16> to vector<8x128xf32>
      %c0_7 = arith.constant 0 : index
      %c0_8 = arith.constant 0 : index
      %15 = vector.load %arg8[%c0_7, %c0_8] : memref<8x128xf32, #tpu.memory_space<vmem>>, vector<8x128xf32>
      %16 = arith.mulf %14, %15 : vector<8x128xf32>
      %c64_i32 = arith.constant 64 : i32
      %17 = tpu.dynamic_rotate %14 by %c64_i32 dim 1 : vector<8x128xf32>, i32 -> vector<8x128xf32>
      %c0_9 = arith.constant 0 : index
      %c0_10 = arith.constant 0 : index
      %18 = vector.load %arg9[%c0_9, %c0_10] : memref<8x128xf32, #tpu.memory_space<vmem>>, vector<8x128xf32>
      %19 = arith.mulf %17, %18 : vector<8x128xf32>
      %20 = arith.addf %16, %19 : vector<8x128xf32>
      %21 = arith.truncf %20 : vector<8x128xf32> to vector<8x128xbf16>
      %c0_11 = arith.constant 0 : index
      %c0_12 = arith.constant 0 : index
      %22 = vector.load %arg11[%c0_11, %c0_12] : memref<8x128xbf16, #tpu.memory_space<vmem>>, vector<8x128xbf16>
      %cst = arith.constant dense<0.000000e+00> : vector<8x8xf32>
      %23 = tpu.matmul %22, %21, %cst {dimension_numbers = #tpu.dot_dimension_numbers<[1], [1], [0], [0], [0, 0, 1, 0], [], []>} : vector<8x128xbf16>, vector<8x128xbf16>, vector<8x8xf32> -> vector<8x8xf32>
      %c0_13 = arith.constant 0 : index
      %c0_14 = arith.constant 0 : index
      %24 = vector.load %arg12[%c0_13, %c0_14] : memref<8x1xf32, #tpu.memory_space<vmem>>, vector<8x1xf32>
      %cst_15 = arith.constant dense<0xFF800000> : vector<8xf32>
      %25 = vector.multi_reduction <maximumf>, %23, %cst_15 [1] : vector<8x8xf32> to vector<8xf32>
      %26 = vector.shape_cast %25 : vector<8xf32> to vector<8x1xf32>
      %27 = arith.maximumf %24, %26 : vector<8x1xf32>
      %28 = arith.subf %24, %27 : vector<8x1xf32>
      %29 = math.exp %28 : vector<8x1xf32>
      %30 = vector.broadcast %27 : vector<8x1xf32> to vector<8x8xf32>
      %31 = arith.subf %23, %30 : vector<8x8xf32>
      %32 = math.exp %31 : vector<8x8xf32>
      %c0_16 = arith.constant 0 : index
      %c0_17 = arith.constant 0 : index
      %33 = vector.load %arg13[%c0_16, %c0_17] : memref<8x1xf32, #tpu.memory_space<vmem>>, vector<8x1xf32>
      %34 = arith.mulf %29, %33 : vector<8x1xf32>
      %cst_18 = arith.constant dense<0.000000e+00> : vector<8xf32>
      %35 = vector.multi_reduction <add>, %32, %cst_18 [1] : vector<8x8xf32> to vector<8xf32>
      %36 = vector.shape_cast %35 : vector<8xf32> to vector<8x1xf32>
      %37 = arith.addf %34, %36 : vector<8x1xf32>
      %c0_19 = arith.constant 0 : index
      %c0_20 = arith.constant 0 : index
      %38 = vector.load %arg13[%c0_19, %c0_20] : memref<8x1xf32, #tpu.memory_space<vmem>>, vector<8x1xf32>
      tpu.vector_store %arg13[%c0_19, %c0_20], %37 {strides = array<i32>} : memref<8x1xf32, #tpu.memory_space<vmem>>, vector<8x1xf32>,
      %c0_21 = arith.constant 0 : index
      %c0_22 = arith.constant 0 : index
      %39 = vector.load %arg14[%c0_21, %c0_22] : memref<8x128xf32, #tpu.memory_space<vmem>>, vector<8x128xf32>
      %40 = vector.broadcast %29 : vector<8x1xf32> to vector<8x128xf32>
      %41 = arith.mulf %40, %39 : vector<8x128xf32>
      %42 = arith.truncf %32 : vector<8x8xf32> to vector<8x8xbf16>
      %c0_23 = arith.constant 0 : index
      %c0_24 = arith.constant 0 : index
      %c0_25 = arith.constant 0 : index
      %43 = vector.load %arg5[%c0_23, %c0_24, %c0_25] : memref<1x8x128xbf16, #tpu.memory_space<vmem>>, vector<1x8x128xbf16>
      %44 = vector.shape_cast %43 : vector<1x8x128xbf16> to vector<8x128xbf16>
      %cst_26 = arith.constant dense<0.000000e+00> : vector<8x128xf32>
      %45 = tpu.matmul %42, %44, %cst_26 {dimension_numbers = #tpu.dot_dimension_numbers<[1], [0], [0], [1], [0, 0, 1, 1], [], []>} : vector<8x8xbf16>, vector<8x128xbf16>, vector<8x128xf32> -> vector<8x128xf32>
      %46 = arith.addf %41, %45 : vector<8x128xf32>
      %c0_27 = arith.constant 0 : index
      %c0_28 = arith.constant 0 : index
      %47 = vector.load %arg14[%c0_27, %c0_28] : memref<8x128xf32, #tpu.memory_space<vmem>>, vector<8x128xf32>
      tpu.vector_store %arg14[%c0_27, %c0_28], %46 {strides = array<i32>} : memref<8x128xf32, #tpu.memory_space<vmem>>, vector<8x128xf32>,
      %c0_29 = arith.constant 0 : index
      %c0_30 = arith.constant 0 : index
      %48 = vector.load %arg12[%c0_29, %c0_30] : memref<8x1xf32, #tpu.memory_space<vmem>>, vector<8x1xf32>
      tpu.vector_store %arg12[%c0_29, %c0_30], %27 {strides = array<i32>} : memref<8x1xf32, #tpu.memory_space<vmem>>, vector<8x1xf32>,
    } else {
    }
    %6 = arith.cmpi eq, %arg2, %arg1 : i32
    %7 = arith.extui %6 : i1 to i32
    %c0_i32_2 = arith.constant 0 : i32
    %8 = arith.cmpi ne, %7, %c0_i32_2 : i32
    scf.if %8 {
      %c0 = arith.constant 0 : index
      %c0_5 = arith.constant 0 : index
      %c0_6 = arith.constant 0 : index
      %12 = vector.load %arg4[%c0, %c0_5, %c0_6] : memref<1x8x128xbf16, #tpu.memory_space<vmem>>, vector<1x8x128xbf16>
      %13 = vector.shape_cast %12 : vector<1x8x128xbf16> to vector<8x128xbf16>
      %14 = arith.extf %13 : vector<8x128xbf16> to vector<8x128xf32>
      %c0_7 = arith.constant 0 : index
      %c0_8 = arith.constant 0 : index
      %15 = vector.load %arg8[%c0_7, %c0_8] : memref<8x128xf32, #tpu.memory_space<vmem>>, vector<8x128xf32>
      %16 = arith.mulf %14, %15 : vector<8x128xf32>
      %c64_i32 = arith.constant 64 : i32
      %17 = tpu.dynamic_rotate %14 by %c64_i32 dim 1 : vector<8x128xf32>, i32 -> vector<8x128xf32>
      %c0_9 = arith.constant 0 : index
      %c0_10 = arith.constant 0 : index
      %18 = vector.load %arg9[%c0_9, %c0_10] : memref<8x128xf32, #tpu.memory_space<vmem>>, vector<8x128xf32>
      %19 = arith.mulf %17, %18 : vector<8x128xf32>
      %20 = arith.addf %16, %19 : vector<8x128xf32>
      %21 = arith.truncf %20 : vector<8x128xf32> to vector<8x128xbf16>
      %c0_11 = arith.constant 0 : index
      %c0_12 = arith.constant 0 : index
      %22 = vector.load %arg11[%c0_11, %c0_12] : memref<8x128xbf16, #tpu.memory_space<vmem>>, vector<8x128xbf16>
      %cst = arith.constant dense<0.000000e+00> : vector<8x8xf32>
      %23 = tpu.matmul %22, %21, %cst {dimension_numbers = #tpu.dot_dimension_numbers<[1], [1], [0], [0], [0, 0, 1, 0], [], []>} : vector<8x128xbf16>, vector<8x128xbf16>, vector<8x8xf32> -> vector<8x8xf32>
      %c8_i32 = arith.constant 8 : i32
      %24 = arith.muli %arg1, %c8_i32 : i32
      %25 = tpu.iota {dimensions = array<i32: 0>} : vector<8x8xi32>
      %26 = vector.broadcast %24 : i32 to vector<8x8xi32>
      %27 = arith.addi %26, %25 : vector<8x8xi32>
      %c8_i32_13 = arith.constant 8 : i32
      %28 = arith.muli %arg2, %c8_i32_13 : i32
      %29 = tpu.iota {dimensions = array<i32: 1>} : vector<8x8xi32>
      %30 = vector.broadcast %28 : i32 to vector<8x8xi32>
      %31 = arith.addi %30, %29 : vector<8x8xi32>
      %32 = arith.cmpi sle, %31, %27 : vector<8x8xi32>
      %cst_14 = arith.constant -1.000000e+30 : f32
      %33 = vector.broadcast %cst_14 : f32 to vector<8x8xf32>
      %34 = arith.select %32, %23, %33 : vector<8x8xi1>, vector<8x8xf32>
      %c0_15 = arith.constant 0 : index
      %c0_16 = arith.constant 0 : index
      %35 = vector.load %arg12[%c0_15, %c0_16] : memref<8x1xf32, #tpu.memory_space<vmem>>, vector<8x1xf32>
      %cst_17 = arith.constant dense<0xFF800000> : vector<8xf32>
      %36 = vector.multi_reduction <maximumf>, %34, %cst_17 [1] : vector<8x8xf32> to vector<8xf32>
      %37 = vector.shape_cast %36 : vector<8xf32> to vector<8x1xf32>
      %38 = arith.maximumf %35, %37 : vector<8x1xf32>
      %39 = arith.subf %35, %38 : vector<8x1xf32>
      %40 = math.exp %39 : vector<8x1xf32>
      %41 = vector.broadcast %38 : vector<8x1xf32> to vector<8x8xf32>
      %42 = arith.subf %34, %41 : vector<8x8xf32>
      %43 = math.exp %42 : vector<8x8xf32>
      %c0_18 = arith.constant 0 : index
      %c0_19 = arith.constant 0 : index
      %44 = vector.load %arg13[%c0_18, %c0_19] : memref<8x1xf32, #tpu.memory_space<vmem>>, vector<8x1xf32>
      %45 = arith.mulf %40, %44 : vector<8x1xf32>
      %cst_20 = arith.constant dense<0.000000e+00> : vector<8xf32>
      %46 = vector.multi_reduction <add>, %43, %cst_20 [1] : vector<8x8xf32> to vector<8xf32>
      %47 = vector.shape_cast %46 : vector<8xf32> to vector<8x1xf32>
      %48 = arith.addf %45, %47 : vector<8x1xf32>
      %c0_21 = arith.constant 0 : index
      %c0_22 = arith.constant 0 : index
      %49 = vector.load %arg13[%c0_21, %c0_22] : memref<8x1xf32, #tpu.memory_space<vmem>>, vector<8x1xf32>
      tpu.vector_store %arg13[%c0_21, %c0_22], %48 {strides = array<i32>} : memref<8x1xf32, #tpu.memory_space<vmem>>, vector<8x1xf32>,
      %c0_23 = arith.constant 0 : index
      %c0_24 = arith.constant 0 : index
      %50 = vector.load %arg14[%c0_23, %c0_24] : memref<8x128xf32, #tpu.memory_space<vmem>>, vector<8x128xf32>
      %51 = vector.broadcast %40 : vector<8x1xf32> to vector<8x128xf32>
      %52 = arith.mulf %51, %50 : vector<8x128xf32>
      %53 = arith.truncf %43 : vector<8x8xf32> to vector<8x8xbf16>
      %c0_25 = arith.constant 0 : index
      %c0_26 = arith.constant 0 : index
      %c0_27 = arith.constant 0 : index
      %54 = vector.load %arg5[%c0_25, %c0_26, %c0_27] : memref<1x8x128xbf16, #tpu.memory_space<vmem>>, vector<1x8x128xbf16>
      %55 = vector.shape_cast %54 : vector<1x8x128xbf16> to vector<8x128xbf16>
      %cst_28 = arith.constant dense<0.000000e+00> : vector<8x128xf32>
      %56 = tpu.matmul %53, %55, %cst_28 {dimension_numbers = #tpu.dot_dimension_numbers<[1], [0], [0], [1], [0, 0, 1, 1], [], []>} : vector<8x8xbf16>, vector<8x128xbf16>, vector<8x128xf32> -> vector<8x128xf32>
      %57 = arith.addf %52, %56 : vector<8x128xf32>
      %c0_29 = arith.constant 0 : index
      %c0_30 = arith.constant 0 : index
      %58 = vector.load %arg14[%c0_29, %c0_30] : memref<8x128xf32, #tpu.memory_space<vmem>>, vector<8x128xf32>
      tpu.vector_store %arg14[%c0_29, %c0_30], %57 {strides = array<i32>} : memref<8x128xf32, #tpu.memory_space<vmem>>, vector<8x128xf32>,
      %c0_31 = arith.constant 0 : index
      %c0_32 = arith.constant 0 : index
      %59 = vector.load %arg12[%c0_31, %c0_32] : memref<8x1xf32, #tpu.memory_space<vmem>>, vector<8x1xf32>
      tpu.vector_store %arg12[%c0_31, %c0_32], %38 {strides = array<i32>} : memref<8x1xf32, #tpu.memory_space<vmem>>, vector<8x1xf32>,
    } else {
    }
    %c0_i32_3 = arith.constant 0 : i32
    %9 = arith.cmpi eq, %arg2, %c0_i32_3 : i32
    %10 = arith.extui %9 : i1 to i32
    %c0_i32_4 = arith.constant 0 : i32
    %11 = arith.cmpi ne, %10, %c0_i32_4 : i32
    scf.if %11 {
      %c0 = arith.constant 0 : index
      %c0_5 = arith.constant 0 : index
      %12 = vector.load %arg13[%c0, %c0_5] : memref<8x1xf32, #tpu.memory_space<vmem>>, vector<8x1xf32>
      %13 = tpu.reciprocal %12 {approx = true} : vector<8x1xf32> -> vector<8x1xf32>
      %c0_6 = arith.constant 0 : index
      %c0_7 = arith.constant 0 : index
      %14 = vector.load %arg14[%c0_6, %c0_7] : memref<8x128xf32, #tpu.memory_space<vmem>>, vector<8x128xf32>
      %15 = vector.broadcast %13 : vector<8x1xf32> to vector<8x128xf32>
      %16 = arith.mulf %14, %15 : vector<8x128xf32>
      %17 = arith.truncf %16 : vector<8x128xf32> to vector<8x128xbf16>
      %c0_8 = arith.constant 0 : index
      %c0_9 = arith.constant 0 : index
      %c0_10 = arith.constant 0 : index
      %18 = vector.load %arg10[%c0_8, %c0_9, %c0_10] : memref<1x8x128xbf16, #tpu.memory_space<vmem>>, vector<1x8x128xbf16>
      %19 = vector.shape_cast %18 : vector<1x8x128xbf16> to vector<8x128xbf16>
      %20 = vector.shape_cast %17 : vector<8x128xbf16> to vector<1x8x128xbf16>
      tpu.vector_store %arg10[%c0_8, %c0_9, %c0_10], %20 {strides = array<i32>} : memref<1x8x128xbf16, #tpu.memory_space<vmem>>, vector<1x8x128xbf16>,
    } else {
    }
    return
  }
  func.func @transform_0(%arg0: i32, %arg1: i32, %arg2: i32) -> (i32, i32, i32) {
    %c0_i32 = arith.constant 0 : i32
    %c0_i32_0 = arith.constant 0 : i32
    return %arg0, %arg1, %c0_i32 : i32, i32, i32
  }
  func.func @transform_1(%arg0: i32, %arg1: i32, %arg2: i32) -> (i32, i32, i32) {
    %0 = arith.minsi %arg2, %arg1 : i32
    %c0_i32 = arith.constant 0 : i32
    %c0_i32_0 = arith.constant 0 : i32
    return %arg0, %0, %c0_i32 : i32, i32, i32
  }
  func.func @transform_2(%arg0: i32, %arg1: i32, %arg2: i32) -> (i32, i32, i32) {
    %0 = arith.minsi %arg2, %arg1 : i32
    %c0_i32 = arith.constant 0 : i32
    %c0_i32_0 = arith.constant 0 : i32
    return %arg0, %0, %c0_i32 : i32, i32, i32
  }
  func.func @transform_3(%arg0: i32, %arg1: i32, %arg2: i32) -> (i32, i32) {
    %c0_i32 = arith.constant 0 : i32
    %c0_i32_0 = arith.constant 0 : i32
    return %arg1, %c0_i32 : i32, i32
  }
  func.func @transform_4(%arg0: i32, %arg1: i32, %arg2: i32) -> (i32, i32) {
    %c0_i32 = arith.constant 0 : i32
    %c0_i32_0 = arith.constant 0 : i32
    return %arg1, %c0_i32 : i32, i32
  }
  func.func @transform_5(%arg0: i32, %arg1: i32, %arg2: i32) -> (i32, i32) {
    %0 = arith.minsi %arg2, %arg1 : i32
    %c0_i32 = arith.constant 0 : i32
    %c0_i32_0 = arith.constant 0 : i32
    return %0, %c0_i32 : i32, i32
  }
  func.func @transform_6(%arg0: i32, %arg1: i32, %arg2: i32) -> (i32, i32) {
    %0 = arith.minsi %arg2, %arg1 : i32
    %c0_i32 = arith.constant 0 : i32
    %c0_i32_0 = arith.constant 0 : i32
    return %0, %c0_i32 : i32, i32
  }
  func.func @transform_7(%arg0: i32, %arg1: i32, %arg2: i32) -> (i32, i32, i32) {
    %c0_i32 = arith.constant 0 : i32
    %c0_i32_0 = arith.constant 0 : i32
    return %arg0, %arg1, %c0_i32 : i32, i32, i32
  }
}

module attributes {stable_mosaic.version = 11 : i64} {
  func.func @_matmul_res_kernel(%arg0: i32, %arg1: i32, %arg2: i32, %arg3: memref<16x512xbf16, #tpu.memory_space<vmem>>, %arg4: memref<512x256xbf16, #tpu.memory_space<vmem>>, %arg5: memref<16x256xbf16, #tpu.memory_space<vmem>>, %arg6: memref<16x256xbf16, #tpu.memory_space<vmem>>, %arg7: memref<16x256xf32, #tpu.memory_space<vmem>>) attributes {dimension_semantics = [#tpu.dimension_semantics<parallel>, #tpu.dimension_semantics<parallel>, #tpu.dimension_semantics<arbitrary>], iteration_bounds = array<i64: 1, 1, 1>, scalar_prefetch = 0 : i64, scratch_operands = 1 : i64, tpu.core_type = #tpu.core_type<tc>, window_params = [{transform_indices = @transform_0, window_bounds = array<i64: 16, 512>}, {transform_indices = @transform_1, window_bounds = array<i64: 512, 256>}, {transform_indices = @transform_2, window_bounds = array<i64: 16, 256>}, {transform_indices = @transform_3, window_bounds = array<i64: 16, 256>}]} {
    %c0_i32 = arith.constant 0 : i32
    %0 = arith.cmpi eq, %arg2, %c0_i32 : i32
    %1 = arith.extui %0 : i1 to i32
    %c0_i32_0 = arith.constant 0 : i32
    %2 = arith.cmpi ne, %1, %c0_i32_0 : i32
    scf.if %2 {
      %cst_10 = arith.constant 0.000000e+00 : f32
      %12 = vector.broadcast %cst_10 : f32 to vector<16x256xf32>
      %c0_11 = arith.constant 0 : index
      %c0_12 = arith.constant 0 : index
      %13 = vector.load %arg7[%c0_11, %c0_12] : memref<16x256xf32, #tpu.memory_space<vmem>>, vector<16x256xf32>
      tpu.vector_store %arg7[%c0_11, %c0_12], %12 {strides = array<i32>} : memref<16x256xf32, #tpu.memory_space<vmem>>, vector<16x256xf32>,
    } else {
    }
    %c0 = arith.constant 0 : index
    %c0_1 = arith.constant 0 : index
    %3 = vector.load %arg7[%c0, %c0_1] : memref<16x256xf32, #tpu.memory_space<vmem>>, vector<16x256xf32>
    %c0_2 = arith.constant 0 : index
    %c0_3 = arith.constant 0 : index
    %4 = vector.load %arg3[%c0_2, %c0_3] : memref<16x512xbf16, #tpu.memory_space<vmem>>, vector<16x512xbf16>
    %c0_4 = arith.constant 0 : index
    %c0_5 = arith.constant 0 : index
    %5 = vector.load %arg4[%c0_4, %c0_5] : memref<512x256xbf16, #tpu.memory_space<vmem>>, vector<512x256xbf16>
    %cst = arith.constant dense<0.000000e+00> : vector<16x256xf32>
    %6 = tpu.matmul %4, %5, %cst {dimension_numbers = #tpu.dot_dimension_numbers<[1], [0], [0], [1], [0, 0, 1, 1], [], []>} : vector<16x512xbf16>, vector<512x256xbf16>, vector<16x256xf32> -> vector<16x256xf32>
    %7 = arith.addf %3, %6 : vector<16x256xf32>
    %c0_6 = arith.constant 0 : index
    %c0_7 = arith.constant 0 : index
    %8 = vector.load %arg7[%c0_6, %c0_7] : memref<16x256xf32, #tpu.memory_space<vmem>>, vector<16x256xf32>
    tpu.vector_store %arg7[%c0_6, %c0_7], %7 {strides = array<i32>} : memref<16x256xf32, #tpu.memory_space<vmem>>, vector<16x256xf32>,
    %c0_i32_8 = arith.constant 0 : i32
    %9 = arith.cmpi eq, %arg2, %c0_i32_8 : i32
    %10 = arith.extui %9 : i1 to i32
    %c0_i32_9 = arith.constant 0 : i32
    %11 = arith.cmpi ne, %10, %c0_i32_9 : i32
    scf.if %11 {
      %c0_10 = arith.constant 0 : index
      %c0_11 = arith.constant 0 : index
      %12 = vector.load %arg7[%c0_10, %c0_11] : memref<16x256xf32, #tpu.memory_space<vmem>>, vector<16x256xf32>
      %c0_12 = arith.constant 0 : index
      %c0_13 = arith.constant 0 : index
      %13 = vector.load %arg5[%c0_12, %c0_13] : memref<16x256xbf16, #tpu.memory_space<vmem>>, vector<16x256xbf16>
      %14 = arith.extf %13 : vector<16x256xbf16> to vector<16x256xf32>
      %15 = arith.addf %12, %14 : vector<16x256xf32>
      %16 = arith.truncf %15 : vector<16x256xf32> to vector<16x256xbf16>
      %c0_14 = arith.constant 0 : index
      %c0_15 = arith.constant 0 : index
      %17 = vector.load %arg6[%c0_14, %c0_15] : memref<16x256xbf16, #tpu.memory_space<vmem>>, vector<16x256xbf16>
      tpu.vector_store %arg6[%c0_14, %c0_15], %16 {strides = array<i32>} : memref<16x256xbf16, #tpu.memory_space<vmem>>, vector<16x256xbf16>,
    } else {
    }
    return
  }
  func.func @transform_0(%arg0: i32, %arg1: i32, %arg2: i32) -> (i32, i32) {
    %c0_i32 = arith.constant 0 : i32
    return %arg0, %arg2 : i32, i32
  }
  func.func @transform_1(%arg0: i32, %arg1: i32, %arg2: i32) -> (i32, i32) {
    %c0_i32 = arith.constant 0 : i32
    return %arg2, %arg1 : i32, i32
  }
  func.func @transform_2(%arg0: i32, %arg1: i32, %arg2: i32) -> (i32, i32) {
    %c0_i32 = arith.constant 0 : i32
    return %arg0, %arg1 : i32, i32
  }
  func.func @transform_3(%arg0: i32, %arg1: i32, %arg2: i32) -> (i32, i32) {
    %c0_i32 = arith.constant 0 : i32
    return %arg0, %arg1 : i32, i32
  }
}

module attributes {stable_mosaic.version = 11 : i64} {
  func.func @_matmul_res_kernel(%arg0: i32, %arg1: i32, %arg2: i32, %arg3: memref<16x512xbf16, #tpu.memory_space<vmem>>, %arg4: memref<512x256xbf16, #tpu.memory_space<vmem>>, %arg5: memref<16x256xbf16, #tpu.memory_space<vmem>>, %arg6: memref<16x256xbf16, #tpu.memory_space<vmem>>, %arg7: memref<16x256xf32, #tpu.memory_space<vmem>>) attributes {dimension_semantics = [#tpu.dimension_semantics<parallel>, #tpu.dimension_semantics<parallel>, #tpu.dimension_semantics<arbitrary>], iteration_bounds = array<i64: 1, 1, 1>, scalar_prefetch = 0 : i64, scratch_operands = 1 : i64, tpu.core_type = #tpu.core_type<tc>, window_params = [{transform_indices = @transform_0, window_bounds = array<i64: 16, 512>}, {transform_indices = @transform_1, window_bounds = array<i64: 512, 256>}, {transform_indices = @transform_2, window_bounds = array<i64: 16, 256>}, {transform_indices = @transform_3, window_bounds = array<i64: 16, 256>}]} {
    %c0_i32 = arith.constant 0 : i32
    %0 = arith.cmpi eq, %arg2, %c0_i32 : i32
    %1 = arith.extui %0 : i1 to i32
    %c0_i32_0 = arith.constant 0 : i32
    %2 = arith.cmpi ne, %1, %c0_i32_0 : i32
    scf.if %2 {
      %cst_10 = arith.constant 0.000000e+00 : f32
      %12 = vector.broadcast %cst_10 : f32 to vector<16x256xf32>
      %c0_11 = arith.constant 0 : index
      %c0_12 = arith.constant 0 : index
      %13 = vector.load %arg7[%c0_11, %c0_12] : memref<16x256xf32, #tpu.memory_space<vmem>>, vector<16x256xf32>
      tpu.vector_store %arg7[%c0_11, %c0_12], %12 {strides = array<i32>} : memref<16x256xf32, #tpu.memory_space<vmem>>, vector<16x256xf32>,
    } else {
    }
    %c0 = arith.constant 0 : index
    %c0_1 = arith.constant 0 : index
    %3 = vector.load %arg7[%c0, %c0_1] : memref<16x256xf32, #tpu.memory_space<vmem>>, vector<16x256xf32>
    %c0_2 = arith.constant 0 : index
    %c0_3 = arith.constant 0 : index
    %4 = vector.load %arg3[%c0_2, %c0_3] : memref<16x512xbf16, #tpu.memory_space<vmem>>, vector<16x512xbf16>
    %c0_4 = arith.constant 0 : index
    %c0_5 = arith.constant 0 : index
    %5 = vector.load %arg4[%c0_4, %c0_5] : memref<512x256xbf16, #tpu.memory_space<vmem>>, vector<512x256xbf16>
    %cst = arith.constant dense<0.000000e+00> : vector<16x256xf32>
    %6 = tpu.matmul %4, %5, %cst {dimension_numbers = #tpu.dot_dimension_numbers<[1], [0], [0], [1], [0, 0, 1, 1], [], []>} : vector<16x512xbf16>, vector<512x256xbf16>, vector<16x256xf32> -> vector<16x256xf32>
    %7 = arith.addf %3, %6 : vector<16x256xf32>
    %c0_6 = arith.constant 0 : index
    %c0_7 = arith.constant 0 : index
    %8 = vector.load %arg7[%c0_6, %c0_7] : memref<16x256xf32, #tpu.memory_space<vmem>>, vector<16x256xf32>
    tpu.vector_store %arg7[%c0_6, %c0_7], %7 {strides = array<i32>} : memref<16x256xf32, #tpu.memory_space<vmem>>, vector<16x256xf32>,
    %c0_i32_8 = arith.constant 0 : i32
    %9 = arith.cmpi eq, %arg2, %c0_i32_8 : i32
    %10 = arith.extui %9 : i1 to i32
    %c0_i32_9 = arith.constant 0 : i32
    %11 = arith.cmpi ne, %10, %c0_i32_9 : i32
    scf.if %11 {
      %c0_10 = arith.constant 0 : index
      %c0_11 = arith.constant 0 : index
      %12 = vector.load %arg7[%c0_10, %c0_11] : memref<16x256xf32, #tpu.memory_space<vmem>>, vector<16x256xf32>
      %c0_12 = arith.constant 0 : index
      %c0_13 = arith.constant 0 : index
      %13 = vector.load %arg5[%c0_12, %c0_13] : memref<16x256xbf16, #tpu.memory_space<vmem>>, vector<16x256xbf16>
      %14 = arith.extf %13 : vector<16x256xbf16> to vector<16x256xf32>
      %15 = arith.addf %12, %14 : vector<16x256xf32>
      %16 = arith.truncf %15 : vector<16x256xf32> to vector<16x256xbf16>
      %c0_14 = arith.constant 0 : index
      %c0_15 = arith.constant 0 : index
      %17 = vector.load %arg6[%c0_14, %c0_15] : memref<16x256xbf16, #tpu.memory_space<vmem>>, vector<16x256xbf16>
      tpu.vector_store %arg6[%c0_14, %c0_15], %16 {strides = array<i32>} : memref<16x256xbf16, #tpu.memory_space<vmem>>, vector<16x256xbf16>,
    } else {
    }
    return
  }
  func.func @transform_0(%arg0: i32, %arg1: i32, %arg2: i32) -> (i32, i32) {
    %c0_i32 = arith.constant 0 : i32
    return %arg0, %arg2 : i32, i32
  }
  func.func @transform_1(%arg0: i32, %arg1: i32, %arg2: i32) -> (i32, i32) {
    %c0_i32 = arith.constant 0 : i32
    return %arg2, %arg1 : i32, i32
  }
  func.func @transform_2(%arg0: i32, %arg1: i32, %arg2: i32) -> (i32, i32) {
    %c0_i32 = arith.constant 0 : i32
    return %arg0, %arg1 : i32, i32
  }
  func.func @transform_3(%arg0: i32, %arg1: i32, %arg2: i32) -> (i32, i32) {
    %c0_i32 = arith.constant 0 : i32
    return %arg0, %arg1 : i32, i32
  }
}

module attributes {stable_mosaic.version = 11 : i64} {
  func.func @_rms_matmul_kernel(%arg0: i32, %arg1: i32, %arg2: memref<16x256xbf16, #tpu.memory_space<vmem>>, %arg3: memref<1x256xf32, #tpu.memory_space<vmem>>, %arg4: memref<256x128xbf16, #tpu.memory_space<vmem>>, %arg5: memref<16x128xf32, #tpu.memory_space<vmem>>, %arg6: memref<16x256xbf16, #tpu.memory_space<vmem>>) attributes {dimension_semantics = [#tpu.dimension_semantics<parallel>, #tpu.dimension_semantics<arbitrary>], iteration_bounds = array<i64: 1, 1>, scalar_prefetch = 0 : i64, scratch_operands = 1 : i64, tpu.core_type = #tpu.core_type<tc>, window_params = [{transform_indices = @transform_0, window_bounds = array<i64: 16, 256>}, {pipeline_mode = #tpu.pipeline_mode<synchronous>, transform_indices = @transform_1, window_bounds = array<i64: 1, 256>}, {transform_indices = @transform_2, window_bounds = array<i64: 256, 128>}, {transform_indices = @transform_3, window_bounds = array<i64: 16, 128>}]} {
    %c0_i32 = arith.constant 0 : i32
    %0 = arith.cmpi eq, %arg1, %c0_i32 : i32
    %1 = arith.extui %0 : i1 to i32
    %c0_i32_0 = arith.constant 0 : i32
    %2 = arith.cmpi ne, %1, %c0_i32_0 : i32
    scf.if %2 {
      %c0_6 = arith.constant 0 : index
      %c0_7 = arith.constant 0 : index
      %7 = vector.load %arg2[%c0_6, %c0_7] : memref<16x256xbf16, #tpu.memory_space<vmem>>, vector<16x256xbf16>
      %8 = arith.extf %7 : vector<16x256xbf16> to vector<16x256xf32>
      %9 = arith.mulf %8, %8 : vector<16x256xf32>
      %cst_8 = arith.constant dense<0.000000e+00> : vector<16xf32>
      %10 = vector.multi_reduction <add>, %9, %cst_8 [1] : vector<16x256xf32> to vector<16xf32>
      %11 = vector.shape_cast %10 : vector<16xf32> to vector<16x1xf32>
      %cst_9 = arith.constant 3.906250e-03 : f32
      %12 = vector.broadcast %cst_9 : f32 to vector<16x1xf32>
      %13 = arith.mulf %11, %12 : vector<16x1xf32>
      %cst_10 = arith.constant 9.99999997E-7 : f32
      %14 = vector.broadcast %cst_10 : f32 to vector<16x1xf32>
      %15 = arith.addf %13, %14 : vector<16x1xf32>
      %16 = math.rsqrt %15 : vector<16x1xf32>
      %17 = vector.broadcast %16 : vector<16x1xf32> to vector<16x256xf32>
      %18 = arith.mulf %8, %17 : vector<16x256xf32>
      %c0_11 = arith.constant 0 : index
      %c0_12 = arith.constant 0 : index
      %19 = vector.load %arg3[%c0_11, %c0_12] : memref<1x256xf32, #tpu.memory_space<vmem>>, vector<1x256xf32>
      %20 = vector.broadcast %19 : vector<1x256xf32> to vector<16x256xf32>
      %21 = arith.mulf %18, %20 : vector<16x256xf32>
      %22 = arith.truncf %21 : vector<16x256xf32> to vector<16x256xbf16>
      %c0_13 = arith.constant 0 : index
      %c0_14 = arith.constant 0 : index
      %23 = vector.load %arg6[%c0_13, %c0_14] : memref<16x256xbf16, #tpu.memory_space<vmem>>, vector<16x256xbf16>
      tpu.vector_store %arg6[%c0_13, %c0_14], %22 {strides = array<i32>} : memref<16x256xbf16, #tpu.memory_space<vmem>>, vector<16x256xbf16>,
    } else {
    }
    %c0 = arith.constant 0 : index
    %c0_1 = arith.constant 0 : index
    %3 = vector.load %arg6[%c0, %c0_1] : memref<16x256xbf16, #tpu.memory_space<vmem>>, vector<16x256xbf16>
    %c0_2 = arith.constant 0 : index
    %c0_3 = arith.constant 0 : index
    %4 = vector.load %arg4[%c0_2, %c0_3] : memref<256x128xbf16, #tpu.memory_space<vmem>>, vector<256x128xbf16>
    %cst = arith.constant dense<0.000000e+00> : vector<16x128xf32>
    %5 = tpu.matmul %3, %4, %cst {dimension_numbers = #tpu.dot_dimension_numbers<[1], [0], [0], [1], [0, 0, 1, 1], [], []>} : vector<16x256xbf16>, vector<256x128xbf16>, vector<16x128xf32> -> vector<16x128xf32>
    %c0_4 = arith.constant 0 : index
    %c0_5 = arith.constant 0 : index
    %6 = vector.load %arg5[%c0_4, %c0_5] : memref<16x128xf32, #tpu.memory_space<vmem>>, vector<16x128xf32>
    tpu.vector_store %arg5[%c0_4, %c0_5], %5 {strides = array<i32>} : memref<16x128xf32, #tpu.memory_space<vmem>>, vector<16x128xf32>,
    return
  }
  func.func @transform_0(%arg0: i32, %arg1: i32) -> (i32, i32) {
    %c0_i32 = arith.constant 0 : i32
    %c0_i32_0 = arith.constant 0 : i32
    return %arg0, %c0_i32 : i32, i32
  }
  func.func @transform_1(%arg0: i32, %arg1: i32) -> (i32, i32) {
    %c0_i32 = arith.constant 0 : i32
    %c0_i32_0 = arith.constant 0 : i32
    %c0_i32_1 = arith.constant 0 : i32
    return %c0_i32, %c0_i32_0 : i32, i32
  }
  func.func @transform_2(%arg0: i32, %arg1: i32) -> (i32, i32) {
    %c0_i32 = arith.constant 0 : i32
    %c0_i32_0 = arith.constant 0 : i32
    return %c0_i32, %arg1 : i32, i32
  }
  func.func @transform_3(%arg0: i32, %arg1: i32) -> (i32, i32) {
    %c0_i32 = arith.constant 0 : i32
    return %arg0, %arg1 : i32, i32
  }
}

</mosaic_0001>

<llo_original>
// kernel: transformer_forward.13
$region0: #{transformer_forward.13}
  #allocation0 [shape = 'u32[]', space=smem, size = 0x4, offset = 0x4, fixed_abs, tag = 'smem constant byte address 0x4 - core index']
  #allocation1 [shape = 'u32[72,128]{1,0:T(1,128)}', space=vmem, size = 0x9000, scoped, tag = 'internal scratch']
  #allocation2 [shape = 'f32[16,256]{1,0:T(8,128)}', space=vmem, size = 0x4000, scoped, tag = 'scratch operand']
  %s0 = inlined_call_operand.vmem [shape: bf16[16,256], index: 0, kind: input, shape index: {}]
  %s1 = inlined_call_operand.vmem [shape: bf16[256,256], index: 1, kind: input, shape index: {}]
  %s2 = inlined_call_operand.vmem [shape: bf16[16,256], index: 2, kind: input, shape index: {}]
  %s3 = inlined_call_operand.vmem [shape: bf16[16,256], index: 3, kind: output, shape index: {}]
  %s4 = sld [smem:[#allocation0]]
  $region30: #{transformer_forward.13} parent=0
    _
  %s6 = ssub.s32 1, %s4
  %s7 = scalar_select 0, %s6, %s4
  // Predicated region
  $region2: #{transformer_forward.13} parent=0 // pred_check
    _
  $region3: #{transformer_forward.13} parent=0 // pred_check_branch
    %9 = sbr.rel (0) target = $region5
  $region4: #{transformer_forward.13} parent=0 // pred_region
    _
  $region5: #{transformer_forward.13} parent=0 // pred_fallthru
    _
  // Predicated region
  $region6: #{transformer_forward.13} parent=0 // pred_check
    _
  $region7: #{transformer_forward.13} parent=0 // pred_check_branch
    %11 = sbr.rel (0) target = $region9
  $region8: #{transformer_forward.13} parent=0 // pred_region
    _
  $region9: #{transformer_forward.13} parent=0 // pred_fallthru
    _
  // Predicated region
  $region10: #{transformer_forward.13} parent=0 // pred_check
    _
  $region11: #{transformer_forward.13} parent=0 // pred_check_branch
    %13 = sbr.rel (0) target = $region13
  $region12: #{transformer_forward.13} parent=0 // pred_region
    _
  $region13: #{transformer_forward.13} parent=0 // pred_fallthru
    _
  %p14 = scmp.eq.s32.totalorder 0, 0
  // Predicated region
  $region14: #{transformer_forward.13} parent=0 // pred_check
    %p15 = pneg %p14
  $region15: #{transformer_forward.13} parent=0 // pred_check_branch
    %17 = sbr.rel (%p15) target = $region17
  $region16: #{transformer_forward.13} parent=0 // pred_region
    %18 = vst [vmem:[#allocation2] sm:$0xff] 0.0
    %19 = vst [vmem:[#allocation2 + $0x8] sm:$0xff] 0.0
    %20 = vst [vmem:[#allocation2 + $0x10] sm:$0xff] 0.0
    %21 = vst [vmem:[#allocation2 + $0x18] sm:$0xff] 0.0
  $region17: #{transformer_forward.13} parent=0 // pred_fallthru
    _
  %v22 = vld [vmem:[#allocation2] sm:$0xff]
  %v23 = vld [vmem:[#allocation2 + $0x8] sm:$0xff]
  %v24 = vld [vmem:[#allocation2 + $0x10] sm:$0xff]
  %v25 = vld [vmem:[#allocation2 + $0x18] sm:$0xff]
  %v26 = vld [vmem:[%s0] sm:$0xff]
  %v27 = vld [vmem:[%s0 + $0x8] sm:$0xff]
  %v28 = vld [vmem:[%s1] sm:$0xff]
  %v29 = vld [vmem:[%s1 + $0x8] sm:$0xff]
  %v30 = vld [vmem:[%s1 + $0x10] sm:$0xff]
  %v31 = vld [vmem:[%s1 + $0x18] sm:$0xff]
  %v32 = vld [vmem:[%s1 + $0x20] sm:$0xff]
  %v33 = vld [vmem:[%s1 + $0x28] sm:$0xff]
  %v34 = vld [vmem:[%s1 + $0x30] sm:$0xff]
  %v35 = vld [vmem:[%s1 + $0x38] sm:$0xff]
  %v36 = vld [vmem:[%s1 + $0x40] sm:$0xff]
  %v37 = vld [vmem:[%s1 + $0x48] sm:$0xff]
  %v38 = vld [vmem:[%s1 + $0x50] sm:$0xff]
  %v39 = vld [vmem:[%s1 + $0x58] sm:$0xff]
  %v40 = vld [vmem:[%s1 + $0x60] sm:$0xff]
  %v41 = vld [vmem:[%s1 + $0x68] sm:$0xff]
  %v42 = vld [vmem:[%s1 + $0x70] sm:$0xff]
  %v43 = vld [vmem:[%s1 + $0x78] sm:$0xff]
  %v44 = vld [vmem:[%s1 + $0x80] sm:$0xff]
  %v45 = vld [vmem:[%s1 + $0x88] sm:$0xff]
  %v46 = vld [vmem:[%s1 + $0x90] sm:$0xff]
  %v47 = vld [vmem:[%s1 + $0x98] sm:$0xff]
  %v48 = vld [vmem:[%s1 + $0xa0] sm:$0xff]
  %v49 = vld [vmem:[%s1 + $0xa8] sm:$0xff]
  %v50 = vld [vmem:[%s1 + $0xb0] sm:$0xff]
  %v51 = vld [vmem:[%s1 + $0xb8] sm:$0xff]
  %v52 = vld [vmem:[%s1 + $0xc0] sm:$0xff]
  %v53 = vld [vmem:[%s1 + $0xc8] sm:$0xff]
  %v54 = vld [vmem:[%s1 + $0xd0] sm:$0xff]
  %v55 = vld [vmem:[%s1 + $0xd8] sm:$0xff]
  %v56 = vld [vmem:[%s1 + $0xe0] sm:$0xff]
  %v57 = vld [vmem:[%s1 + $0xe8] sm:$0xff]
  %v58 = vld [vmem:[%s1 + $0xf0] sm:$0xff]
  %v59 = vld [vmem:[%s1 + $0xf8] sm:$0xff]
  %v62 = vunpack.c.l.b16 %v26
  %v63 = vunpack.c.h.b16 %v26
  %v64 = vunpack.c.l.b16 %v27
  %v65 = vunpack.c.h.b16 %v27
  %v66 = vpack.c.b16 %v64, %v62
  %v67 = vpack.c.b16 %v65, %v63
  %v102 = vunpack.c.l.b16 %v28
  %v103 = vunpack.c.h.b16 %v28
  %v104 = vunpack.c.l.b16 %v29
  %v105 = vunpack.c.h.b16 %v29
  %v106 = vunpack.c.l.b16 %v30
  %v107 = vunpack.c.h.b16 %v30
  %v108 = vunpack.c.l.b16 %v31
  %v109 = vunpack.c.h.b16 %v31
  %v110 = vunpack.c.l.b16 %v32
  %v111 = vunpack.c.h.b16 %v32
  %v112 = vunpack.c.l.b16 %v33
  %v113 = vunpack.c.h.b16 %v33
  %v114 = vunpack.c.l.b16 %v34
  %v115 = vunpack.c.h.b16 %v34
  %v116 = vunpack.c.l.b16 %v35
  %v117 = vunpack.c.h.b16 %v35
  %v118 = vunpack.c.l.b16 %v36
  %v119 = vunpack.c.h.b16 %v36
  %v120 = vunpack.c.l.b16 %v37
  %v121 = vunpack.c.h.b16 %v37
  %v122 = vunpack.c.l.b16 %v38
  %v123 = vunpack.c.h.b16 %v38
  %v124 = vunpack.c.l.b16 %v39
  %v125 = vunpack.c.h.b16 %v39
  %v126 = vunpack.c.l.b16 %v40
  %v127 = vunpack.c.h.b16 %v40
  %v128 = vunpack.c.l.b16 %v41
  %v129 = vunpack.c.h.b16 %v41
  %v130 = vunpack.c.l.b16 %v42
  %v131 = vunpack.c.h.b16 %v42
  %v132 = vunpack.c.l.b16 %v43
  %v133 = vunpack.c.h.b16 %v43
  %v134 = vunpack.c.l.b16 %v44
  %v135 = vunpack.c.h.b16 %v44
  %v136 = vunpack.c.l.b16 %v45
  %v137 = vunpack.c.h.b16 %v45
  %v138 = vunpack.c.l.b16 %v46
  %v139 = vunpack.c.h.b16 %v46
  %v140 = vunpack.c.l.b16 %v47
  %v141 = vunpack.c.h.b16 %v47
  %v142 = vunpack.c.l.b16 %v48
  %v143 = vunpack.c.h.b16 %v48
  %v144 = vunpack.c.l.b16 %v49
  %v145 = vunpack.c.h.b16 %v49
  %v146 = vunpack.c.l.b16 %v50
  %v147 = vunpack.c.h.b16 %v50
  %v148 = vunpack.c.l.b16 %v51
  %v149 = vunpack.c.h.b16 %v51
  %v150 = vunpack.c.l.b16 %v52
  %v151 = vunpack.c.h.b16 %v52
  %v152 = vunpack.c.l.b16 %v53
  %v153 = vunpack.c.h.b16 %v53
  %v154 = vunpack.c.l.b16 %v54
  %v155 = vunpack.c.h.b16 %v54
  %v156 = vunpack.c.l.b16 %v55
  %v157 = vunpack.c.h.b16 %v55
  %v158 = vunpack.c.l.b16 %v56
  %v159 = vunpack.c.h.b16 %v56
  %v160 = vunpack.c.l.b16 %v57
  %v161 = vunpack.c.h.b16 %v57
  %v162 = vunpack.c.l.b16 %v58
  %v163 = vunpack.c.h.b16 %v58
  %v164 = vunpack.c.l.b16 %v59
  %v165 = vunpack.c.h.b16 %v59
  %v166 = vpack.c.b16 %v104, %v102
  %v167 = vpack.c.b16 %v105, %v103
  %v168 = vpack.c.b16 %v108, %v106
  %v169 = vpack.c.b16 %v109, %v107
  %v170 = vpack.c.b16 %v112, %v110
  %v171 = vpack.c.b16 %v113, %v111
  %v172 = vpack.c.b16 %v116, %v114
  %v173 = vpack.c.b16 %v117, %v115
  %v174 = vpack.c.b16 %v120, %v118
  %v175 = vpack.c.b16 %v121, %v119
  %v176 = vpack.c.b16 %v124, %v122
  %v177 = vpack.c.b16 %v125, %v123
  %v178 = vpack.c.b16 %v128, %v126
  %v179 = vpack.c.b16 %v129, %v127
  %v180 = vpack.c.b16 %v132, %v130
  %v181 = vpack.c.b16 %v133, %v131
  %v182 = vpack.c.b16 %v136, %v134
  %v183 = vpack.c.b16 %v137, %v135
  %v184 = vpack.c.b16 %v140, %v138
  %v185 = vpack.c.b16 %v141, %v139
  %v186 = vpack.c.b16 %v144, %v142
  %v187 = vpack.c.b16 %v145, %v143
  %v188 = vpack.c.b16 %v148, %v146
  %v189 = vpack.c.b16 %v149, %v147
  %v190 = vpack.c.b16 %v152, %v150
  %v191 = vpack.c.b16 %v153, %v151
  %v192 = vpack.c.b16 %v156, %v154
  %v193 = vpack.c.b16 %v157, %v155
  %v194 = vpack.c.b16 %v160, %v158
  %v195 = vpack.c.b16 %v161, %v159
  %v196 = vpack.c.b16 %v164, %v162
  %v197 = vpack.c.b16 %v165, %v163
  %230 = vmatpush.bf16.msra.mxu0 %v180
  %231 = vmatpush.bf16.msra.mxu0 %v178
  %232 = vmatpush.bf16.msra.mxu0 %v176
  %233 = vmatpush.bf16.msra.mxu0 %v174
  %234 = vmatpush.bf16.msra.mxu0 %v172
  %235 = vmatpush.bf16.msra.mxu0 %v170
  %236 = vmatpush.bf16.msra.mxu0 %v168
  %237 = vmatpush.bf16.msra.mxu0 %v166
  %238 = vmatmul.bf16.gmra.mxu0 %v66
  %v239 = vpop.f32.mrf.mxu0
  %v240 = vadd.f32 0.0, %v239
  %v241 = vpop.f32.mrf.mxu0
  %v242 = vadd.f32 0.0, %v241
  %243 = vdwg.mxu0
  %244 = vmatpush.bf16.msra.mxu0 %v196
  %245 = vmatpush.bf16.msra.mxu0 %v194
  %246 = vmatpush.bf16.msra.mxu0 %v192
  %247 = vmatpush.bf16.msra.mxu0 %v190
  %248 = vmatpush.bf16.msra.mxu0 %v188
  %249 = vmatpush.bf16.msra.mxu0 %v186
  %250 = vmatpush.bf16.msra.mxu0 %v184
  %251 = vmatpush.bf16.msra.mxu0 %v182
  %252 = vmatmul.bf16.gmra.mxu0 %v67
  %v253 = vpop.f32.mrf.mxu0
  %v254 = vadd.f32 %v240, %v253
  %v255 = vpop.f32.mrf.mxu0
  %v256 = vadd.f32 %v242, %v255
  %257 = vdwg.mxu0
  %258 = vmatpush.bf16.msra.mxu0 %v181
  %259 = vmatpush.bf16.msra.mxu0 %v179
  %260 = vmatpush.bf16.msra.mxu0 %v177
  %261 = vmatpush.bf16.msra.mxu0 %v175
  %262 = vmatpush.bf16.msra.mxu0 %v173
  %263 = vmatpush.bf16.msra.mxu0 %v171
  %264 = vmatpush.bf16.msra.mxu0 %v169
  %265 = vmatpush.bf16.msra.mxu0 %v167
  %266 = vmatmul.bf16.gmra.mxu0 %v66
  %v267 = vpop.f32.mrf.mxu0
  %v268 = vadd.f32 0.0, %v267
  %v269 = vpop.f32.mrf.mxu0
  %v270 = vadd.f32 0.0, %v269
  %271 = vdwg.mxu0
  %272 = vmatpush.bf16.msra.mxu0 %v197
  %273 = vmatpush.bf16.msra.mxu0 %v195
  %274 = vmatpush.bf16.msra.mxu0 %v193
  %275 = vmatpush.bf16.msra.mxu0 %v191
  %276 = vmatpush.bf16.msra.mxu0 %v189
  %277 = vmatpush.bf16.msra.mxu0 %v187
  %278 = vmatpush.bf16.msra.mxu0 %v185
  %279 = vmatpush.bf16.msra.mxu0 %v183
  %280 = vmatmul.bf16.gmra.mxu0 %v67
  %v281 = vpop.f32.mrf.mxu0
  %v282 = vadd.f32 %v268, %v281
  %v283 = vpop.f32.mrf.mxu0
  %v284 = vadd.f32 %v270, %v283
  %285 = vdwg.mxu0
  %v286 = vadd.f32 %v22, %v254
  %v287 = vadd.f32 %v23, %v282
  %v288 = vadd.f32 %v24, %v256
  %v289 = vadd.f32 %v25, %v284
  %290 = vst [vmem:[#allocation2] sm:$0xff] %v286
  %291 = vst [vmem:[#allocation2 + $0x8] sm:$0xff] %v287
  %292 = vst [vmem:[#allocation2 + $0x10] sm:$0xff] %v288
  %293 = vst [vmem:[#allocation2 + $0x18] sm:$0xff] %v289
  // Predicated region
  $region18: #{transformer_forward.13} parent=0 // pred_check
    %p294 = pneg %p14
  $region19: #{transformer_forward.13} parent=0 // pred_check_branch
    %296 = sbr.rel (%p294) target = $region21
  $region20: #{transformer_forward.13} parent=0 // pred_region
    %v297 = vld [vmem:[#allocation2] sm:$0xff]
    %v298 = vld [vmem:[#allocation2 + $0x8] sm:$0xff]
    %v299 = vld [vmem:[#allocation2 + $0x10] sm:$0xff]
    %v300 = vld [vmem:[#allocation2 + $0x18] sm:$0xff]
    %v301 = vld [vmem:[%s2] sm:$0xff]
    %v302 = vld [vmem:[%s2 + $0x8] sm:$0xff]
    %v303 = vunpack.c.l.bf16 %v301
    %v304 = vunpack.c.h.bf16 %v301
    %v305 = vunpack.c.l.bf16 %v302
    %v306 = vunpack.c.h.bf16 %v302
    %v307 = vadd.f32 %v297, %v303
    %v308 = vadd.f32 %v298, %v304
    %v309 = vadd.f32 %v299, %v305
    %v310 = vadd.f32 %v300, %v306
    %v311 = vpack.c.bf16 %v308, %v307
    %v312 = vpack.c.bf16 %v310, %v309
    %313 = vst [vmem:[%s3] sm:$0xff] %v311
    %314 = vst [vmem:[%s3 + $0x8] sm:$0xff] %v312
  $region21: #{transformer_forward.13} parent=0 // pred_fallthru
    _
  // Predicated region
  $region22: #{transformer_forward.13} parent=0 // pred_check
    _
  $region23: #{transformer_forward.13} parent=0 // pred_check_branch
    %316 = sbr.rel (0) target = $region25
  $region24: #{transformer_forward.13} parent=0 // pred_region
    _
  $region25: #{transformer_forward.13} parent=0 // pred_fallthru
    _
  // Predicated region
  $region26: #{transformer_forward.13} parent=0 // pred_check
    _
  $region27: #{transformer_forward.13} parent=0 // pred_check_branch
    %318 = sbr.rel (0) target = $region29
  $region28: #{transformer_forward.13} parent=0 // pred_region
    _
  $region29: #{transformer_forward.13} parent=0 // pred_fallthru
    _

// kernel: transformer_forward.11
$region0: #{transformer_forward.11}
  #allocation0 [shape = 'u32[]', space=smem, size = 0x4, offset = 0x4, fixed_abs, tag = 'smem constant byte address 0x4 - core index']
  #allocation1 [shape = 'u32[72,128]{1,0:T(1,128)}', space=vmem, size = 0x9000, scoped, tag = 'internal scratch']
  #allocation2 [shape = 'bf16[16,256]{1,0:T(8,128)(2,1)}', space=vmem, size = 0x2000, scoped, tag = 'scratch operand']
  %s0 = inlined_call_operand.vmem [shape: bf16[16,256], index: 0, kind: input, shape index: {}]
  %s1 = inlined_call_operand.vmem [shape: f32[1,256], index: 1, kind: input, shape index: {}]
  %s2 = inlined_call_operand.vmem [shape: bf16[256,1024], index: 2, kind: input, shape index: {}]
  %s3 = inlined_call_operand.vmem [shape: bf16[16,1024], index: 3, kind: output, shape index: {}]
  %s4 = sld [smem:[#allocation0]]
  $region91: #{transformer_forward.11} parent=0
    _
  %s6 = ssub.s32 1, %s4
  %s7 = scalar_select 0, %s6, %s4
  $region1: #{transformer_forward.11} parent=0
    #allocation3 [shape = 'u8[524288]{0}', space=vmem, size = 0x80000, scoped, tag = 'input window, operand 2']
    #allocation4 [shape = 'u8[32768]{0}', space=vmem, size = 0x8000, scoped, tag = 'output window, operand 0']
    loop: start=0, step=1, limit=4
    $region2: #{transformer_forward.11} parent=1 // loop_pre_header
      _
    $region3: #{transformer_forward.11} parent=1 // loop_header
      %s9 = sphi 0, %s13
      %p10 = scmp.ge.s32.totalorder %s9, 4
      %s16 = sphi 0, %s28
      %s17 = sphi 0, %s24
      %s18 = sphi 0, %s16
      %s19 = sphi 0, %s17
      %s20 = sphi 0, %s18
      %s21 = sphi 0, %s19
      %s31 = sphi 0, %s33
      %s34 = sphi 0, %s31
      %s35 = sphi 0, %s34
      %s51 = sphi 0, %s35
      %s55 = sphi 0, %s55
      %s57 = sphi 0, %s55
      %s58 = sphi 0, %s57
      %s72 = sphi 0, %s58
      %s78 = sphi 0, %s80
      %s81 = sphi 0, %s78
      %s82 = sphi 0, %s81
      %s98 = sphi 0, %s82
      %s106 = sphi 0, %s108
      %s109 = sphi 0, %s106
      %s110 = sphi 0, %s109
      %s126 = sphi 0, %s110
    $region4: #{transformer_forward.11} parent=1 // loop_header_branch
      %12 = sbr.rel (%p10) target = $region8
    $region5: #{transformer_forward.11} parent=1 // loop_body
      %s14 = ssub.s32 %s9, 1
      %s15 = ssub.s32 %s9, 2
      %s22 = sadd.s32 1, %s17
      %p23 = scmp.ge.s32.totalorder %s22, 2
      %s24 = scalar_select %p23, 0, %s22
      %s25 = sadd.s32 1, %s16
      %s26 = scalar_select %p23, %s25, %s16
      %p27 = scmp.ge.s32.totalorder %s26, 1
      %s28 = scalar_select %p27, 0, %s26
      %s29 = ssub.s32 %s16, %s28
      %p30 = scmp.eq.s32.totalorder %s29, 0
      %s32 = sadd.s32 %s31, 1
      %s33 = scalar_select %p30, %s31, %s32
      %p36 = pneg %p30
      %p37 = scmp.eq.s32.totalorder %s9, 1
      %p38 = por %p36, %p37
      %p39 = scmp.ne.s32.totalorder %s31, %s34
      %p40 = scmp.eq.s32.totalorder %s9, 0
      %p41 = por %p39, %p40
      %p42 = scmp.ne.s32.totalorder %s31, %s34
      %p43 = scmp.eq.s32.totalorder %s14, 1
      %p44 = por %p42, %p43
      %p45 = scmp.ne.s32.totalorder %s34, %s35
      %p46 = scmp.eq.s32.totalorder %s14, 0
      %p47 = por %p45, %p46
      %p48 = scmp.ne.s32.totalorder %s34, %s35
      %p49 = scmp.eq.s32.totalorder %s15, 1
      %p50 = por %p48, %p49
      %p52 = scmp.ne.s32.totalorder %s35, %s51
      %p53 = scmp.eq.s32.totalorder %s15, 0
      %p54 = por %p52, %p53
      %s56 = sadd.s32 %s55, 1
      %p59 = scmp.eq.s32.totalorder %s9, 1
      %p60 = scmp.ne.s32.totalorder %s55, %s57
      %p61 = scmp.eq.s32.totalorder %s9, 0
      %p62 = por %p60, %p61
      %p63 = scmp.ne.s32.totalorder %s55, %s57
      %p64 = scmp.eq.s32.totalorder %s14, 1
      %p65 = por %p63, %p64
      %p66 = scmp.ne.s32.totalorder %s57, %s58
      %p67 = scmp.eq.s32.totalorder %s14, 0
      %p68 = por %p66, %p67
      %p69 = scmp.ne.s32.totalorder %s57, %s58
      %p70 = scmp.eq.s32.totalorder %s15, 1
      %p71 = por %p69, %p70
      %p73 = scmp.ne.s32.totalorder %s58, %s72
      %p74 = scmp.eq.s32.totalorder %s15, 0
      %p75 = por %p73, %p74
      %s76 = ssub.s32 %s17, %s24
      %p77 = scmp.eq.s32.totalorder %s76, 0
      %s79 = sadd.s32 %s78, 1
      %s80 = scalar_select %p77, %s78, %s79
      %p83 = pneg %p77
      %p84 = scmp.eq.s32.totalorder %s9, 1
      %p85 = por %p83, %p84
      %p86 = scmp.ne.s32.totalorder %s78, %s81
      %p87 = scmp.eq.s32.totalorder %s9, 0
      %p88 = por %p86, %p87
      %p89 = scmp.ne.s32.totalorder %s78, %s81
      %p90 = scmp.eq.s32.totalorder %s14, 1
      %p91 = por %p89, %p90
      %p92 = scmp.ne.s32.totalorder %s81, %s82
      %p93 = scmp.eq.s32.totalorder %s14, 0
      %p94 = por %p92, %p93
      %p95 = scmp.ne.s32.totalorder %s81, %s82
      %p96 = scmp.eq.s32.totalorder %s15, 1
      %p97 = por %p95, %p96
      %p99 = scmp.ne.s32.totalorder %s82, %s98
      %p100 = scmp.eq.s32.totalorder %s15, 0
      %p101 = por %p99, %p100
      %s102 = ssub.s32 %s16, %s28
      %s103 = ssub.s32 %s17, %s24
      %s104 = sor.u32 %s102, %s103
      %p105 = scmp.eq.s32.totalorder %s104, 0
      %s107 = sadd.s32 %s106, 1
      %s108 = scalar_select %p105, %s106, %s107
      %p111 = pneg %p105
      %p112 = scmp.eq.s32.totalorder %s9, 1
      %p113 = por %p111, %p112
      %p114 = scmp.ne.s32.totalorder %s106, %s109
      %p115 = scmp.eq.s32.totalorder %s9, 0
      %p116 = por %p114, %p115
      %p117 = scmp.ne.s32.totalorder %s106, %s109
      %p118 = scmp.eq.s32.totalorder %s14, 1
      %p119 = por %p117, %p118
      %p120 = scmp.ne.s32.totalorder %s109, %s110
      %p121 = scmp.eq.s32.totalorder %s14, 0
      %p122 = por %p120, %p121
      %p123 = scmp.ne.s32.totalorder %s109, %s110
      %p124 = scmp.eq.s32.totalorder %s15, 1
      %p125 = por %p123, %p124
      %p127 = scmp.ne.s32.totalorder %s110, %s126
      %p128 = scmp.eq.s32.totalorder %s15, 0
      %p129 = por %p127, %p128
      %p130 = scmp.le.s32.totalorder 1, %s9
      %p131 = scmp.lt.s32.totalorder %s9, 3
      %p132 = pnand %p130, %p131
      %p133 = pneg %p132
      // Predicated region
      $region9: #{transformer_forward.11} parent=5 // pred_check
        _
      $region10: #{transformer_forward.11} parent=5 // pred_check_branch
        %135 = sbr.rel (%p132) target = $region12
      $region11: #{transformer_forward.11} parent=5 // pred_region
        %s136 = ssub.s32 %s9, 1
        // Predicated region
        $region13: #{transformer_forward.11} parent=11 // pred_check
          %p137 = pneg %p47
        $region14: #{transformer_forward.11} parent=11 // pred_check_branch
          %139 = sbr.rel (%p137) target = $region16
        $region15: #{transformer_forward.11} parent=11 // pred_region
          %s140 = smul.u32 2, %s18
          %p141 = scmp.lt.s32.totalorder %s140, 1
          %s142 = scalar_select %p141, %s140, 1
          %s143 = smul.addr %s142, 2
          %s144 = smul.addr %s143, 4
          %s145 = scalar_lea.vmem %s0, %s144
          %s146 = smul.u32 2, %s18
        $region16: #{transformer_forward.11} parent=11 // pred_fallthru
          _
        // Predicated region
        $region17: #{transformer_forward.11} parent=11 // pred_check
          %p147 = pneg %p68
        $region18: #{transformer_forward.11} parent=11 // pred_check_branch
          %149 = sbr.rel (%p147) target = $region20
        $region19: #{transformer_forward.11} parent=11 // pred_region
          _
        $region20: #{transformer_forward.11} parent=11 // pred_fallthru
          _
      $region12: #{transformer_forward.11} parent=5 // pred_fallthru
        _
      %p150 = scmp.lt.s32.totalorder %s9, 2
      // Predicated region
      $region21: #{transformer_forward.11} parent=5 // pred_check
        %p151 = pneg %p150
      $region22: #{transformer_forward.11} parent=5 // pred_check_branch
        %153 = sbr.rel (%p151) target = $region24
      $region23: #{transformer_forward.11} parent=5 // pred_region
        // Predicated region
        $region25: #{transformer_forward.11} parent=23 // pred_check
          %p154 = pneg %p88
        $region26: #{transformer_forward.11} parent=23 // pred_check_branch
          %156 = sbr.rel (%p154) target = $region28
        $region27: #{transformer_forward.11} parent=23 // pred_region
          %s157 = sand.u32 %s78, 1
          %s158 = sand.u32 %s78, 1
          %s159 = smul.addr %s158, 512
          %s160 = scalar_lea.vmem [#allocation3], %s159
          %s161 = smul.u32 4, %s17
          %s162 = smul.addr %s161, 4
          %s163 = scalar_lea.vmem %s2, %s162
          // Predicated region
          $region29: #{transformer_forward.11} parent=27 // pred_check
            _
          $region30: #{transformer_forward.11} parent=27 // pred_check_branch
            %165 = sbr.rel (0) target = $region32
          $region31: #{transformer_forward.11} parent=27 // pred_region
            // Predicated region
            $region33: #{transformer_forward.11} parent=31 // pred_check
              _
            $region34: #{transformer_forward.11} parent=31 // pred_check_branch
              %167 = sbr.rel (0) target = $region36
            $region35: #{transformer_forward.11} parent=31 // pred_region
              loop: start=0, step=1, limit=1
              $region37: #{transformer_forward.11} parent=35 // loop_pre_header
                _
              $region38: #{transformer_forward.11} parent=35 // loop_header
                %s169 = sphi 0, %s173
                %p170 = scmp.ge.s32.totalorder %s169, 1
                %s174 = sphi %s163, %s163
                %s175 = sphi %s160, %s160
              $region39: #{transformer_forward.11} parent=35 // loop_header_branch
                %172 = sbr.rel (%p170) target = $region43
              $region40: #{transformer_forward.11} parent=35 // loop_body
                %v176 = vld [vmem:[%s174] sm:$0xff]
                %177 = vst [vmem:[%s175] sm:$0xff] %v176
                %v178 = vld [vmem:[%s174 + $0x8] sm:$0xff]
                %179 = vst [vmem:[%s175 + $0x8] sm:$0xff] %v178
                %v180 = vld [vmem:[%s174 + $0x20] sm:$0xff]
                %181 = vst [vmem:[%s175 + $0x10] sm:$0xff] %v180
                %v182 = vld [vmem:[%s174 + $0x28] sm:$0xff]
                %183 = vst [vmem:[%s175 + $0x18] sm:$0xff] %v182
                %v184 = vld [vmem:[%s174 + $0x40] sm:$0xff]
                %185 = vst [vmem:[%s175 + $0x20] sm:$0xff] %v184
                %v186 = vld [vmem:[%s174 + $0x48] sm:$0xff]
                %187 = vst [vmem:[%s175 + $0x28] sm:$0xff] %v186
                %v188 = vld [vmem:[%s174 + $0x60] sm:$0xff]
                %189 = vst [vmem:[%s175 + $0x30] sm:$0xff] %v188
                %v190 = vld [vmem:[%s174 + $0x68] sm:$0xff]
                %191 = vst [vmem:[%s175 + $0x38] sm:$0xff] %v190
                %v192 = vld [vmem:[%s174 + $0x80] sm:$0xff]
                %193 = vst [vmem:[%s175 + $0x40] sm:$0xff] %v192
                %v194 = vld [vmem:[%s174 + $0x88] sm:$0xff]
                %195 = vst [vmem:[%s175 + $0x48] sm:$0xff] %v194
                %v196 = vld [vmem:[%s174 + $0xa0] sm:$0xff]
                %197 = vst [vmem:[%s175 + $0x50] sm:$0xff] %v196
                %v198 = vld [vmem:[%s174 + $0xa8] sm:$0xff]
                %199 = vst [vmem:[%s175 + $0x58] sm:$0xff] %v198
                %v200 = vld [vmem:[%s174 + $0xc0] sm:$0xff]
                %201 = vst [vmem:[%s175 + $0x60] sm:$0xff] %v200
                %v202 = vld [vmem:[%s174 + $0xc8] sm:$0xff]
                %203 = vst [vmem:[%s175 + $0x68] sm:$0xff] %v202
                %v204 = vld [vmem:[%s174 + $0xe0] sm:$0xff]
                %205 = vst [vmem:[%s175 + $0x70] sm:$0xff] %v204
                %v206 = vld [vmem:[%s174 + $0xe8] sm:$0xff]
                %207 = vst [vmem:[%s175 + $0x78] sm:$0xff] %v206
                %v208 = vld [vmem:[%s174 + $0x100] sm:$0xff]
                %209 = vst [vmem:[%s175 + $0x80] sm:$0xff] %v208
                %v210 = vld [vmem:[%s174 + $0x108] sm:$0xff]
                %211 = vst [vmem:[%s175 + $0x88] sm:$0xff] %v210
                %v212 = vld [vmem:[%s174 + $0x120] sm:$0xff]
                %213 = vst [vmem:[%s175 + $0x90] sm:$0xff] %v212
                %v214 = vld [vmem:[%s174 + $0x128] sm:$0xff]
                %215 = vst [vmem:[%s175 + $0x98] sm:$0xff] %v214
                %v216 = vld [vmem:[%s174 + $0x140] sm:$0xff]
                %217 = vst [vmem:[%s175 + $0xa0] sm:$0xff] %v216
                %v218 = vld [vmem:[%s174 + $0x148] sm:$0xff]
                %219 = vst [vmem:[%s175 + $0xa8] sm:$0xff] %v218
                %v220 = vld [vmem:[%s174 + $0x160] sm:$0xff]
                %221 = vst [vmem:[%s175 + $0xb0] sm:$0xff] %v220
                %v222 = vld [vmem:[%s174 + $0x168] sm:$0xff]
                %223 = vst [vmem:[%s175 + $0xb8] sm:$0xff] %v222
                %v224 = vld [vmem:[%s174 + $0x180] sm:$0xff]
                %225 = vst [vmem:[%s175 + $0xc0] sm:$0xff] %v224
                %v226 = vld [vmem:[%s174 + $0x188] sm:$0xff]
                %227 = vst [vmem:[%s175 + $0xc8] sm:$0xff] %v226
                %v228 = vld [vmem:[%s174 + $0x1a0] sm:$0xff]
                %229 = vst [vmem:[%s175 + $0xd0] sm:$0xff] %v228
                %v230 = vld [vmem:[%s174 + $0x1a8] sm:$0xff]
                %231 = vst [vmem:[%s175 + $0xd8] sm:$0xff] %v230
                %v232 = vld [vmem:[%s174 + $0x1c0] sm:$0xff]
                %233 = vst [vmem:[%s175 + $0xe0] sm:$0xff] %v232
                %v234 = vld [vmem:[%s174 + $0x1c8] sm:$0xff]
                %235 = vst [vmem:[%s175 + $0xe8] sm:$0xff] %v234
                %v236 = vld [vmem:[%s174 + $0x1e0] sm:$0xff]
                %237 = vst [vmem:[%s175 + $0xf0] sm:$0xff] %v236
                %v238 = vld [vmem:[%s174 + $0x1e8] sm:$0xff]
                %239 = vst [vmem:[%s175 + $0xf8] sm:$0xff] %v238
                %v240 = vld [vmem:[%s174 + $0x200] sm:$0xff]
                %241 = vst [vmem:[%s175 + $0x100] sm:$0xff] %v240
                %v242 = vld [vmem:[%s174 + $0x208] sm:$0xff]
                %243 = vst [vmem:[%s175 + $0x108] sm:$0xff] %v242
                %v244 = vld [vmem:[%s174 + $0x220] sm:$0xff]
                %245 = vst [vmem:[%s175 + $0x110] sm:$0xff] %v244
                %v246 = vld [vmem:[%s174 + $0x228] sm:$0xff]
                %247 = vst [vmem:[%s175 + $0x118] sm:$0xff] %v246
                %v248 = vld [vmem:[%s174 + $0x240] sm:$0xff]
                %249 = vst [vmem:[%s175 + $0x120] sm:$0xff] %v248
                %v250 = vld [vmem:[%s174 + $0x248] sm:$0xff]
                %251 = vst [vmem:[%s175 + $0x128] sm:$0xff] %v250
                %v252 = vld [vmem:[%s174 + $0x260] sm:$0xff]
                %253 = vst [vmem:[%s175 + $0x130] sm:$0xff] %v252
                %v254 = vld [vmem:[%s174 + $0x268] sm:$0xff]
                %255 = vst [vmem:[%s175 + $0x138] sm:$0xff] %v254
                %v256 = vld [vmem:[%s174 + $0x280] sm:$0xff]
                %257 = vst [vmem:[%s175 + $0x140] sm:$0xff] %v256
                %v258 = vld [vmem:[%s174 + $0x288] sm:$0xff]
                %259 = vst [vmem:[%s175 + $0x148] sm:$0xff] %v258
                %v260 = vld [vmem:[%s174 + $0x2a0] sm:$0xff]
                %261 = vst [vmem:[%s175 + $0x150] sm:$0xff] %v260
                %v262 = vld [vmem:[%s174 + $0x2a8] sm:$0xff]
                %263 = vst [vmem:[%s175 + $0x158] sm:$0xff] %v262
                %v264 = vld [vmem:[%s174 + $0x2c0] sm:$0xff]
                %265 = vst [vmem:[%s175 + $0x160] sm:$0xff] %v264
                %v266 = vld [vmem:[%s174 + $0x2c8] sm:$0xff]
                %267 = vst [vmem:[%s175 + $0x168] sm:$0xff] %v266
                %v268 = vld [vmem:[%s174 + $0x2e0] sm:$0xff]
                %269 = vst [vmem:[%s175 + $0x170] sm:$0xff] %v268
                %v270 = vld [vmem:[%s174 + $0x2e8] sm:$0xff]
                %271 = vst [vmem:[%s175 + $0x178] sm:$0xff] %v270
                %v272 = vld [vmem:[%s174 + $0x300] sm:$0xff]
                %273 = vst [vmem:[%s175 + $0x180] sm:$0xff] %v272
                %v274 = vld [vmem:[%s174 + $0x308] sm:$0xff]
                %275 = vst [vmem:[%s175 + $0x188] sm:$0xff] %v274
                %v276 = vld [vmem:[%s174 + $0x320] sm:$0xff]
                %277 = vst [vmem:[%s175 + $0x190] sm:$0xff] %v276
                %v278 = vld [vmem:[%s174 + $0x328] sm:$0xff]
                %279 = vst [vmem:[%s175 + $0x198] sm:$0xff] %v278
                %v280 = vld [vmem:[%s174 + $0x340] sm:$0xff]
                %281 = vst [vmem:[%s175 + $0x1a0] sm:$0xff] %v280
                %v282 = vld [vmem:[%s174 + $0x348] sm:$0xff]
                %283 = vst [vmem:[%s175 + $0x1a8] sm:$0xff] %v282
                %v284 = vld [vmem:[%s174 + $0x360] sm:$0xff]
                %285 = vst [vmem:[%s175 + $0x1b0] sm:$0xff] %v284
                %v286 = vld [vmem:[%s174 + $0x368] sm:$0xff]
                %287 = vst [vmem:[%s175 + $0x1b8] sm:$0xff] %v286
                %v288 = vld [vmem:[%s174 + $0x380] sm:$0xff]
                %289 = vst [vmem:[%s175 + $0x1c0] sm:$0xff] %v288
                %v290 = vld [vmem:[%s174 + $0x388] sm:$0xff]
                %291 = vst [vmem:[%s175 + $0x1c8] sm:$0xff] %v290
                %v292 = vld [vmem:[%s174 + $0x3a0] sm:$0xff]
                %293 = vst [vmem:[%s175 + $0x1d0] sm:$0xff] %v292
                %v294 = vld [vmem:[%s174 + $0x3a8] sm:$0xff]
                %295 = vst [vmem:[%s175 + $0x1d8] sm:$0xff] %v294
                %v296 = vld [vmem:[%s174 + $0x3c0] sm:$0xff]
                %297 = vst [vmem:[%s175 + $0x1e0] sm:$0xff] %v296
                %v298 = vld [vmem:[%s174 + $0x3c8] sm:$0xff]
                %299 = vst [vmem:[%s175 + $0x1e8] sm:$0xff] %v298
                %v300 = vld [vmem:[%s174 + $0x3e0] sm:$0xff]
                %301 = vst [vmem:[%s175 + $0x1f0] sm:$0xff] %v300
                %v302 = vld [vmem:[%s174 + $0x3e8] sm:$0xff]
                %303 = vst [vmem:[%s175 + $0x1f8] sm:$0xff] %v302
              $region41: #{transformer_forward.11} parent=35 // loop_footer
                %s173 = sadd.s32 1, %s169
              $region42: #{transformer_forward.11} parent=35 // loop_footer_branch
                %168 = sbr.rel target = $region38
              $region43: #{transformer_forward.11} parent=35 // loop_exit
                _
            $region36: #{transformer_forward.11} parent=31 // pred_fallthru
              _
            // Predicated region
            $region44: #{transformer_forward.11} parent=31 // pred_check
              _
            $region45: #{transformer_forward.11} parent=31 // pred_check_branch
              %305 = sbr.rel target = $region47
            $region46: #{transformer_forward.11} parent=31 // pred_region
              _
            $region47: #{transformer_forward.11} parent=31 // pred_fallthru
              _
          $region32: #{transformer_forward.11} parent=27 // pred_fallthru
            _
          %306 = vnop
        $region28: #{transformer_forward.11} parent=23 // pred_fallthru
          _
      $region24: #{transformer_forward.11} parent=5 // pred_fallthru
        _
      %p307 = scmp.le.s32.totalorder 1, %s9
      %p308 = scmp.lt.s32.totalorder %s9, 3
      %p309 = pnand %p307, %p308
      %p310 = pneg %p309
      // Predicated region
      $region48: #{transformer_forward.11} parent=5 // pred_check
        _
      $region49: #{transformer_forward.11} parent=5 // pred_check_branch
        %312 = sbr.rel (%p309) target = $region51
      $region50: #{transformer_forward.11} parent=5 // pred_region
        %s313 = ssub.s32 %s9, 1
        %s314 = sand.u32 %s81, 1
        %s315 = sand.u32 %s81, 1
        %s316 = smul.addr %s315, 512
        %s317 = scalar_lea.vmem [#allocation3], %s316
        // Predicated region
        $region52: #{transformer_forward.11} parent=50 // pred_check
          %p318 = pneg %p94
        $region53: #{transformer_forward.11} parent=50 // pred_check_branch
          %320 = sbr.rel (%p318) target = $region55
        $region54: #{transformer_forward.11} parent=50 // pred_region
          _
        $region55: #{transformer_forward.11} parent=50 // pred_fallthru
          _
        %s321 = smul.u32 2, %s18
        %p322 = scmp.lt.s32.totalorder %s321, 1
        %s323 = scalar_select %p322, %s321, 1
        %s324 = smul.addr %s323, 2
        %s325 = smul.addr %s324, 4
        %s326 = scalar_lea.vmem %s0, %s325
        %p327 = pneg %p47
        %p328 = pneg %p44
        %p329 = pneg %p68
        %p330 = pneg %p65
        %s331 = sand.u32 %s81, 1
        %s332 = sand.u32 %s81, 1
        %s333 = smul.addr %s332, 512
        %s334 = scalar_lea.vmem [#allocation3], %s333
        %p335 = pneg %p94
        %p336 = pneg %p91
        %p337 = pneg %p122
        %p338 = pneg %p119
        %s339 = sand.u32 %s109, 1
        %s340 = sand.u32 %s109, 1
        %s341 = smul.addr %s340, 32
        %s342 = scalar_lea.vmem [#allocation4], %s341
        %s343 = smul.u32 2, %s18
        %p344 = scmp.lt.s32.totalorder %s343, 1
        %s345 = scalar_select %p344, %s343, 1
        %s346 = smul.addr %s345, 2
        %s347 = smul.addr %s346, 4
        %s348 = scalar_lea.vmem %s0, %s347
        %s349 = smul.u32 2, %s18
        %s350 = smul.u32 4, %s19
        %s351 = smul.u32 2, %s18
        %s352 = smul.u32 4, %s19
        %p353 = scmp.eq.s32.totalorder %s19, 0
        // Predicated region
        $region56: #{transformer_forward.11} parent=50 // pred_check
          %p354 = pneg %p353
        $region57: #{transformer_forward.11} parent=50 // pred_check_branch
          %356 = sbr.rel (%p354) target = $region59
        $region58: #{transformer_forward.11} parent=50 // pred_region
          %v357 = vld [vmem:[%s348] sm:$0xff]
          %v358 = vld [vmem:[%s348 + $0x8] sm:$0xff]
          %v359 = vunpack.c.l.bf16 %v357
          %v360 = vunpack.c.h.bf16 %v357
          %v361 = vunpack.c.l.bf16 %v358
          %v362 = vunpack.c.h.bf16 %v358
          %v363 = vmul.f32 %v359, %v359
          %v364 = vmul.f32 %v360, %v360
          %v365 = vmul.f32 %v361, %v361
          %v366 = vmul.f32 %v362, %v362
          %v367 = vadd.f32 %v363, %v364
          %368 = vadd.xlane.f32.xlu0 %v367
          %v369 = vpop.xlane.xlu0 %368
          %v370 = vadd.f32 %v365, %v366
          %371 = vadd.xlane.f32.xlu0 %v370
          %v372 = vpop.xlane.xlu0 %371
          %v373 = vmul.f32 %v369, 0.00390625
          %v374 = vmul.f32 %v372, 0.00390625
          %v375 = vadd.f32 %v373, 1e-06
          %v376 = vadd.f32 %v374, 1e-06
          %v377 = vrsqrt.pop %v375
          %v378 = vmul.f32 %v377, %v375
          %v379 = vmul.f32 %v378, %v377
          %v380 = vmul.f32 0.5, %v379
          %v381 = vsub.f32 1.5, %v380
          %v382 = vmul.f32 %v377, %v381
          %vm383 = vweird.f32 %v375
          %vm384 = vweird.f32 %v377
          %vm385 = vmor %vm383, %vm384
          %v386 = vsel %vm385, %v377, %v382
          %v387 = vrsqrt.pop %v376
          %v388 = vmul.f32 %v387, %v376
          %v389 = vmul.f32 %v388, %v387
          %v390 = vmul.f32 0.5, %v389
          %v391 = vsub.f32 1.5, %v390
          %v392 = vmul.f32 %v387, %v391
          %vm393 = vweird.f32 %v376
          %vm394 = vweird.f32 %v387
          %vm395 = vmor %vm393, %vm394
          %v396 = vsel %vm395, %v387, %v392
          %v397 = vmul.f32 %v359, %v386
          %v398 = vmul.f32 %v360, %v386
          %v399 = vmul.f32 %v361, %v396
          %v400 = vmul.f32 %v362, %v396
          %v401 = vld [vmem:[%s1] sm:$0x3]
          %v403 = vperm.slane %v401, 0
          %v404 = vperm.slane %v401, 1
          %v407 = vmul.f32 %v397, %v403
          %v408 = vmul.f32 %v398, %v404
          %v409 = vmul.f32 %v399, %v403
          %v410 = vmul.f32 %v400, %v404
          %v411 = vpack.c.bf16 %v408, %v407
          %v412 = vpack.c.bf16 %v410, %v409
          %413 = vst [vmem:[#allocation2] sm:$0xff] %v411
          %414 = vst [vmem:[#allocation2 + $0x8] sm:$0xff] %v412
        $region59: #{transformer_forward.11} parent=50 // pred_fallthru
          _
        %v415 = vld [vmem:[#allocation2] sm:$0xff]
        %v416 = vld [vmem:[#allocation2 + $0x8] sm:$0xff]
        %v417 = vld [vmem:[%s317] sm:$0xff]
        %v418 = vld [vmem:[%s317 + $0x8] sm:$0xff]
        %v419 = vld [vmem:[%s317 + $0x10] sm:$0xff]
        %v420 = vld [vmem:[%s317 + $0x18] sm:$0xff]
        %v421 = vld [vmem:[%s317 + $0x20] sm:$0xff]
        %v422 = vld [vmem:[%s317 + $0x28] sm:$0xff]
        %v423 = vld [vmem:[%s317 + $0x30] sm:$0xff]
        %v424 = vld [vmem:[%s317 + $0x38] sm:$0xff]
        %v425 = vld [vmem:[%s317 + $0x40] sm:$0xff]
        %v426 = vld [vmem:[%s317 + $0x48] sm:$0xff]
        %v427 = vld [vmem:[%s317 + $0x50] sm:$0xff]
        %v428 = vld [vmem:[%s317 + $0x58] sm:$0xff]
        %v429 = vld [vmem:[%s317 + $0x60] sm:$0xff]
        %v430 = vld [vmem:[%s317 + $0x68] sm:$0xff]
        %v431 = vld [vmem:[%s317 + $0x70] sm:$0xff]
        %v432 = vld [vmem:[%s317 + $0x78] sm:$0xff]
        %v433 = vld [vmem:[%s317 + $0x80] sm:$0xff]
        %v434 = vld [vmem:[%s317 + $0x88] sm:$0xff]
        %v435 = vld [vmem:[%s317 + $0x90] sm:$0xff]
        %v436 = vld [vmem:[%s317 + $0x98] sm:$0xff]
        %v437 = vld [vmem:[%s317 + $0xa0] sm:$0xff]
        %v438 = vld [vmem:[%s317 + $0xa8] sm:$0xff]
        %v439 = vld [vmem:[%s317 + $0xb0] sm:$0xff]
        %v440 = vld [vmem:[%s317 + $0xb8] sm:$0xff]
        %v441 = vld [vmem:[%s317 + $0xc0] sm:$0xff]
        %v442 = vld [vmem:[%s317 + $0xc8] sm:$0xff]
        %v443 = vld [vmem:[%s317 + $0xd0] sm:$0xff]
        %v444 = vld [vmem:[%s317 + $0xd8] sm:$0xff]
        %v445 = vld [vmem:[%s317 + $0xe0] sm:$0xff]
        %v446 = vld [vmem:[%s317 + $0xe8] sm:$0xff]
        %v447 = vld [vmem:[%s317 + $0xf0] sm:$0xff]
        %v448 = vld [vmem:[%s317 + $0xf8] sm:$0xff]
        %v449 = vld [vmem:[%s317 + $0x100] sm:$0xff]
        %v450 = vld [vmem:[%s317 + $0x108] sm:$0xff]
        %v451 = vld [vmem:[%s317 + $0x110] sm:$0xff]
        %v452 = vld [vmem:[%s317 + $0x118] sm:$0xff]
        %v453 = vld [vmem:[%s317 + $0x120] sm:$0xff]
        %v454 = vld [vmem:[%s317 + $0x128] sm:$0xff]
        %v455 = vld [vmem:[%s317 + $0x130] sm:$0xff]
        %v456 = vld [vmem:[%s317 + $0x138] sm:$0xff]
        %v457 = vld [vmem:[%s317 + $0x140] sm:$0xff]
        %v458 = vld [vmem:[%s317 + $0x148] sm:$0xff]
        %v459 = vld [vmem:[%s317 + $0x150] sm:$0xff]
        %v460 = vld [vmem:[%s317 + $0x158] sm:$0xff]
        %v461 = vld [vmem:[%s317 + $0x160] sm:$0xff]
        %v462 = vld [vmem:[%s317 + $0x168] sm:$0xff]
        %v463 = vld [vmem:[%s317 + $0x170] sm:$0xff]
        %v464 = vld [vmem:[%s317 + $0x178] sm:$0xff]
        %v465 = vld [vmem:[%s317 + $0x180] sm:$0xff]
        %v466 = vld [vmem:[%s317 + $0x188] sm:$0xff]
        %v467 = vld [vmem:[%s317 + $0x190] sm:$0xff]
        %v468 = vld [vmem:[%s317 + $0x198] sm:$0xff]
        %v469 = vld [vmem:[%s317 + $0x1a0] sm:$0xff]
        %v470 = vld [vmem:[%s317 + $0x1a8] sm:$0xff]
        %v471 = vld [vmem:[%s317 + $0x1b0] sm:$0xff]
        %v472 = vld [vmem:[%s317 + $0x1b8] sm:$0xff]
        %v473 = vld [vmem:[%s317 + $0x1c0] sm:$0xff]
        %v474 = vld [vmem:[%s317 + $0x1c8] sm:$0xff]
        %v475 = vld [vmem:[%s317 + $0x1d0] sm:$0xff]
        %v476 = vld [vmem:[%s317 + $0x1d8] sm:$0xff]
        %v477 = vld [vmem:[%s317 + $0x1e0] sm:$0xff]
        %v478 = vld [vmem:[%s317 + $0x1e8] sm:$0xff]
        %v479 = vld [vmem:[%s317 + $0x1f0] sm:$0xff]
        %v480 = vld [vmem:[%s317 + $0x1f8] sm:$0xff]
        %v483 = vunpack.c.l.b16 %v415
        %v484 = vunpack.c.h.b16 %v415
        %v485 = vunpack.c.l.b16 %v416
        %v486 = vunpack.c.h.b16 %v416
        %v487 = vpack.c.b16 %v485, %v483
        %v488 = vpack.c.b16 %v486, %v484
        %v555 = vunpack.c.l.b16 %v417
        %v556 = vunpack.c.h.b16 %v417
        %v557 = vunpack.c.l.b16 %v418
        %v558 = vunpack.c.h.b16 %v418
        %v559 = vunpack.c.l.b16 %v419
        %v560 = vunpack.c.h.b16 %v419
        %v561 = vunpack.c.l.b16 %v420
        %v562 = vunpack.c.h.b16 %v420
        %v563 = vunpack.c.l.b16 %v421
        %v564 = vunpack.c.h.b16 %v421
        %v565 = vunpack.c.l.b16 %v422
        %v566 = vunpack.c.h.b16 %v422
        %v567 = vunpack.c.l.b16 %v423
        %v568 = vunpack.c.h.b16 %v423
        %v569 = vunpack.c.l.b16 %v424
        %v570 = vunpack.c.h.b16 %v424
        %v571 = vunpack.c.l.b16 %v425
        %v572 = vunpack.c.h.b16 %v425
        %v573 = vunpack.c.l.b16 %v426
        %v574 = vunpack.c.h.b16 %v426
        %v575 = vunpack.c.l.b16 %v427
        %v576 = vunpack.c.h.b16 %v427
        %v577 = vunpack.c.l.b16 %v428
        %v578 = vunpack.c.h.b16 %v428
        %v579 = vunpack.c.l.b16 %v429
        %v580 = vunpack.c.h.b16 %v429
        %v581 = vunpack.c.l.b16 %v430
        %v582 = vunpack.c.h.b16 %v430
        %v583 = vunpack.c.l.b16 %v431
        %v584 = vunpack.c.h.b16 %v431
        %v585 = vunpack.c.l.b16 %v432
        %v586 = vunpack.c.h.b16 %v432
        %v587 = vunpack.c.l.b16 %v433
        %v588 = vunpack.c.h.b16 %v433
        %v589 = vunpack.c.l.b16 %v434
        %v590 = vunpack.c.h.b16 %v434
        %v591 = vunpack.c.l.b16 %v435
        %v592 = vunpack.c.h.b16 %v435
        %v593 = vunpack.c.l.b16 %v436
        %v594 = vunpack.c.h.b16 %v436
        %v595 = vunpack.c.l.b16 %v437
        %v596 = vunpack.c.h.b16 %v437
        %v597 = vunpack.c.l.b16 %v438
        %v598 = vunpack.c.h.b16 %v438
        %v599 = vunpack.c.l.b16 %v439
        %v600 = vunpack.c.h.b16 %v439
        %v601 = vunpack.c.l.b16 %v440
        %v602 = vunpack.c.h.b16 %v440
        %v603 = vunpack.c.l.b16 %v441
        %v604 = vunpack.c.h.b16 %v441
        %v605 = vunpack.c.l.b16 %v442
        %v606 = vunpack.c.h.b16 %v442
        %v607 = vunpack.c.l.b16 %v443
        %v608 = vunpack.c.h.b16 %v443
        %v609 = vunpack.c.l.b16 %v444
        %v610 = vunpack.c.h.b16 %v444
        %v611 = vunpack.c.l.b16 %v445
        %v612 = vunpack.c.h.b16 %v445
        %v613 = vunpack.c.l.b16 %v446
        %v614 = vunpack.c.h.b16 %v446
        %v615 = vunpack.c.l.b16 %v447
        %v616 = vunpack.c.h.b16 %v447
        %v617 = vunpack.c.l.b16 %v448
        %v618 = vunpack.c.h.b16 %v448
        %v619 = vunpack.c.l.b16 %v449
        %v620 = vunpack.c.h.b16 %v449
        %v621 = vunpack.c.l.b16 %v450
        %v622 = vunpack.c.h.b16 %v450
        %v623 = vunpack.c.l.b16 %v451
        %v624 = vunpack.c.h.b16 %v451
        %v625 = vunpack.c.l.b16 %v452
        %v626 = vunpack.c.h.b16 %v452
        %v627 = vunpack.c.l.b16 %v453
        %v628 = vunpack.c.h.b16 %v453
        %v629 = vunpack.c.l.b16 %v454
        %v630 = vunpack.c.h.b16 %v454
        %v631 = vunpack.c.l.b16 %v455
        %v632 = vunpack.c.h.b16 %v455
        %v633 = vunpack.c.l.b16 %v456
        %v634 = vunpack.c.h.b16 %v456
        %v635 = vunpack.c.l.b16 %v457
        %v636 = vunpack.c.h.b16 %v457
        %v637 = vunpack.c.l.b16 %v458
        %v638 = vunpack.c.h.b16 %v458
        %v639 = vunpack.c.l.b16 %v459
        %v640 = vunpack.c.h.b16 %v459
        %v641 = vunpack.c.l.b16 %v460
        %v642 = vunpack.c.h.b16 %v460
        %v643 = vunpack.c.l.b16 %v461
        %v644 = vunpack.c.h.b16 %v461
        %v645 = vunpack.c.l.b16 %v462
        %v646 = vunpack.c.h.b16 %v462
        %v647 = vunpack.c.l.b16 %v463
        %v648 = vunpack.c.h.b16 %v463
        %v649 = vunpack.c.l.b16 %v464
        %v650 = vunpack.c.h.b16 %v464
        %v651 = vunpack.c.l.b16 %v465
        %v652 = vunpack.c.h.b16 %v465
        %v653 = vunpack.c.l.b16 %v466
        %v654 = vunpack.c.h.b16 %v466
        %v655 = vunpack.c.l.b16 %v467
        %v656 = vunpack.c.h.b16 %v467
        %v657 = vunpack.c.l.b16 %v468
        %v658 = vunpack.c.h.b16 %v468
        %v659 = vunpack.c.l.b16 %v469
        %v660 = vunpack.c.h.b16 %v469
        %v661 = vunpack.c.l.b16 %v470
        %v662 = vunpack.c.h.b16 %v470
        %v663 = vunpack.c.l.b16 %v471
        %v664 = vunpack.c.h.b16 %v471
        %v665 = vunpack.c.l.b16 %v472
        %v666 = vunpack.c.h.b16 %v472
        %v667 = vunpack.c.l.b16 %v473
        %v668 = vunpack.c.h.b16 %v473
        %v669 = vunpack.c.l.b16 %v474
        %v670 = vunpack.c.h.b16 %v474
        %v671 = vunpack.c.l.b16 %v475
        %v672 = vunpack.c.h.b16 %v475
        %v673 = vunpack.c.l.b16 %v476
        %v674 = vunpack.c.h.b16 %v476
        %v675 = vunpack.c.l.b16 %v477
        %v676 = vunpack.c.h.b16 %v477
        %v677 = vunpack.c.l.b16 %v478
        %v678 = vunpack.c.h.b16 %v478
        %v679 = vunpack.c.l.b16 %v479
        %v680 = vunpack.c.h.b16 %v479
        %v681 = vunpack.c.l.b16 %v480
        %v682 = vunpack.c.h.b16 %v480
        %v683 = vpack.c.b16 %v559, %v555
        %v684 = vpack.c.b16 %v560, %v556
        %v685 = vpack.c.b16 %v561, %v557
        %v686 = vpack.c.b16 %v562, %v558
        %v687 = vpack.c.b16 %v567, %v563
        %v688 = vpack.c.b16 %v568, %v564
        %v689 = vpack.c.b16 %v569, %v565
        %v690 = vpack.c.b16 %v570, %v566
        %v691 = vpack.c.b16 %v575, %v571
        %v692 = vpack.c.b16 %v576, %v572
        %v693 = vpack.c.b16 %v577, %v573
        %v694 = vpack.c.b16 %v578, %v574
        %v695 = vpack.c.b16 %v583, %v579
        %v696 = vpack.c.b16 %v584, %v580
        %v697 = vpack.c.b16 %v585, %v581
        %v698 = vpack.c.b16 %v586, %v582
        %v699 = vpack.c.b16 %v591, %v587
        %v700 = vpack.c.b16 %v592, %v588
        %v701 = vpack.c.b16 %v593, %v589
        %v702 = vpack.c.b16 %v594, %v590
        %v703 = vpack.c.b16 %v599, %v595
        %v704 = vpack.c.b16 %v600, %v596
        %v705 = vpack.c.b16 %v601, %v597
        %v706 = vpack.c.b16 %v602, %v598
        %v707 = vpack.c.b16 %v607, %v603
        %v708 = vpack.c.b16 %v608, %v604
        %v709 = vpack.c.b16 %v609, %v605
        %v710 = vpack.c.b16 %v610, %v606
        %v711 = vpack.c.b16 %v615, %v611
        %v712 = vpack.c.b16 %v616, %v612
        %v713 = vpack.c.b16 %v617, %v613
        %v714 = vpack.c.b16 %v618, %v614
        %v715 = vpack.c.b16 %v623, %v619
        %v716 = vpack.c.b16 %v624, %v620
        %v717 = vpack.c.b16 %v625, %v621
        %v718 = vpack.c.b16 %v626, %v622
        %v719 = vpack.c.b16 %v631, %v627
        %v720 = vpack.c.b16 %v632, %v628
        %v721 = vpack.c.b16 %v633, %v629
        %v722 = vpack.c.b16 %v634, %v630
        %v723 = vpack.c.b16 %v639, %v635
        %v724 = vpack.c.b16 %v640, %v636
        %v725 = vpack.c.b16 %v641, %v637
        %v726 = vpack.c.b16 %v642, %v638
        %v727 = vpack.c.b16 %v647, %v643
        %v728 = vpack.c.b16 %v648, %v644
        %v729 = vpack.c.b16 %v649, %v645
        %v730 = vpack.c.b16 %v650, %v646
        %v731 = vpack.c.b16 %v655, %v651
        %v732 = vpack.c.b16 %v656, %v652
        %v733 = vpack.c.b16 %v657, %v653
        %v734 = vpack.c.b16 %v658, %v654
        %v735 = vpack.c.b16 %v663, %v659
        %v736 = vpack.c.b16 %v664, %v660
        %v737 = vpack.c.b16 %v665, %v661
        %v738 = vpack.c.b16 %v666, %v662
        %v739 = vpack.c.b16 %v671, %v667
        %v740 = vpack.c.b16 %v672, %v668
        %v741 = vpack.c.b16 %v673, %v669
        %v742 = vpack.c.b16 %v674, %v670
        %v743 = vpack.c.b16 %v679, %v675
        %v744 = vpack.c.b16 %v680, %v676
        %v745 = vpack.c.b16 %v681, %v677
        %v746 = vpack.c.b16 %v682, %v678
        %811 = vmatpush.bf16.msra.mxu0 %v711
        %812 = vmatpush.bf16.msra.mxu0 %v707
        %813 = vmatpush.bf16.msra.mxu0 %v703
        %814 = vmatpush.bf16.msra.mxu0 %v699
        %815 = vmatpush.bf16.msra.mxu0 %v695
        %816 = vmatpush.bf16.msra.mxu0 %v691
        %817 = vmatpush.bf16.msra.mxu0 %v687
        %818 = vmatpush.bf16.msra.mxu0 %v683
        %819 = vmatmul.bf16.gmra.mxu0 %v487
        %v820 = vpop.f32.mrf.mxu0
        %v821 = vadd.f32 0.0, %v820
        %v822 = vpop.f32.mrf.mxu0
        %v823 = vadd.f32 0.0, %v822
        %824 = vdwg.mxu0
        %825 = vmatpush.bf16.msra.mxu0 %v743
        %826 = vmatpush.bf16.msra.mxu0 %v739
        %827 = vmatpush.bf16.msra.mxu0 %v735
        %828 = vmatpush.bf16.msra.mxu0 %v731
        %829 = vmatpush.bf16.msra.mxu0 %v727
        %830 = vmatpush.bf16.msra.mxu0 %v723
        %831 = vmatpush.bf16.msra.mxu0 %v719
        %832 = vmatpush.bf16.msra.mxu0 %v715
        %833 = vmatmul.bf16.gmra.mxu0 %v488
        %v834 = vpop.f32.mrf.mxu0
        %v835 = vadd.f32 %v821, %v834
        %v836 = vpop.f32.mrf.mxu0
        %v837 = vadd.f32 %v823, %v836
        %838 = vdwg.mxu0
        %839 = vmatpush.bf16.msra.mxu0 %v712
        %840 = vmatpush.bf16.msra.mxu0 %v708
        %841 = vmatpush.bf16.msra.mxu0 %v704
        %842 = vmatpush.bf16.msra.mxu0 %v700
        %843 = vmatpush.bf16.msra.mxu0 %v696
        %844 = vmatpush.bf16.msra.mxu0 %v692
        %845 = vmatpush.bf16.msra.mxu0 %v688
        %846 = vmatpush.bf16.msra.mxu0 %v684
        %847 = vmatmul.bf16.gmra.mxu0 %v487
        %v848 = vpop.f32.mrf.mxu0
        %v849 = vadd.f32 0.0, %v848
        %v850 = vpop.f32.mrf.mxu0
        %v851 = vadd.f32 0.0, %v850
        %852 = vdwg.mxu0
        %853 = vmatpush.bf16.msra.mxu0 %v744
        %854 = vmatpush.bf16.msra.mxu0 %v740
        %855 = vmatpush.bf16.msra.mxu0 %v736
        %856 = vmatpush.bf16.msra.mxu0 %v732
        %857 = vmatpush.bf16.msra.mxu0 %v728
        %858 = vmatpush.bf16.msra.mxu0 %v724
        %859 = vmatpush.bf16.msra.mxu0 %v720
        %860 = vmatpush.bf16.msra.mxu0 %v716
        %861 = vmatmul.bf16.gmra.mxu0 %v488
        %v862 = vpop.f32.mrf.mxu0
        %v863 = vadd.f32 %v849, %v862
        %v864 = vpop.f32.mrf.mxu0
        %v865 = vadd.f32 %v851, %v864
        %866 = vdwg.mxu0
        %867 = vmatpush.bf16.msra.mxu0 %v713
        %868 = vmatpush.bf16.msra.mxu0 %v709
        %869 = vmatpush.bf16.msra.mxu0 %v705
        %870 = vmatpush.bf16.msra.mxu0 %v701
        %871 = vmatpush.bf16.msra.mxu0 %v697
        %872 = vmatpush.bf16.msra.mxu0 %v693
        %873 = vmatpush.bf16.msra.mxu0 %v689
        %874 = vmatpush.bf16.msra.mxu0 %v685
        %875 = vmatmul.bf16.gmra.mxu0 %v487
        %v876 = vpop.f32.mrf.mxu0
        %v877 = vadd.f32 0.0, %v876
        %v878 = vpop.f32.mrf.mxu0
        %v879 = vadd.f32 0.0, %v878
        %880 = vdwg.mxu0
        %881 = vmatpush.bf16.msra.mxu0 %v745
        %882 = vmatpush.bf16.msra.mxu0 %v741
        %883 = vmatpush.bf16.msra.mxu0 %v737
        %884 = vmatpush.bf16.msra.mxu0 %v733
        %885 = vmatpush.bf16.msra.mxu0 %v729
        %886 = vmatpush.bf16.msra.mxu0 %v725
        %887 = vmatpush.bf16.msra.mxu0 %v721
        %888 = vmatpush.bf16.msra.mxu0 %v717
        %889 = vmatmul.bf16.gmra.mxu0 %v488
        %v890 = vpop.f32.mrf.mxu0
        %v891 = vadd.f32 %v877, %v890
        %v892 = vpop.f32.mrf.mxu0
        %v893 = vadd.f32 %v879, %v892
        %894 = vdwg.mxu0
        %895 = vmatpush.bf16.msra.mxu0 %v714
        %896 = vmatpush.bf16.msra.mxu0 %v710
        %897 = vmatpush.bf16.msra.mxu0 %v706
        %898 = vmatpush.bf16.msra.mxu0 %v702
        %899 = vmatpush.bf16.msra.mxu0 %v698
        %900 = vmatpush.bf16.msra.mxu0 %v694
        %901 = vmatpush.bf16.msra.mxu0 %v690
        %902 = vmatpush.bf16.msra.mxu0 %v686
        %903 = vmatmul.bf16.gmra.mxu0 %v487
        %v904 = vpop.f32.mrf.mxu0
        %v905 = vadd.f32 0.0, %v904
        %v906 = vpop.f32.mrf.mxu0
        %v907 = vadd.f32 0.0, %v906
        %908 = vdwg.mxu0
        %909 = vmatpush.bf16.msra.mxu0 %v746
        %910 = vmatpush.bf16.msra.mxu0 %v742
        %911 = vmatpush.bf16.msra.mxu0 %v738
        %912 = vmatpush.bf16.msra.mxu0 %v734
        %913 = vmatpush.bf16.msra.mxu0 %v730
        %914 = vmatpush.bf16.msra.mxu0 %v726
        %915 = vmatpush.bf16.msra.mxu0 %v722
        %916 = vmatpush.bf16.msra.mxu0 %v718
        %917 = vmatmul.bf16.gmra.mxu0 %v488
        %v918 = vpop.f32.mrf.mxu0
        %v919 = vadd.f32 %v905, %v918
        %v920 = vpop.f32.mrf.mxu0
        %v921 = vadd.f32 %v907, %v920
        %922 = vdwg.mxu0
        %v923 = vpack.c.bf16 %v863, %v835
        %v924 = vpack.c.bf16 %v919, %v891
        %v925 = vpack.c.bf16 %v865, %v837
        %v926 = vpack.c.bf16 %v921, %v893
        %927 = vst [vmem:[%s342] sm:$0xff] %v923
        %928 = vst [vmem:[%s342 + $0x8] sm:$0xff] %v924
        %929 = vst [vmem:[%s342 + $0x10] sm:$0xff] %v925
        %930 = vst [vmem:[%s342 + $0x18] sm:$0xff] %v926
        %s931 = sand.u32 %s109, 1
        %s932 = sand.u32 %s109, 1
        %s933 = smul.addr %s932, 32
        %s934 = scalar_lea.vmem [#allocation4], %s933
        // Predicated region
        $region60: #{transformer_forward.11} parent=50 // pred_check
          %p935 = pneg %p119
        $region61: #{transformer_forward.11} parent=50 // pred_check_branch
          %937 = sbr.rel (%p935) target = $region63
        $region62: #{transformer_forward.11} parent=50 // pred_region
          %s938 = smul.u32 2, %s18
          %s939 = smul.u32 4, %s19
          %s940 = smul.addr %s938, 8
          %s941 = sadd.s32 %s939, %s940
          %s942 = smul.addr %s941, 4
          %s943 = scalar_lea.vmem %s3, %s942
          // Predicated region
          $region64: #{transformer_forward.11} parent=62 // pred_check
            _
          $region65: #{transformer_forward.11} parent=62 // pred_check_branch
            %945 = sbr.rel (0) target = $region67
          $region66: #{transformer_forward.11} parent=62 // pred_region
            // Predicated region
            $region68: #{transformer_forward.11} parent=66 // pred_check
              _
            $region69: #{transformer_forward.11} parent=66 // pred_check_branch
              %947 = sbr.rel (0) target = $region71
            $region70: #{transformer_forward.11} parent=66 // pred_region
              loop: start=0, step=1, limit=1
              $region72: #{transformer_forward.11} parent=70 // loop_pre_header
                _
              $region73: #{transformer_forward.11} parent=70 // loop_header
                %s949 = sphi 0, %s953
                %p950 = scmp.ge.s32.totalorder %s949, 1
                %s954 = sphi %s934, %s934
                %s955 = sphi %s943, %s943
              $region74: #{transformer_forward.11} parent=70 // loop_header_branch
                %952 = sbr.rel (%p950) target = $region78
              $region75: #{transformer_forward.11} parent=70 // loop_body
                %v956 = vld [vmem:[%s954] sm:$0xff]
                %957 = vst [vmem:[%s955] sm:$0xff] %v956
                %v958 = vld [vmem:[%s954 + $0x8] sm:$0xff]
                %959 = vst [vmem:[%s955 + $0x8] sm:$0xff] %v958
                %v960 = vld [vmem:[%s954 + $0x10] sm:$0xff]
                %961 = vst [vmem:[%s955 + $0x20] sm:$0xff] %v960
                %v962 = vld [vmem:[%s954 + $0x18] sm:$0xff]
                %963 = vst [vmem:[%s955 + $0x28] sm:$0xff] %v962
              $region76: #{transformer_forward.11} parent=70 // loop_footer
                %s953 = sadd.s32 1, %s949
              $region77: #{transformer_forward.11} parent=70 // loop_footer_branch
                %948 = sbr.rel target = $region73
              $region78: #{transformer_forward.11} parent=70 // loop_exit
                _
            $region71: #{transformer_forward.11} parent=66 // pred_fallthru
              _
            // Predicated region
            $region79: #{transformer_forward.11} parent=66 // pred_check
              _
            $region80: #{transformer_forward.11} parent=66 // pred_check_branch
              %965 = sbr.rel target = $region82
            $region81: #{transformer_forward.11} parent=66 // pred_region
              _
            $region82: #{transformer_forward.11} parent=66 // pred_fallthru
              _
          $region67: #{transformer_forward.11} parent=62 // pred_fallthru
            _
          %966 = vnop
        $region63: #{transformer_forward.11} parent=50 // pred_fallthru
          _
      $region51: #{transformer_forward.11} parent=5 // pred_fallthru
        _
      %p967 = scmp.le.s32.totalorder 2, %s9
      // Predicated region
      $region83: #{transformer_forward.11} parent=5 // pred_check
        %p968 = pneg %p967
      $region84: #{transformer_forward.11} parent=5 // pred_check_branch
        %970 = sbr.rel (%p968) target = $region86
      $region85: #{transformer_forward.11} parent=5 // pred_region
        %s971 = ssub.s32 %s9, 2
        // Predicated region
        $region87: #{transformer_forward.11} parent=85 // pred_check
          %p972 = pneg %p125
        $region88: #{transformer_forward.11} parent=85 // pred_check_branch
          %974 = sbr.rel (%p972) target = $region90
        $region89: #{transformer_forward.11} parent=85 // pred_region
          %s975 = sand.u32 %s110, 1
          %s976 = sand.u32 %s110, 1
          %s977 = smul.addr %s976, 32
          %s978 = scalar_lea.vmem [#allocation4], %s977
        $region90: #{transformer_forward.11} parent=85 // pred_fallthru
          _
      $region86: #{transformer_forward.11} parent=5 // pred_fallthru
        _
    $region6: #{transformer_forward.11} parent=1 // loop_footer
      %s13 = sadd.s32 1, %s9
    $region7: #{transformer_forward.11} parent=1 // loop_footer_branch
      %8 = sbr.rel target = $region3
    $region8: #{transformer_forward.11} parent=1 // loop_exit
      _

// kernel: transformer_forward.14
$region0: #{transformer_forward.14}
  #allocation0 [shape = 'u32[]', space=smem, size = 0x4, offset = 0x4, fixed_abs, tag = 'smem constant byte address 0x4 - core index']
  #allocation1 [shape = 'u32[72,128]{1,0:T(1,128)}', space=vmem, size = 0x9000, scoped, tag = 'internal scratch']
  #allocation2 [shape = 'bf16[16,256]{1,0:T(8,128)(2,1)}', space=vmem, size = 0x2000, scoped, tag = 'scratch operand']
  %s0 = inlined_call_operand.vmem [shape: bf16[16,256], index: 0, kind: input, shape index: {}]
  %s1 = inlined_call_operand.vmem [shape: f32[1,256], index: 1, kind: input, shape index: {}]
  %s2 = inlined_call_operand.vmem [shape: bf16[256,512], index: 2, kind: input, shape index: {}]
  %s3 = inlined_call_operand.vmem [shape: bf16[256,512], index: 3, kind: input, shape index: {}]
  %s4 = inlined_call_operand.vmem [shape: bf16[16,512], index: 4, kind: output, shape index: {}]
  %s5 = sld [smem:[#allocation0]]
  $region30: #{transformer_forward.14} parent=0
    _
  %s7 = ssub.s32 1, %s5
  %s8 = scalar_select 0, %s7, %s5
  // Predicated region
  $region2: #{transformer_forward.14} parent=0 // pred_check
    _
  $region3: #{transformer_forward.14} parent=0 // pred_check_branch
    %10 = sbr.rel (0) target = $region5
  $region4: #{transformer_forward.14} parent=0 // pred_region
    _
  $region5: #{transformer_forward.14} parent=0 // pred_fallthru
    _
  // Predicated region
  $region6: #{transformer_forward.14} parent=0 // pred_check
    _
  $region7: #{transformer_forward.14} parent=0 // pred_check_branch
    %12 = sbr.rel (0) target = $region9
  $region8: #{transformer_forward.14} parent=0 // pred_region
    _
  $region9: #{transformer_forward.14} parent=0 // pred_fallthru
    _
  // Predicated region
  $region10: #{transformer_forward.14} parent=0 // pred_check
    _
  $region11: #{transformer_forward.14} parent=0 // pred_check_branch
    %14 = sbr.rel (0) target = $region13
  $region12: #{transformer_forward.14} parent=0 // pred_region
    _
  $region13: #{transformer_forward.14} parent=0 // pred_fallthru
    _
  // Predicated region
  $region14: #{transformer_forward.14} parent=0 // pred_check
    _
  $region15: #{transformer_forward.14} parent=0 // pred_check_branch
    %16 = sbr.rel (0) target = $region17
  $region16: #{transformer_forward.14} parent=0 // pred_region
    _
  $region17: #{transformer_forward.14} parent=0 // pred_fallthru
    _
  %p17 = scmp.eq.s32.totalorder 0, 0
  // Predicated region
  $region18: #{transformer_forward.14} parent=0 // pred_check
    %p18 = pneg %p17
  $region19: #{transformer_forward.14} parent=0 // pred_check_branch
    %20 = sbr.rel (%p18) target = $region21
  $region20: #{transformer_forward.14} parent=0 // pred_region
    %v21 = vld [vmem:[%s0] sm:$0xff]
    %v22 = vld [vmem:[%s0 + $0x8] sm:$0xff]
    %v23 = vunpack.c.l.bf16 %v21
    %v24 = vunpack.c.h.bf16 %v21
    %v25 = vunpack.c.l.bf16 %v22
    %v26 = vunpack.c.h.bf16 %v22
    %v27 = vmul.f32 %v23, %v23
    %v28 = vmul.f32 %v24, %v24
    %v29 = vmul.f32 %v25, %v25
    %v30 = vmul.f32 %v26, %v26
    %v31 = vadd.f32 %v27, %v28
    %32 = vadd.xlane.f32.xlu0 %v31
    %v33 = vpop.xlane.xlu0 %32
    %v34 = vadd.f32 %v29, %v30
    %35 = vadd.xlane.f32.xlu0 %v34
    %v36 = vpop.xlane.xlu0 %35
    %v37 = vmul.f32 %v33, 0.00390625
    %v38 = vmul.f32 %v36, 0.00390625
    %v39 = vadd.f32 %v37, 1e-06
    %v40 = vadd.f32 %v38, 1e-06
    %v41 = vrsqrt.pop %v39
    %v42 = vmul.f32 %v41, %v39
    %v43 = vmul.f32 %v42, %v41
    %v44 = vmul.f32 0.5, %v43
    %v45 = vsub.f32 1.5, %v44
    %v46 = vmul.f32 %v41, %v45
    %vm47 = vweird.f32 %v39
    %vm48 = vweird.f32 %v41
    %vm49 = vmor %vm47, %vm48
    %v50 = vsel %vm49, %v41, %v46
    %v51 = vrsqrt.pop %v40
    %v52 = vmul.f32 %v51, %v40
    %v53 = vmul.f32 %v52, %v51
    %v54 = vmul.f32 0.5, %v53
    %v55 = vsub.f32 1.5, %v54
    %v56 = vmul.f32 %v51, %v55
    %vm57 = vweird.f32 %v40
    %vm58 = vweird.f32 %v51
    %vm59 = vmor %vm57, %vm58
    %v60 = vsel %vm59, %v51, %v56
    %v61 = vmul.f32 %v23, %v50
    %v62 = vmul.f32 %v24, %v50
    %v63 = vmul.f32 %v25, %v60
    %v64 = vmul.f32 %v26, %v60
    %v65 = vld [vmem:[%s1] sm:$0x3]
    %v67 = vperm.slane %v65, 0
    %v68 = vperm.slane %v65, 1
    %v71 = vmul.f32 %v61, %v67
    %v72 = vmul.f32 %v62, %v68
    %v73 = vmul.f32 %v63, %v67
    %v74 = vmul.f32 %v64, %v68
    %v75 = vpack.c.bf16 %v72, %v71
    %v76 = vpack.c.bf16 %v74, %v73
    %77 = vst [vmem:[#allocation2] sm:$0xff] %v75
    %78 = vst [vmem:[#allocation2 + $0x8] sm:$0xff] %v76
  $region21: #{transformer_forward.14} parent=0 // pred_fallthru
    _
  %v79 = vld [vmem:[#allocation2] sm:$0xff]
  %v80 = vld [vmem:[#allocation2 + $0x8] sm:$0xff]
  %v81 = vld [vmem:[%s2] sm:$0xff]
  %v82 = vld [vmem:[%s2 + $0x8] sm:$0xff]
  %v83 = vld [vmem:[%s2 + $0x10] sm:$0xff]
  %v84 = vld [vmem:[%s2 + $0x18] sm:$0xff]
  %v85 = vld [vmem:[%s2 + $0x20] sm:$0xff]
  %v86 = vld [vmem:[%s2 + $0x28] sm:$0xff]
  %v87 = vld [vmem:[%s2 + $0x30] sm:$0xff]
  %v88 = vld [vmem:[%s2 + $0x38] sm:$0xff]
  %v89 = vld [vmem:[%s2 + $0x40] sm:$0xff]
  %v90 = vld [vmem:[%s2 + $0x48] sm:$0xff]
  %v91 = vld [vmem:[%s2 + $0x50] sm:$0xff]
  %v92 = vld [vmem:[%s2 + $0x58] sm:$0xff]
  %v93 = vld [vmem:[%s2 + $0x60] sm:$0xff]
  %v94 = vld [vmem:[%s2 + $0x68] sm:$0xff]
  %v95 = vld [vmem:[%s2 + $0x70] sm:$0xff]
  %v96 = vld [vmem:[%s2 + $0x78] sm:$0xff]
  %v97 = vld [vmem:[%s2 + $0x80] sm:$0xff]
  %v98 = vld [vmem:[%s2 + $0x88] sm:$0xff]
  %v99 = vld [vmem:[%s2 + $0x90] sm:$0xff]
  %v100 = vld [vmem:[%s2 + $0x98] sm:$0xff]
  %v101 = vld [vmem:[%s2 + $0xa0] sm:$0xff]
  %v102 = vld [vmem:[%s2 + $0xa8] sm:$0xff]
  %v103 = vld [vmem:[%s2 + $0xb0] sm:$0xff]
  %v104 = vld [vmem:[%s2 + $0xb8] sm:$0xff]
  %v105 = vld [vmem:[%s2 + $0xc0] sm:$0xff]
  %v106 = vld [vmem:[%s2 + $0xc8] sm:$0xff]
  %v107 = vld [vmem:[%s2 + $0xd0] sm:$0xff]
  %v108 = vld [vmem:[%s2 + $0xd8] sm:$0xff]
  %v109 = vld [vmem:[%s2 + $0xe0] sm:$0xff]
  %v110 = vld [vmem:[%s2 + $0xe8] sm:$0xff]
  %v111 = vld [vmem:[%s2 + $0xf0] sm:$0xff]
  %v112 = vld [vmem:[%s2 + $0xf8] sm:$0xff]
  %v113 = vld [vmem:[%s2 + $0x100] sm:$0xff]
  %v114 = vld [vmem:[%s2 + $0x108] sm:$0xff]
  %v115 = vld [vmem:[%s2 + $0x110] sm:$0xff]
  %v116 = vld [vmem:[%s2 + $0x118] sm:$0xff]
  %v117 = vld [vmem:[%s2 + $0x120] sm:$0xff]
  %v118 = vld [vmem:[%s2 + $0x128] sm:$0xff]
  %v119 = vld [vmem:[%s2 + $0x130] sm:$0xff]
  %v120 = vld [vmem:[%s2 + $0x138] sm:$0xff]
  %v121 = vld [vmem:[%s2 + $0x140] sm:$0xff]
  %v122 = vld [vmem:[%s2 + $0x148] sm:$0xff]
  %v123 = vld [vmem:[%s2 + $0x150] sm:$0xff]
  %v124 = vld [vmem:[%s2 + $0x158] sm:$0xff]
  %v125 = vld [vmem:[%s2 + $0x160] sm:$0xff]
  %v126 = vld [vmem:[%s2 + $0x168] sm:$0xff]
  %v127 = vld [vmem:[%s2 + $0x170] sm:$0xff]
  %v128 = vld [vmem:[%s2 + $0x178] sm:$0xff]
  %v129 = vld [vmem:[%s2 + $0x180] sm:$0xff]
  %v130 = vld [vmem:[%s2 + $0x188] sm:$0xff]
  %v131 = vld [vmem:[%s2 + $0x190] sm:$0xff]
  %v132 = vld [vmem:[%s2 + $0x198] sm:$0xff]
  %v133 = vld [vmem:[%s2 + $0x1a0] sm:$0xff]
  %v134 = vld [vmem:[%s2 + $0x1a8] sm:$0xff]
  %v135 = vld [vmem:[%s2 + $0x1b0] sm:$0xff]
  %v136 = vld [vmem:[%s2 + $0x1b8] sm:$0xff]
  %v137 = vld [vmem:[%s2 + $0x1c0] sm:$0xff]
  %v138 = vld [vmem:[%s2 + $0x1c8] sm:$0xff]
  %v139 = vld [vmem:[%s2 + $0x1d0] sm:$0xff]
  %v140 = vld [vmem:[%s2 + $0x1d8] sm:$0xff]
  %v141 = vld [vmem:[%s2 + $0x1e0] sm:$0xff]
  %v142 = vld [vmem:[%s2 + $0x1e8] sm:$0xff]
  %v143 = vld [vmem:[%s2 + $0x1f0] sm:$0xff]
  %v144 = vld [vmem:[%s2 + $0x1f8] sm:$0xff]
  %v147 = vunpack.c.l.b16 %v79
  %v148 = vunpack.c.h.b16 %v79
  %v149 = vunpack.c.l.b16 %v80
  %v150 = vunpack.c.h.b16 %v80
  %v151 = vpack.c.b16 %v149, %v147
  %v152 = vpack.c.b16 %v150, %v148
  %v219 = vunpack.c.l.b16 %v81
  %v220 = vunpack.c.h.b16 %v81
  %v221 = vunpack.c.l.b16 %v82
  %v222 = vunpack.c.h.b16 %v82
  %v223 = vunpack.c.l.b16 %v83
  %v224 = vunpack.c.h.b16 %v83
  %v225 = vunpack.c.l.b16 %v84
  %v226 = vunpack.c.h.b16 %v84
  %v227 = vunpack.c.l.b16 %v85
  %v228 = vunpack.c.h.b16 %v85
  %v229 = vunpack.c.l.b16 %v86
  %v230 = vunpack.c.h.b16 %v86
  %v231 = vunpack.c.l.b16 %v87
  %v232 = vunpack.c.h.b16 %v87
  %v233 = vunpack.c.l.b16 %v88
  %v234 = vunpack.c.h.b16 %v88
  %v235 = vunpack.c.l.b16 %v89
  %v236 = vunpack.c.h.b16 %v89
  %v237 = vunpack.c.l.b16 %v90
  %v238 = vunpack.c.h.b16 %v90
  %v239 = vunpack.c.l.b16 %v91
  %v240 = vunpack.c.h.b16 %v91
  %v241 = vunpack.c.l.b16 %v92
  %v242 = vunpack.c.h.b16 %v92
  %v243 = vunpack.c.l.b16 %v93
  %v244 = vunpack.c.h.b16 %v93
  %v245 = vunpack.c.l.b16 %v94
  %v246 = vunpack.c.h.b16 %v94
  %v247 = vunpack.c.l.b16 %v95
  %v248 = vunpack.c.h.b16 %v95
  %v249 = vunpack.c.l.b16 %v96
  %v250 = vunpack.c.h.b16 %v96
  %v251 = vunpack.c.l.b16 %v97
  %v252 = vunpack.c.h.b16 %v97
  %v253 = vunpack.c.l.b16 %v98
  %v254 = vunpack.c.h.b16 %v98
  %v255 = vunpack.c.l.b16 %v99
  %v256 = vunpack.c.h.b16 %v99
  %v257 = vunpack.c.l.b16 %v100
  %v258 = vunpack.c.h.b16 %v100
  %v259 = vunpack.c.l.b16 %v101
  %v260 = vunpack.c.h.b16 %v101
  %v261 = vunpack.c.l.b16 %v102
  %v262 = vunpack.c.h.b16 %v102
  %v263 = vunpack.c.l.b16 %v103
  %v264 = vunpack.c.h.b16 %v103
  %v265 = vunpack.c.l.b16 %v104
  %v266 = vunpack.c.h.b16 %v104
  %v267 = vunpack.c.l.b16 %v105
  %v268 = vunpack.c.h.b16 %v105
  %v269 = vunpack.c.l.b16 %v106
  %v270 = vunpack.c.h.b16 %v106
  %v271 = vunpack.c.l.b16 %v107
  %v272 = vunpack.c.h.b16 %v107
  %v273 = vunpack.c.l.b16 %v108
  %v274 = vunpack.c.h.b16 %v108
  %v275 = vunpack.c.l.b16 %v109
  %v276 = vunpack.c.h.b16 %v109
  %v277 = vunpack.c.l.b16 %v110
  %v278 = vunpack.c.h.b16 %v110
  %v279 = vunpack.c.l.b16 %v111
  %v280 = vunpack.c.h.b16 %v111
  %v281 = vunpack.c.l.b16 %v112
  %v282 = vunpack.c.h.b16 %v112
  %v283 = vunpack.c.l.b16 %v113
  %v284 = vunpack.c.h.b16 %v113
  %v285 = vunpack.c.l.b16 %v114
  %v286 = vunpack.c.h.b16 %v114
  %v287 = vunpack.c.l.b16 %v115
  %v288 = vunpack.c.h.b16 %v115
  %v289 = vunpack.c.l.b16 %v116
  %v290 = vunpack.c.h.b16 %v116
  %v291 = vunpack.c.l.b16 %v117
  %v292 = vunpack.c.h.b16 %v117
  %v293 = vunpack.c.l.b16 %v118
  %v294 = vunpack.c.h.b16 %v118
  %v295 = vunpack.c.l.b16 %v119
  %v296 = vunpack.c.h.b16 %v119
  %v297 = vunpack.c.l.b16 %v120
  %v298 = vunpack.c.h.b16 %v120
  %v299 = vunpack.c.l.b16 %v121
  %v300 = vunpack.c.h.b16 %v121
  %v301 = vunpack.c.l.b16 %v122
  %v302 = vunpack.c.h.b16 %v122
  %v303 = vunpack.c.l.b16 %v123
  %v304 = vunpack.c.h.b16 %v123
  %v305 = vunpack.c.l.b16 %v124
  %v306 = vunpack.c.h.b16 %v124
  %v307 = vunpack.c.l.b16 %v125
  %v308 = vunpack.c.h.b16 %v125
  %v309 = vunpack.c.l.b16 %v126
  %v310 = vunpack.c.h.b16 %v126
  %v311 = vunpack.c.l.b16 %v127
  %v312 = vunpack.c.h.b16 %v127
  %v313 = vunpack.c.l.b16 %v128
  %v314 = vunpack.c.h.b16 %v128
  %v315 = vunpack.c.l.b16 %v129
  %v316 = vunpack.c.h.b16 %v129
  %v317 = vunpack.c.l.b16 %v130
  %v318 = vunpack.c.h.b16 %v130
  %v319 = vunpack.c.l.b16 %v131
  %v320 = vunpack.c.h.b16 %v131
  %v321 = vunpack.c.l.b16 %v132
  %v322 = vunpack.c.h.b16 %v132
  %v323 = vunpack.c.l.b16 %v133
  %v324 = vunpack.c.h.b16 %v133
  %v325 = vunpack.c.l.b16 %v134
  %v326 = vunpack.c.h.b16 %v134
  %v327 = vunpack.c.l.b16 %v135
  %v328 = vunpack.c.h.b16 %v135
  %v329 = vunpack.c.l.b16 %v136
  %v330 = vunpack.c.h.b16 %v136
  %v331 = vunpack.c.l.b16 %v137
  %v332 = vunpack.c.h.b16 %v137
  %v333 = vunpack.c.l.b16 %v138
  %v334 = vunpack.c.h.b16 %v138
  %v335 = vunpack.c.l.b16 %v139
  %v336 = vunpack.c.h.b16 %v139
  %v337 = vunpack.c.l.b16 %v140
  %v338 = vunpack.c.h.b16 %v140
  %v339 = vunpack.c.l.b16 %v141
  %v340 = vunpack.c.h.b16 %v141
  %v341 = vunpack.c.l.b16 %v142
  %v342 = vunpack.c.h.b16 %v142
  %v343 = vunpack.c.l.b16 %v143
  %v344 = vunpack.c.h.b16 %v143
  %v345 = vunpack.c.l.b16 %v144
  %v346 = vunpack.c.h.b16 %v144
  %v347 = vpack.c.b16 %v223, %v219
  %v348 = vpack.c.b16 %v224, %v220
  %v349 = vpack.c.b16 %v225, %v221
  %v350 = vpack.c.b16 %v226, %v222
  %v351 = vpack.c.b16 %v231, %v227
  %v352 = vpack.c.b16 %v232, %v228
  %v353 = vpack.c.b16 %v233, %v229
  %v354 = vpack.c.b16 %v234, %v230
  %v355 = vpack.c.b16 %v239, %v235
  %v356 = vpack.c.b16 %v240, %v236
  %v357 = vpack.c.b16 %v241, %v237
  %v358 = vpack.c.b16 %v242, %v238
  %v359 = vpack.c.b16 %v247, %v243
  %v360 = vpack.c.b16 %v248, %v244
  %v361 = vpack.c.b16 %v249, %v245
  %v362 = vpack.c.b16 %v250, %v246
  %v363 = vpack.c.b16 %v255, %v251
  %v364 = vpack.c.b16 %v256, %v252
  %v365 = vpack.c.b16 %v257, %v253
  %v366 = vpack.c.b16 %v258, %v254
  %v367 = vpack.c.b16 %v263, %v259
  %v368 = vpack.c.b16 %v264, %v260
  %v369 = vpack.c.b16 %v265, %v261
  %v370 = vpack.c.b16 %v266, %v262
  %v371 = vpack.c.b16 %v271, %v267
  %v372 = vpack.c.b16 %v272, %v268
  %v373 = vpack.c.b16 %v273, %v269
  %v374 = vpack.c.b16 %v274, %v270
  %v375 = vpack.c.b16 %v279, %v275
  %v376 = vpack.c.b16 %v280, %v276
  %v377 = vpack.c.b16 %v281, %v277
  %v378 = vpack.c.b16 %v282, %v278
  %v379 = vpack.c.b16 %v287, %v283
  %v380 = vpack.c.b16 %v288, %v284
  %v381 = vpack.c.b16 %v289, %v285
  %v382 = vpack.c.b16 %v290, %v286
  %v383 = vpack.c.b16 %v295, %v291
  %v384 = vpack.c.b16 %v296, %v292
  %v385 = vpack.c.b16 %v297, %v293
  %v386 = vpack.c.b16 %v298, %v294
  %v387 = vpack.c.b16 %v303, %v299
  %v388 = vpack.c.b16 %v304, %v300
  %v389 = vpack.c.b16 %v305, %v301
  %v390 = vpack.c.b16 %v306, %v302
  %v391 = vpack.c.b16 %v311, %v307
  %v392 = vpack.c.b16 %v312, %v308
  %v393 = vpack.c.b16 %v313, %v309
  %v394 = vpack.c.b16 %v314, %v310
  %v395 = vpack.c.b16 %v319, %v315
  %v396 = vpack.c.b16 %v320, %v316
  %v397 = vpack.c.b16 %v321, %v317
  %v398 = vpack.c.b16 %v322, %v318
  %v399 = vpack.c.b16 %v327, %v323
  %v400 = vpack.c.b16 %v328, %v324
  %v401 = vpack.c.b16 %v329, %v325
  %v402 = vpack.c.b16 %v330, %v326
  %v403 = vpack.c.b16 %v335, %v331
  %v404 = vpack.c.b16 %v336, %v332
  %v405 = vpack.c.b16 %v337, %v333
  %v406 = vpack.c.b16 %v338, %v334
  %v407 = vpack.c.b16 %v343, %v339
  %v408 = vpack.c.b16 %v344, %v340
  %v409 = vpack.c.b16 %v345, %v341
  %v410 = vpack.c.b16 %v346, %v342
  %475 = vmatpush.bf16.msra.mxu0 %v375
  %476 = vmatpush.bf16.msra.mxu0 %v371
  %477 = vmatpush.bf16.msra.mxu0 %v367
  %478 = vmatpush.bf16.msra.mxu0 %v363
  %479 = vmatpush.bf16.msra.mxu0 %v359
  %480 = vmatpush.bf16.msra.mxu0 %v355
  %481 = vmatpush.bf16.msra.mxu0 %v351
  %482 = vmatpush.bf16.msra.mxu0 %v347
  %483 = vmatmul.bf16.gmra.mxu0 %v151
  %v484 = vpop.f32.mrf.mxu0
  %v485 = vadd.f32 0.0, %v484
  %v486 = vpop.f32.mrf.mxu0
  %v487 = vadd.f32 0.0, %v486
  %488 = vdwg.mxu0
  %489 = vmatpush.bf16.msra.mxu0 %v407
  %490 = vmatpush.bf16.msra.mxu0 %v403
  %491 = vmatpush.bf16.msra.mxu0 %v399
  %492 = vmatpush.bf16.msra.mxu0 %v395
  %493 = vmatpush.bf16.msra.mxu0 %v391
  %494 = vmatpush.bf16.msra.mxu0 %v387
  %495 = vmatpush.bf16.msra.mxu0 %v383
  %496 = vmatpush.bf16.msra.mxu0 %v379
  %497 = vmatmul.bf16.gmra.mxu0 %v152
  %v498 = vpop.f32.mrf.mxu0
  %v499 = vadd.f32 %v485, %v498
  %v500 = vpop.f32.mrf.mxu0
  %v501 = vadd.f32 %v487, %v500
  %502 = vdwg.mxu0
  %503 = vmatpush.bf16.msra.mxu0 %v376
  %504 = vmatpush.bf16.msra.mxu0 %v372
  %505 = vmatpush.bf16.msra.mxu0 %v368
  %506 = vmatpush.bf16.msra.mxu0 %v364
  %507 = vmatpush.bf16.msra.mxu0 %v360
  %508 = vmatpush.bf16.msra.mxu0 %v356
  %509 = vmatpush.bf16.msra.mxu0 %v352
  %510 = vmatpush.bf16.msra.mxu0 %v348
  %511 = vmatmul.bf16.gmra.mxu0 %v151
  %v512 = vpop.f32.mrf.mxu0
  %v513 = vadd.f32 0.0, %v512
  %v514 = vpop.f32.mrf.mxu0
  %v515 = vadd.f32 0.0, %v514
  %516 = vdwg.mxu0
  %517 = vmatpush.bf16.msra.mxu0 %v408
  %518 = vmatpush.bf16.msra.mxu0 %v404
  %519 = vmatpush.bf16.msra.mxu0 %v400
  %520 = vmatpush.bf16.msra.mxu0 %v396
  %521 = vmatpush.bf16.msra.mxu0 %v392
  %522 = vmatpush.bf16.msra.mxu0 %v388
  %523 = vmatpush.bf16.msra.mxu0 %v384
  %524 = vmatpush.bf16.msra.mxu0 %v380
  %525 = vmatmul.bf16.gmra.mxu0 %v152
  %v526 = vpop.f32.mrf.mxu0
  %v527 = vadd.f32 %v513, %v526
  %v528 = vpop.f32.mrf.mxu0
  %v529 = vadd.f32 %v515, %v528
  %530 = vdwg.mxu0
  %531 = vmatpush.bf16.msra.mxu0 %v377
  %532 = vmatpush.bf16.msra.mxu0 %v373
  %533 = vmatpush.bf16.msra.mxu0 %v369
  %534 = vmatpush.bf16.msra.mxu0 %v365
  %535 = vmatpush.bf16.msra.mxu0 %v361
  %536 = vmatpush.bf16.msra.mxu0 %v357
  %537 = vmatpush.bf16.msra.mxu0 %v353
  %538 = vmatpush.bf16.msra.mxu0 %v349
  %539 = vmatmul.bf16.gmra.mxu0 %v151
  %v540 = vpop.f32.mrf.mxu0
  %v541 = vadd.f32 0.0, %v540
  %v542 = vpop.f32.mrf.mxu0
  %v543 = vadd.f32 0.0, %v542
  %544 = vdwg.mxu0
  %545 = vmatpush.bf16.msra.mxu0 %v409
  %546 = vmatpush.bf16.msra.mxu0 %v405
  %547 = vmatpush.bf16.msra.mxu0 %v401
  %548 = vmatpush.bf16.msra.mxu0 %v397
  %549 = vmatpush.bf16.msra.mxu0 %v393
  %550 = vmatpush.bf16.msra.mxu0 %v389
  %551 = vmatpush.bf16.msra.mxu0 %v385
  %552 = vmatpush.bf16.msra.mxu0 %v381
  %553 = vmatmul.bf16.gmra.mxu0 %v152
  %v554 = vpop.f32.mrf.mxu0
  %v555 = vadd.f32 %v541, %v554
  %v556 = vpop.f32.mrf.mxu0
  %v557 = vadd.f32 %v543, %v556
  %558 = vdwg.mxu0
  %559 = vmatpush.bf16.msra.mxu0 %v378
  %560 = vmatpush.bf16.msra.mxu0 %v374
  %561 = vmatpush.bf16.msra.mxu0 %v370
  %562 = vmatpush.bf16.msra.mxu0 %v366
  %563 = vmatpush.bf16.msra.mxu0 %v362
  %564 = vmatpush.bf16.msra.mxu0 %v358
  %565 = vmatpush.bf16.msra.mxu0 %v354
  %566 = vmatpush.bf16.msra.mxu0 %v350
  %567 = vmatmul.bf16.gmra.mxu0 %v151
  %v568 = vpop.f32.mrf.mxu0
  %v569 = vadd.f32 0.0, %v568
  %v570 = vpop.f32.mrf.mxu0
  %v571 = vadd.f32 0.0, %v570
  %572 = vdwg.mxu0
  %573 = vmatpush.bf16.msra.mxu0 %v410
  %574 = vmatpush.bf16.msra.mxu0 %v406
  %575 = vmatpush.bf16.msra.mxu0 %v402
  %576 = vmatpush.bf16.msra.mxu0 %v398
  %577 = vmatpush.bf16.msra.mxu0 %v394
  %578 = vmatpush.bf16.msra.mxu0 %v390
  %579 = vmatpush.bf16.msra.mxu0 %v386
  %580 = vmatpush.bf16.msra.mxu0 %v382
  %581 = vmatmul.bf16.gmra.mxu0 %v152
  %v582 = vpop.f32.mrf.mxu0
  %v583 = vadd.f32 %v569, %v582
  %v584 = vpop.f32.mrf.mxu0
  %v585 = vadd.f32 %v571, %v584
  %586 = vdwg.mxu0
  %v587 = vld [vmem:[%s3] sm:$0xff]
  %v588 = vld [vmem:[%s3 + $0x8] sm:$0xff]
  %v589 = vld [vmem:[%s3 + $0x10] sm:$0xff]
  %v590 = vld [vmem:[%s3 + $0x18] sm:$0xff]
  %v591 = vld [vmem:[%s3 + $0x20] sm:$0xff]
  %v592 = vld [vmem:[%s3 + $0x28] sm:$0xff]
  %v593 = vld [vmem:[%s3 + $0x30] sm:$0xff]
  %v594 = vld [vmem:[%s3 + $0x38] sm:$0xff]
  %v595 = vld [vmem:[%s3 + $0x40] sm:$0xff]
  %v596 = vld [vmem:[%s3 + $0x48] sm:$0xff]
  %v597 = vld [vmem:[%s3 + $0x50] sm:$0xff]
  %v598 = vld [vmem:[%s3 + $0x58] sm:$0xff]
  %v599 = vld [vmem:[%s3 + $0x60] sm:$0xff]
  %v600 = vld [vmem:[%s3 + $0x68] sm:$0xff]
  %v601 = vld [vmem:[%s3 + $0x70] sm:$0xff]
  %v602 = vld [vmem:[%s3 + $0x78] sm:$0xff]
  %v603 = vld [vmem:[%s3 + $0x80] sm:$0xff]
  %v604 = vld [vmem:[%s3 + $0x88] sm:$0xff]
  %v605 = vld [vmem:[%s3 + $0x90] sm:$0xff]
  %v606 = vld [vmem:[%s3 + $0x98] sm:$0xff]
  %v607 = vld [vmem:[%s3 + $0xa0] sm:$0xff]
  %v608 = vld [vmem:[%s3 + $0xa8] sm:$0xff]
  %v609 = vld [vmem:[%s3 + $0xb0] sm:$0xff]
  %v610 = vld [vmem:[%s3 + $0xb8] sm:$0xff]
  %v611 = vld [vmem:[%s3 + $0xc0] sm:$0xff]
  %v612 = vld [vmem:[%s3 + $0xc8] sm:$0xff]
  %v613 = vld [vmem:[%s3 + $0xd0] sm:$0xff]
  %v614 = vld [vmem:[%s3 + $0xd8] sm:$0xff]
  %v615 = vld [vmem:[%s3 + $0xe0] sm:$0xff]
  %v616 = vld [vmem:[%s3 + $0xe8] sm:$0xff]
  %v617 = vld [vmem:[%s3 + $0xf0] sm:$0xff]
  %v618 = vld [vmem:[%s3 + $0xf8] sm:$0xff]
  %v619 = vld [vmem:[%s3 + $0x100] sm:$0xff]
  %v620 = vld [vmem:[%s3 + $0x108] sm:$0xff]
  %v621 = vld [vmem:[%s3 + $0x110] sm:$0xff]
  %v622 = vld [vmem:[%s3 + $0x118] sm:$0xff]
  %v623 = vld [vmem:[%s3 + $0x120] sm:$0xff]
  %v624 = vld [vmem:[%s3 + $0x128] sm:$0xff]
  %v625 = vld [vmem:[%s3 + $0x130] sm:$0xff]
  %v626 = vld [vmem:[%s3 + $0x138] sm:$0xff]
  %v627 = vld [vmem:[%s3 + $0x140] sm:$0xff]
  %v628 = vld [vmem:[%s3 + $0x148] sm:$0xff]
  %v629 = vld [vmem:[%s3 + $0x150] sm:$0xff]
  %v630 = vld [vmem:[%s3 + $0x158] sm:$0xff]
  %v631 = vld [vmem:[%s3 + $0x160] sm:$0xff]
  %v632 = vld [vmem:[%s3 + $0x168] sm:$0xff]
  %v633 = vld [vmem:[%s3 + $0x170] sm:$0xff]
  %v634 = vld [vmem:[%s3 + $0x178] sm:$0xff]
  %v635 = vld [vmem:[%s3 + $0x180] sm:$0xff]
  %v636 = vld [vmem:[%s3 + $0x188] sm:$0xff]
  %v637 = vld [vmem:[%s3 + $0x190] sm:$0xff]
  %v638 = vld [vmem:[%s3 + $0x198] sm:$0xff]
  %v639 = vld [vmem:[%s3 + $0x1a0] sm:$0xff]
  %v640 = vld [vmem:[%s3 + $0x1a8] sm:$0xff]
  %v641 = vld [vmem:[%s3 + $0x1b0] sm:$0xff]
  %v642 = vld [vmem:[%s3 + $0x1b8] sm:$0xff]
  %v643 = vld [vmem:[%s3 + $0x1c0] sm:$0xff]
  %v644 = vld [vmem:[%s3 + $0x1c8] sm:$0xff]
  %v645 = vld [vmem:[%s3 + $0x1d0] sm:$0xff]
  %v646 = vld [vmem:[%s3 + $0x1d8] sm:$0xff]
  %v647 = vld [vmem:[%s3 + $0x1e0] sm:$0xff]
  %v648 = vld [vmem:[%s3 + $0x1e8] sm:$0xff]
  %v649 = vld [vmem:[%s3 + $0x1f0] sm:$0xff]
  %v650 = vld [vmem:[%s3 + $0x1f8] sm:$0xff]
  %v715 = vunpack.c.l.b16 %v587
  %v716 = vunpack.c.h.b16 %v587
  %v717 = vunpack.c.l.b16 %v588
  %v718 = vunpack.c.h.b16 %v588
  %v719 = vunpack.c.l.b16 %v589
  %v720 = vunpack.c.h.b16 %v589
  %v721 = vunpack.c.l.b16 %v590
  %v722 = vunpack.c.h.b16 %v590
  %v723 = vunpack.c.l.b16 %v591
  %v724 = vunpack.c.h.b16 %v591
  %v725 = vunpack.c.l.b16 %v592
  %v726 = vunpack.c.h.b16 %v592
  %v727 = vunpack.c.l.b16 %v593
  %v728 = vunpack.c.h.b16 %v593
  %v729 = vunpack.c.l.b16 %v594
  %v730 = vunpack.c.h.b16 %v594
  %v731 = vunpack.c.l.b16 %v595
  %v732 = vunpack.c.h.b16 %v595
  %v733 = vunpack.c.l.b16 %v596
  %v734 = vunpack.c.h.b16 %v596
  %v735 = vunpack.c.l.b16 %v597
  %v736 = vunpack.c.h.b16 %v597
  %v737 = vunpack.c.l.b16 %v598
  %v738 = vunpack.c.h.b16 %v598
  %v739 = vunpack.c.l.b16 %v599
  %v740 = vunpack.c.h.b16 %v599
  %v741 = vunpack.c.l.b16 %v600
  %v742 = vunpack.c.h.b16 %v600
  %v743 = vunpack.c.l.b16 %v601
  %v744 = vunpack.c.h.b16 %v601
  %v745 = vunpack.c.l.b16 %v602
  %v746 = vunpack.c.h.b16 %v602
  %v747 = vunpack.c.l.b16 %v603
  %v748 = vunpack.c.h.b16 %v603
  %v749 = vunpack.c.l.b16 %v604
  %v750 = vunpack.c.h.b16 %v604
  %v751 = vunpack.c.l.b16 %v605
  %v752 = vunpack.c.h.b16 %v605
  %v753 = vunpack.c.l.b16 %v606
  %v754 = vunpack.c.h.b16 %v606
  %v755 = vunpack.c.l.b16 %v607
  %v756 = vunpack.c.h.b16 %v607
  %v757 = vunpack.c.l.b16 %v608
  %v758 = vunpack.c.h.b16 %v608
  %v759 = vunpack.c.l.b16 %v609
  %v760 = vunpack.c.h.b16 %v609
  %v761 = vunpack.c.l.b16 %v610
  %v762 = vunpack.c.h.b16 %v610
  %v763 = vunpack.c.l.b16 %v611
  %v764 = vunpack.c.h.b16 %v611
  %v765 = vunpack.c.l.b16 %v612
  %v766 = vunpack.c.h.b16 %v612
  %v767 = vunpack.c.l.b16 %v613
  %v768 = vunpack.c.h.b16 %v613
  %v769 = vunpack.c.l.b16 %v614
  %v770 = vunpack.c.h.b16 %v614
  %v771 = vunpack.c.l.b16 %v615
  %v772 = vunpack.c.h.b16 %v615
  %v773 = vunpack.c.l.b16 %v616
  %v774 = vunpack.c.h.b16 %v616
  %v775 = vunpack.c.l.b16 %v617
  %v776 = vunpack.c.h.b16 %v617
  %v777 = vunpack.c.l.b16 %v618
  %v778 = vunpack.c.h.b16 %v618
  %v779 = vunpack.c.l.b16 %v619
  %v780 = vunpack.c.h.b16 %v619
  %v781 = vunpack.c.l.b16 %v620
  %v782 = vunpack.c.h.b16 %v620
  %v783 = vunpack.c.l.b16 %v621
  %v784 = vunpack.c.h.b16 %v621
  %v785 = vunpack.c.l.b16 %v622
  %v786 = vunpack.c.h.b16 %v622
  %v787 = vunpack.c.l.b16 %v623
  %v788 = vunpack.c.h.b16 %v623
  %v789 = vunpack.c.l.b16 %v624
  %v790 = vunpack.c.h.b16 %v624
  %v791 = vunpack.c.l.b16 %v625
  %v792 = vunpack.c.h.b16 %v625
  %v793 = vunpack.c.l.b16 %v626
  %v794 = vunpack.c.h.b16 %v626
  %v795 = vunpack.c.l.b16 %v627
  %v796 = vunpack.c.h.b16 %v627
  %v797 = vunpack.c.l.b16 %v628
  %v798 = vunpack.c.h.b16 %v628
  %v799 = vunpack.c.l.b16 %v629
  %v800 = vunpack.c.h.b16 %v629
  %v801 = vunpack.c.l.b16 %v630
  %v802 = vunpack.c.h.b16 %v630
  %v803 = vunpack.c.l.b16 %v631
  %v804 = vunpack.c.h.b16 %v631
  %v805 = vunpack.c.l.b16 %v632
  %v806 = vunpack.c.h.b16 %v632
  %v807 = vunpack.c.l.b16 %v633
  %v808 = vunpack.c.h.b16 %v633
  %v809 = vunpack.c.l.b16 %v634
  %v810 = vunpack.c.h.b16 %v634
  %v811 = vunpack.c.l.b16 %v635
  %v812 = vunpack.c.h.b16 %v635
  %v813 = vunpack.c.l.b16 %v636
  %v814 = vunpack.c.h.b16 %v636
  %v815 = vunpack.c.l.b16 %v637
  %v816 = vunpack.c.h.b16 %v637
  %v817 = vunpack.c.l.b16 %v638
  %v818 = vunpack.c.h.b16 %v638
  %v819 = vunpack.c.l.b16 %v639
  %v820 = vunpack.c.h.b16 %v639
  %v821 = vunpack.c.l.b16 %v640
  %v822 = vunpack.c.h.b16 %v640
  %v823 = vunpack.c.l.b16 %v641
  %v824 = vunpack.c.h.b16 %v641
  %v825 = vunpack.c.l.b16 %v642
  %v826 = vunpack.c.h.b16 %v642
  %v827 = vunpack.c.l.b16 %v643
  %v828 = vunpack.c.h.b16 %v643
  %v829 = vunpack.c.l.b16 %v644
  %v830 = vunpack.c.h.b16 %v644
  %v831 = vunpack.c.l.b16 %v645
  %v832 = vunpack.c.h.b16 %v645
  %v833 = vunpack.c.l.b16 %v646
  %v834 = vunpack.c.h.b16 %v646
  %v835 = vunpack.c.l.b16 %v647
  %v836 = vunpack.c.h.b16 %v647
  %v837 = vunpack.c.l.b16 %v648
  %v838 = vunpack.c.h.b16 %v648
  %v839 = vunpack.c.l.b16 %v649
  %v840 = vunpack.c.h.b16 %v649
  %v841 = vunpack.c.l.b16 %v650
  %v842 = vunpack.c.h.b16 %v650
  %v843 = vpack.c.b16 %v719, %v715
  %v844 = vpack.c.b16 %v720, %v716
  %v845 = vpack.c.b16 %v721, %v717
  %v846 = vpack.c.b16 %v722, %v718
  %v847 = vpack.c.b16 %v727, %v723
  %v848 = vpack.c.b16 %v728, %v724
  %v849 = vpack.c.b16 %v729, %v725
  %v850 = vpack.c.b16 %v730, %v726
  %v851 = vpack.c.b16 %v735, %v731
  %v852 = vpack.c.b16 %v736, %v732
  %v853 = vpack.c.b16 %v737, %v733
  %v854 = vpack.c.b16 %v738, %v734
  %v855 = vpack.c.b16 %v743, %v739
  %v856 = vpack.c.b16 %v744, %v740
  %v857 = vpack.c.b16 %v745, %v741
  %v858 = vpack.c.b16 %v746, %v742
  %v859 = vpack.c.b16 %v751, %v747
  %v860 = vpack.c.b16 %v752, %v748
  %v861 = vpack.c.b16 %v753, %v749
  %v862 = vpack.c.b16 %v754, %v750
  %v863 = vpack.c.b16 %v759, %v755
  %v864 = vpack.c.b16 %v760, %v756
  %v865 = vpack.c.b16 %v761, %v757
  %v866 = vpack.c.b16 %v762, %v758
  %v867 = vpack.c.b16 %v767, %v763
  %v868 = vpack.c.b16 %v768, %v764
  %v869 = vpack.c.b16 %v769, %v765
  %v870 = vpack.c.b16 %v770, %v766
  %v871 = vpack.c.b16 %v775, %v771
  %v872 = vpack.c.b16 %v776, %v772
  %v873 = vpack.c.b16 %v777, %v773
  %v874 = vpack.c.b16 %v778, %v774
  %v875 = vpack.c.b16 %v783, %v779
  %v876 = vpack.c.b16 %v784, %v780
  %v877 = vpack.c.b16 %v785, %v781
  %v878 = vpack.c.b16 %v786, %v782
  %v879 = vpack.c.b16 %v791, %v787
  %v880 = vpack.c.b16 %v792, %v788
  %v881 = vpack.c.b16 %v793, %v789
  %v882 = vpack.c.b16 %v794, %v790
  %v883 = vpack.c.b16 %v799, %v795
  %v884 = vpack.c.b16 %v800, %v796
  %v885 = vpack.c.b16 %v801, %v797
  %v886 = vpack.c.b16 %v802, %v798
  %v887 = vpack.c.b16 %v807, %v803
  %v888 = vpack.c.b16 %v808, %v804
  %v889 = vpack.c.b16 %v809, %v805
  %v890 = vpack.c.b16 %v810, %v806
  %v891 = vpack.c.b16 %v815, %v811
  %v892 = vpack.c.b16 %v816, %v812
  %v893 = vpack.c.b16 %v817, %v813
  %v894 = vpack.c.b16 %v818, %v814
  %v895 = vpack.c.b16 %v823, %v819
  %v896 = vpack.c.b16 %v824, %v820
  %v897 = vpack.c.b16 %v825, %v821
  %v898 = vpack.c.b16 %v826, %v822
  %v899 = vpack.c.b16 %v831, %v827
  %v900 = vpack.c.b16 %v832, %v828
  %v901 = vpack.c.b16 %v833, %v829
  %v902 = vpack.c.b16 %v834, %v830
  %v903 = vpack.c.b16 %v839, %v835
  %v904 = vpack.c.b16 %v840, %v836
  %v905 = vpack.c.b16 %v841, %v837
  %v906 = vpack.c.b16 %v842, %v838
  %971 = vmatpush.bf16.msra.mxu0 %v871
  %972 = vmatpush.bf16.msra.mxu0 %v867
  %973 = vmatpush.bf16.msra.mxu0 %v863
  %974 = vmatpush.bf16.msra.mxu0 %v859
  %975 = vmatpush.bf16.msra.mxu0 %v855
  %976 = vmatpush.bf16.msra.mxu0 %v851
  %977 = vmatpush.bf16.msra.mxu0 %v847
  %978 = vmatpush.bf16.msra.mxu0 %v843
  %979 = vmatmul.bf16.gmra.mxu0 %v151
  %v980 = vpop.f32.mrf.mxu0
  %v981 = vadd.f32 0.0, %v980
  %v982 = vpop.f32.mrf.mxu0
  %v983 = vadd.f32 0.0, %v982
  %984 = vdwg.mxu0
  %985 = vmatpush.bf16.msra.mxu0 %v903
  %986 = vmatpush.bf16.msra.mxu0 %v899
  %987 = vmatpush.bf16.msra.mxu0 %v895
  %988 = vmatpush.bf16.msra.mxu0 %v891
  %989 = vmatpush.bf16.msra.mxu0 %v887
  %990 = vmatpush.bf16.msra.mxu0 %v883
  %991 = vmatpush.bf16.msra.mxu0 %v879
  %992 = vmatpush.bf16.msra.mxu0 %v875
  %993 = vmatmul.bf16.gmra.mxu0 %v152
  %v994 = vpop.f32.mrf.mxu0
  %v995 = vadd.f32 %v981, %v994
  %v996 = vpop.f32.mrf.mxu0
  %v997 = vadd.f32 %v983, %v996
  %998 = vdwg.mxu0
  %999 = vmatpush.bf16.msra.mxu0 %v872
  %1000 = vmatpush.bf16.msra.mxu0 %v868
  %1001 = vmatpush.bf16.msra.mxu0 %v864
  %1002 = vmatpush.bf16.msra.mxu0 %v860
  %1003 = vmatpush.bf16.msra.mxu0 %v856
  %1004 = vmatpush.bf16.msra.mxu0 %v852
  %1005 = vmatpush.bf16.msra.mxu0 %v848
  %1006 = vmatpush.bf16.msra.mxu0 %v844
  %1007 = vmatmul.bf16.gmra.mxu0 %v151
  %v1008 = vpop.f32.mrf.mxu0
  %v1009 = vadd.f32 0.0, %v1008
  %v1010 = vpop.f32.mrf.mxu0
  %v1011 = vadd.f32 0.0, %v1010
  %1012 = vdwg.mxu0
  %1013 = vmatpush.bf16.msra.mxu0 %v904
  %1014 = vmatpush.bf16.msra.mxu0 %v900
  %1015 = vmatpush.bf16.msra.mxu0 %v896
  %1016 = vmatpush.bf16.msra.mxu0 %v892
  %1017 = vmatpush.bf16.msra.mxu0 %v888
  %1018 = vmatpush.bf16.msra.mxu0 %v884
  %1019 = vmatpush.bf16.msra.mxu0 %v880
  %1020 = vmatpush.bf16.msra.mxu0 %v876
  %1021 = vmatmul.bf16.gmra.mxu0 %v152
  %v1022 = vpop.f32.mrf.mxu0
  %v1023 = vadd.f32 %v1009, %v1022
  %v1024 = vpop.f32.mrf.mxu0
  %v1025 = vadd.f32 %v1011, %v1024
  %1026 = vdwg.mxu0
  %1027 = vmatpush.bf16.msra.mxu0 %v873
  %1028 = vmatpush.bf16.msra.mxu0 %v869
  %1029 = vmatpush.bf16.msra.mxu0 %v865
  %1030 = vmatpush.bf16.msra.mxu0 %v861
  %1031 = vmatpush.bf16.msra.mxu0 %v857
  %1032 = vmatpush.bf16.msra.mxu0 %v853
  %1033 = vmatpush.bf16.msra.mxu0 %v849
  %1034 = vmatpush.bf16.msra.mxu0 %v845
  %1035 = vmatmul.bf16.gmra.mxu0 %v151
  %v1036 = vpop.f32.mrf.mxu0
  %v1037 = vadd.f32 0.0, %v1036
  %v1038 = vpop.f32.mrf.mxu0
  %v1039 = vadd.f32 0.0, %v1038
  %1040 = vdwg.mxu0
  %1041 = vmatpush.bf16.msra.mxu0 %v905
  %1042 = vmatpush.bf16.msra.mxu0 %v901
  %1043 = vmatpush.bf16.msra.mxu0 %v897
  %1044 = vmatpush.bf16.msra.mxu0 %v893
  %1045 = vmatpush.bf16.msra.mxu0 %v889
  %1046 = vmatpush.bf16.msra.mxu0 %v885
  %1047 = vmatpush.bf16.msra.mxu0 %v881
  %1048 = vmatpush.bf16.msra.mxu0 %v877
  %1049 = vmatmul.bf16.gmra.mxu0 %v152
  %v1050 = vpop.f32.mrf.mxu0
  %v1051 = vadd.f32 %v1037, %v1050
  %v1052 = vpop.f32.mrf.mxu0
  %v1053 = vadd.f32 %v1039, %v1052
  %1054 = vdwg.mxu0
  %1055 = vmatpush.bf16.msra.mxu0 %v874
  %1056 = vmatpush.bf16.msra.mxu0 %v870
  %1057 = vmatpush.bf16.msra.mxu0 %v866
  %1058 = vmatpush.bf16.msra.mxu0 %v862
  %1059 = vmatpush.bf16.msra.mxu0 %v858
  %1060 = vmatpush.bf16.msra.mxu0 %v854
  %1061 = vmatpush.bf16.msra.mxu0 %v850
  %1062 = vmatpush.bf16.msra.mxu0 %v846
  %1063 = vmatmul.bf16.gmra.mxu0 %v151
  %v1064 = vpop.f32.mrf.mxu0
  %v1065 = vadd.f32 0.0, %v1064
  %v1066 = vpop.f32.mrf.mxu0
  %v1067 = vadd.f32 0.0, %v1066
  %1068 = vdwg.mxu0
  %1069 = vmatpush.bf16.msra.mxu0 %v906
  %1070 = vmatpush.bf16.msra.mxu0 %v902
  %1071 = vmatpush.bf16.msra.mxu0 %v898
  %1072 = vmatpush.bf16.msra.mxu0 %v894
  %1073 = vmatpush.bf16.msra.mxu0 %v890
  %1074 = vmatpush.bf16.msra.mxu0 %v886
  %1075 = vmatpush.bf16.msra.mxu0 %v882
  %1076 = vmatpush.bf16.msra.mxu0 %v878
  %1077 = vmatmul.bf16.gmra.mxu0 %v152
  %v1078 = vpop.f32.mrf.mxu0
  %v1079 = vadd.f32 %v1065, %v1078
  %v1080 = vpop.f32.mrf.mxu0
  %v1081 = vadd.f32 %v1067, %v1080
  %1082 = vdwg.mxu0
  %v1083 = vsub.f32 0.0, %v499
  %v1084 = vsub.f32 0.0, %v527
  %v1085 = vsub.f32 0.0, %v555
  %v1086 = vsub.f32 0.0, %v583
  %v1087 = vsub.f32 0.0, %v501
  %v1088 = vsub.f32 0.0, %v529
  %v1089 = vsub.f32 0.0, %v557
  %v1090 = vsub.f32 0.0, %v585
  %v1091 = vmul.f32 %v1083, 1.442695
  %v1092 = vpow.pop %v1091
  %v1093 = vmul.f32 %v1084, 1.442695
  %v1094 = vpow.pop %v1093
  %v1095 = vmul.f32 %v1085, 1.442695
  %v1096 = vpow.pop %v1095
  %v1097 = vmul.f32 %v1086, 1.442695
  %v1098 = vpow.pop %v1097
  %v1099 = vmul.f32 %v1087, 1.442695
  %v1100 = vpow.pop %v1099
  %v1101 = vmul.f32 %v1088, 1.442695
  %v1102 = vpow.pop %v1101
  %v1103 = vmul.f32 %v1089, 1.442695
  %v1104 = vpow.pop %v1103
  %v1105 = vmul.f32 %v1090, 1.442695
  %v1106 = vpow.pop %v1105
  %v1107 = vadd.f32 %v1092, 1.0
  %v1108 = vadd.f32 %v1094, 1.0
  %v1109 = vadd.f32 %v1096, 1.0
  %v1110 = vadd.f32 %v1098, 1.0
  %v1111 = vadd.f32 %v1100, 1.0
  %v1112 = vadd.f32 %v1102, 1.0
  %v1113 = vadd.f32 %v1104, 1.0
  %v1114 = vadd.f32 %v1106, 1.0
  %v1115 = vrcp.pop %v1107
  %v1116 = vmul.f32 %v1107, %v1115
  %v1117 = vsub.f32 1.0, %v1116
  %v1118 = vmul.f32 %v1115, %v1117
  %v1119 = vadd.f32 %v1115, %v1118
  %vm1120 = vweird.f32 %v1107
  %vm1121 = vweird.f32 %v1115
  %vm1122 = vmor %vm1120, %vm1121
  %v1123 = vsel %vm1122, %v1115, %v1119
  %v1124 = vand.u32 2147483647, %v1107
  %vm1125 = vcmp.eq.f32.partialorder %v1124, 8.507059e+37
  %v1126 = vand.u32 %v1107, 2147483648
  %v1127 = vor.u32 1.1754944e-38, %v1126
  %v1128 = vsel %vm1125, %v1127, %v1123
  %v1129 = vmul.f32 1.0, %v1128
  %v1130 = vrcp.pop %v1108
  %v1131 = vmul.f32 %v1108, %v1130
  %v1132 = vsub.f32 1.0, %v1131
  %v1133 = vmul.f32 %v1130, %v1132
  %v1134 = vadd.f32 %v1130, %v1133
  %vm1135 = vweird.f32 %v1108
  %vm1136 = vweird.f32 %v1130
  %vm1137 = vmor %vm1135, %vm1136
  %v1138 = vsel %vm1137, %v1130, %v1134
  %v1139 = vand.u32 2147483647, %v1108
  %vm1140 = vcmp.eq.f32.partialorder %v1139, 8.507059e+37
  %v1141 = vand.u32 %v1108, 2147483648
  %v1142 = vor.u32 1.1754944e-38, %v1141
  %v1143 = vsel %vm1140, %v1142, %v1138
  %v1144 = vmul.f32 1.0, %v1143
  %v1145 = vrcp.pop %v1109
  %v1146 = vmul.f32 %v1109, %v1145
  %v1147 = vsub.f32 1.0, %v1146
  %v1148 = vmul.f32 %v1145, %v1147
  %v1149 = vadd.f32 %v1145, %v1148
  %vm1150 = vweird.f32 %v1109
  %vm1151 = vweird.f32 %v1145
  %vm1152 = vmor %vm1150, %vm1151
  %v1153 = vsel %vm1152, %v1145, %v1149
  %v1154 = vand.u32 2147483647, %v1109
  %vm1155 = vcmp.eq.f32.partialorder %v1154, 8.507059e+37
  %v1156 = vand.u32 %v1109, 2147483648
  %v1157 = vor.u32 1.1754944e-38, %v1156
  %v1158 = vsel %vm1155, %v1157, %v1153
  %v1159 = vmul.f32 1.0, %v1158
  %v1160 = vrcp.pop %v1110
  %v1161 = vmul.f32 %v1110, %v1160
  %v1162 = vsub.f32 1.0, %v1161
  %v1163 = vmul.f32 %v1160, %v1162
  %v1164 = vadd.f32 %v1160, %v1163
  %vm1165 = vweird.f32 %v1110
  %vm1166 = vweird.f32 %v1160
  %vm1167 = vmor %vm1165, %vm1166
  %v1168 = vsel %vm1167, %v1160, %v1164
  %v1169 = vand.u32 2147483647, %v1110
  %vm1170 = vcmp.eq.f32.partialorder %v1169, 8.507059e+37
  %v1171 = vand.u32 %v1110, 2147483648
  %v1172 = vor.u32 1.1754944e-38, %v1171
  %v1173 = vsel %vm1170, %v1172, %v1168
  %v1174 = vmul.f32 1.0, %v1173
  %v1175 = vrcp.pop %v1111
  %v1176 = vmul.f32 %v1111, %v1175
  %v1177 = vsub.f32 1.0, %v1176
  %v1178 = vmul.f32 %v1175, %v1177
  %v1179 = vadd.f32 %v1175, %v1178
  %vm1180 = vweird.f32 %v1111
  %vm1181 = vweird.f32 %v1175
  %vm1182 = vmor %vm1180, %vm1181
  %v1183 = vsel %vm1182, %v1175, %v1179
  %v1184 = vand.u32 2147483647, %v1111
  %vm1185 = vcmp.eq.f32.partialorder %v1184, 8.507059e+37
  %v1186 = vand.u32 %v1111, 2147483648
  %v1187 = vor.u32 1.1754944e-38, %v1186
  %v1188 = vsel %vm1185, %v1187, %v1183
  %v1189 = vmul.f32 1.0, %v1188
  %v1190 = vrcp.pop %v1112
  %v1191 = vmul.f32 %v1112, %v1190
  %v1192 = vsub.f32 1.0, %v1191
  %v1193 = vmul.f32 %v1190, %v1192
  %v1194 = vadd.f32 %v1190, %v1193
  %vm1195 = vweird.f32 %v1112
  %vm1196 = vweird.f32 %v1190
  %vm1197 = vmor %vm1195, %vm1196
  %v1198 = vsel %vm1197, %v1190, %v1194
  %v1199 = vand.u32 2147483647, %v1112
  %vm1200 = vcmp.eq.f32.partialorder %v1199, 8.507059e+37
  %v1201 = vand.u32 %v1112, 2147483648
  %v1202 = vor.u32 1.1754944e-38, %v1201
  %v1203 = vsel %vm1200, %v1202, %v1198
  %v1204 = vmul.f32 1.0, %v1203
  %v1205 = vrcp.pop %v1113
  %v1206 = vmul.f32 %v1113, %v1205
  %v1207 = vsub.f32 1.0, %v1206
  %v1208 = vmul.f32 %v1205, %v1207
  %v1209 = vadd.f32 %v1205, %v1208
  %vm1210 = vweird.f32 %v1113
  %vm1211 = vweird.f32 %v1205
  %vm1212 = vmor %vm1210, %vm1211
  %v1213 = vsel %vm1212, %v1205, %v1209
  %v1214 = vand.u32 2147483647, %v1113
  %vm1215 = vcmp.eq.f32.partialorder %v1214, 8.507059e+37
  %v1216 = vand.u32 %v1113, 2147483648
  %v1217 = vor.u32 1.1754944e-38, %v1216
  %v1218 = vsel %vm1215, %v1217, %v1213
  %v1219 = vmul.f32 1.0, %v1218
  %v1220 = vrcp.pop %v1114
  %v1221 = vmul.f32 %v1114, %v1220
  %v1222 = vsub.f32 1.0, %v1221
  %v1223 = vmul.f32 %v1220, %v1222
  %v1224 = vadd.f32 %v1220, %v1223
  %vm1225 = vweird.f32 %v1114
  %vm1226 = vweird.f32 %v1220
  %vm1227 = vmor %vm1225, %vm1226
  %v1228 = vsel %vm1227, %v1220, %v1224
  %v1229 = vand.u32 2147483647, %v1114
  %vm1230 = vcmp.eq.f32.partialorder %v1229, 8.507059e+37
  %v1231 = vand.u32 %v1114, 2147483648
  %v1232 = vor.u32 1.1754944e-38, %v1231
  %v1233 = vsel %vm1230, %v1232, %v1228
  %v1234 = vmul.f32 1.0, %v1233
  %v1235 = vmul.f32 %v499, %v1129
  %v1236 = vmul.f32 %v527, %v1144
  %v1237 = vmul.f32 %v555, %v1159
  %v1238 = vmul.f32 %v583, %v1174
  %v1239 = vmul.f32 %v501, %v1189
  %v1240 = vmul.f32 %v529, %v1204
  %v1241 = vmul.f32 %v557, %v1219
  %v1242 = vmul.f32 %v585, %v1234
  %v1243 = vmul.f32 %v1235, %v995
  %v1244 = vmul.f32 %v1236, %v1023
  %v1245 = vmul.f32 %v1237, %v1051
  %v1246 = vmul.f32 %v1238, %v1079
  %v1247 = vmul.f32 %v1239, %v997
  %v1248 = vmul.f32 %v1240, %v1025
  %v1249 = vmul.f32 %v1241, %v1053
  %v1250 = vmul.f32 %v1242, %v1081
  %v1251 = vpack.c.bf16 %v1244, %v1243
  %v1252 = vpack.c.bf16 %v1246, %v1245
  %v1253 = vpack.c.bf16 %v1248, %v1247
  %v1254 = vpack.c.bf16 %v1250, %v1249
  %1255 = vst [vmem:[%s4] sm:$0xff] %v1251
  %1256 = vst [vmem:[%s4 + $0x8] sm:$0xff] %v1252
  %1257 = vst [vmem:[%s4 + $0x10] sm:$0xff] %v1253
  %1258 = vst [vmem:[%s4 + $0x18] sm:$0xff] %v1254
  // Predicated region
  $region22: #{transformer_forward.14} parent=0 // pred_check
    _
  $region23: #{transformer_forward.14} parent=0 // pred_check_branch
    %1260 = sbr.rel (0) target = $region25
  $region24: #{transformer_forward.14} parent=0 // pred_region
    _
  $region25: #{transformer_forward.14} parent=0 // pred_fallthru
    _
  // Predicated region
  $region26: #{transformer_forward.14} parent=0 // pred_check
    _
  $region27: #{transformer_forward.14} parent=0 // pred_check_branch
    %1262 = sbr.rel (0) target = $region29
  $region28: #{transformer_forward.14} parent=0 // pred_region
    _
  $region29: #{transformer_forward.14} parent=0 // pred_fallthru
    _

// kernel: transformer_forward.12
$region0: #{transformer_forward.12}
  #allocation0 [shape = 'u32[]', space=smem, size = 0x4, offset = 0x4, fixed_abs, tag = 'smem constant byte address 0x4 - core index']
  #allocation1 [shape = 'u32[72,128]{1,0:T(1,128)}', space=vmem, size = 0x9000, scoped, tag = 'internal scratch']
  #allocation2 [shape = 'bf16[8,128]{1,0:T(8,128)(2,1)}', space=vmem, size = 0x800, scoped, tag = 'scratch operand']
  #allocation3 [shape = 'f32[8,1]{1,0:T(8,128)}', space=vmem, size = 0x1000, scoped, tag = 'scratch operand']
  #allocation4 [shape = 'f32[8,1]{1,0:T(8,128)}', space=vmem, size = 0x1000, scoped, tag = 'scratch operand']
  #allocation5 [shape = 'f32[8,128]{1,0:T(8,128)}', space=vmem, size = 0x1000, scoped, tag = 'scratch operand']
  %s0 = inlined_call_operand.vmem [shape: bf16[4,8,128], index: 0, kind: input, shape index: {}]
  %s1 = inlined_call_operand.vmem [shape: bf16[4,8,128], index: 1, kind: input, shape index: {}]
  %s2 = inlined_call_operand.vmem [shape: bf16[4,8,128], index: 2, kind: input, shape index: {}]
  %s3 = inlined_call_operand.vmem [shape: f32[8,128], index: 3, kind: input, shape index: {}, may-alias: {3,5}]
  %s4 = inlined_call_operand.vmem [shape: f32[8,128], index: 4, kind: input, shape index: {}, may-alias: {4,6}]
  %s5 = inlined_call_operand.vmem [shape: f32[8,128], index: 5, kind: input, shape index: {}, may-alias: {3,5}]
  %s6 = inlined_call_operand.vmem [shape: f32[8,128], index: 6, kind: input, shape index: {}, may-alias: {4,6}]
  %s7 = inlined_call_operand.vmem [shape: bf16[4,8,128], index: 7, kind: output, shape index: {}]
  %s8 = sld [smem:[#allocation0]]
  $region77: #{transformer_forward.12} parent=0
    _
  %s10 = ssub.s32 1, %s8
  %s11 = scalar_select 0, %s10, %s8
  loop: start=0, step=1, limit=6
  $region2: #{transformer_forward.12} parent=0 // loop_pre_header
    _
  $region3: #{transformer_forward.12} parent=0 // loop_header
    %s13 = sphi 0, %s17
    %p14 = scmp.ge.s32.totalorder %s13, 6
    %s20 = sphi 0, %s39
    %s21 = sphi 0, %s35
    %s22 = sphi 0, %s31
    %s23 = sphi 0, %s20
    %s24 = sphi 0, %s21
    %s25 = sphi 0, %s22
    %s26 = sphi 0, %s23
    %s27 = sphi 0, %s24
    %s28 = sphi 0, %s25
    %s44 = sphi 0, %s46
    %s47 = sphi 0, %s44
    %s48 = sphi 0, %s47
    %s64 = sphi 0, %s48
    %s76 = sphi 0, %s78
    %s79 = sphi 0, %s76
    %s80 = sphi 0, %s79
    %s96 = sphi 0, %s80
    %s108 = sphi 0, %s110
    %s111 = sphi 0, %s108
    %s112 = sphi 0, %s111
    %s128 = sphi 0, %s112
    %s134 = sphi 0, %s136
    %s137 = sphi 0, %s134
    %s138 = sphi 0, %s137
    %s154 = sphi 0, %s138
    %s160 = sphi 0, %s162
    %s163 = sphi 0, %s160
    %s164 = sphi 0, %s163
    %s180 = sphi 0, %s164
    %s190 = sphi 0, %s192
    %s193 = sphi 0, %s190
    %s194 = sphi 0, %s193
    %s210 = sphi 0, %s194
    %s220 = sphi 0, %s222
    %s223 = sphi 0, %s220
    %s224 = sphi 0, %s223
    %s240 = sphi 0, %s224
    %s248 = sphi 0, %s250
    %s251 = sphi 0, %s248
    %s252 = sphi 0, %s251
    %s268 = sphi 0, %s252
  $region4: #{transformer_forward.12} parent=0 // loop_header_branch
    %16 = sbr.rel (%p14) target = $region8
  $region5: #{transformer_forward.12} parent=0 // loop_body
    %s18 = ssub.s32 %s13, 1
    %s19 = ssub.s32 %s13, 2
    %s29 = sadd.s32 1, %s22
    %p30 = scmp.ge.s32.totalorder %s29, 1
    %s31 = scalar_select %p30, 0, %s29
    %s32 = sadd.s32 1, %s21
    %s33 = scalar_select %p30, %s32, %s21
    %p34 = scmp.ge.s32.totalorder %s33, 1
    %s35 = scalar_select %p34, 0, %s33
    %s36 = sadd.s32 1, %s20
    %s37 = scalar_select %p34, %s36, %s20
    %p38 = scmp.ge.s32.totalorder %s37, 4
    %s39 = scalar_select %p38, 0, %s37
    %s40 = ssub.s32 %s20, %s39
    %s41 = ssub.s32 %s21, %s35
    %s42 = sor.u32 %s40, %s41
    %p43 = scmp.eq.s32.totalorder %s42, 0
    %s45 = sadd.s32 %s44, 1
    %s46 = scalar_select %p43, %s44, %s45
    %p49 = pneg %p43
    %p50 = scmp.eq.s32.totalorder %s13, 3
    %p51 = por %p49, %p50
    %p52 = scmp.ne.s32.totalorder %s44, %s47
    %p53 = scmp.eq.s32.totalorder %s13, 0
    %p54 = por %p52, %p53
    %p55 = scmp.ne.s32.totalorder %s44, %s47
    %p56 = scmp.eq.s32.totalorder %s18, 3
    %p57 = por %p55, %p56
    %p58 = scmp.ne.s32.totalorder %s47, %s48
    %p59 = scmp.eq.s32.totalorder %s18, 0
    %p60 = por %p58, %p59
    %p61 = scmp.ne.s32.totalorder %s47, %s48
    %p62 = scmp.eq.s32.totalorder %s19, 3
    %p63 = por %p61, %p62
    %p65 = scmp.ne.s32.totalorder %s48, %s64
    %p66 = scmp.eq.s32.totalorder %s19, 0
    %p67 = por %p65, %p66
    %p68 = scmp.lt.s32.totalorder %s22, %s21
    %s69 = scalar_select %p68, %s22, %s21
    %p70 = scmp.lt.s32.totalorder %s31, %s35
    %s71 = scalar_select %p70, %s31, %s35
    %s72 = ssub.s32 %s20, %s39
    %s73 = ssub.s32 %s69, %s71
    %s74 = sor.u32 %s72, %s73
    %p75 = scmp.eq.s32.totalorder %s74, 0
    %s77 = sadd.s32 %s76, 1
    %s78 = scalar_select %p75, %s76, %s77
    %p81 = pneg %p75
    %p82 = scmp.eq.s32.totalorder %s13, 3
    %p83 = por %p81, %p82
    %p84 = scmp.ne.s32.totalorder %s76, %s79
    %p85 = scmp.eq.s32.totalorder %s13, 0
    %p86 = por %p84, %p85
    %p87 = scmp.ne.s32.totalorder %s76, %s79
    %p88 = scmp.eq.s32.totalorder %s18, 3
    %p89 = por %p87, %p88
    %p90 = scmp.ne.s32.totalorder %s79, %s80
    %p91 = scmp.eq.s32.totalorder %s18, 0
    %p92 = por %p90, %p91
    %p93 = scmp.ne.s32.totalorder %s79, %s80
    %p94 = scmp.eq.s32.totalorder %s19, 3
    %p95 = por %p93, %p94
    %p97 = scmp.ne.s32.totalorder %s80, %s96
    %p98 = scmp.eq.s32.totalorder %s19, 0
    %p99 = por %p97, %p98
    %p100 = scmp.lt.s32.totalorder %s22, %s21
    %s101 = scalar_select %p100, %s22, %s21
    %p102 = scmp.lt.s32.totalorder %s31, %s35
    %s103 = scalar_select %p102, %s31, %s35
    %s104 = ssub.s32 %s20, %s39
    %s105 = ssub.s32 %s101, %s103
    %s106 = sor.u32 %s104, %s105
    %p107 = scmp.eq.s32.totalorder %s106, 0
    %s109 = sadd.s32 %s108, 1
    %s110 = scalar_select %p107, %s108, %s109
    %p113 = pneg %p107
    %p114 = scmp.eq.s32.totalorder %s13, 3
    %p115 = por %p113, %p114
    %p116 = scmp.ne.s32.totalorder %s108, %s111
    %p117 = scmp.eq.s32.totalorder %s13, 0
    %p118 = por %p116, %p117
    %p119 = scmp.ne.s32.totalorder %s108, %s111
    %p120 = scmp.eq.s32.totalorder %s18, 3
    %p121 = por %p119, %p120
    %p122 = scmp.ne.s32.totalorder %s111, %s112
    %p123 = scmp.eq.s32.totalorder %s18, 0
    %p124 = por %p122, %p123
    %p125 = scmp.ne.s32.totalorder %s111, %s112
    %p126 = scmp.eq.s32.totalorder %s19, 3
    %p127 = por %p125, %p126
    %p129 = scmp.ne.s32.totalorder %s112, %s128
    %p130 = scmp.eq.s32.totalorder %s19, 0
    %p131 = por %p129, %p130
    %s132 = ssub.s32 %s21, %s35
    %p133 = scmp.eq.s32.totalorder %s132, 0
    %s135 = sadd.s32 %s134, 1
    %s136 = scalar_select %p133, %s134, %s135
    %p139 = pneg %p133
    %p140 = scmp.eq.s32.totalorder %s13, 3
    %p141 = por %p139, %p140
    %p142 = scmp.ne.s32.totalorder %s134, %s137
    %p143 = scmp.eq.s32.totalorder %s13, 0
    %p144 = por %p142, %p143
    %p145 = scmp.ne.s32.totalorder %s134, %s137
    %p146 = scmp.eq.s32.totalorder %s18, 3
    %p147 = por %p145, %p146
    %p148 = scmp.ne.s32.totalorder %s137, %s138
    %p149 = scmp.eq.s32.totalorder %s18, 0
    %p150 = por %p148, %p149
    %p151 = scmp.ne.s32.totalorder %s137, %s138
    %p152 = scmp.eq.s32.totalorder %s19, 3
    %p153 = por %p151, %p152
    %p155 = scmp.ne.s32.totalorder %s138, %s154
    %p156 = scmp.eq.s32.totalorder %s19, 0
    %p157 = por %p155, %p156
    %s158 = ssub.s32 %s21, %s35
    %p159 = scmp.eq.s32.totalorder %s158, 0
    %s161 = sadd.s32 %s160, 1
    %s162 = scalar_select %p159, %s160, %s161
    %p165 = pneg %p159
    %p166 = scmp.eq.s32.totalorder %s13, 3
    %p167 = por %p165, %p166
    %p168 = scmp.ne.s32.totalorder %s160, %s163
    %p169 = scmp.eq.s32.totalorder %s13, 0
    %p170 = por %p168, %p169
    %p171 = scmp.ne.s32.totalorder %s160, %s163
    %p172 = scmp.eq.s32.totalorder %s18, 3
    %p173 = por %p171, %p172
    %p174 = scmp.ne.s32.totalorder %s163, %s164
    %p175 = scmp.eq.s32.totalorder %s18, 0
    %p176 = por %p174, %p175
    %p177 = scmp.ne.s32.totalorder %s163, %s164
    %p178 = scmp.eq.s32.totalorder %s19, 3
    %p179 = por %p177, %p178
    %p181 = scmp.ne.s32.totalorder %s164, %s180
    %p182 = scmp.eq.s32.totalorder %s19, 0
    %p183 = por %p181, %p182
    %p184 = scmp.lt.s32.totalorder %s22, %s21
    %s185 = scalar_select %p184, %s22, %s21
    %p186 = scmp.lt.s32.totalorder %s31, %s35
    %s187 = scalar_select %p186, %s31, %s35
    %s188 = ssub.s32 %s185, %s187
    %p189 = scmp.eq.s32.totalorder %s188, 0
    %s191 = sadd.s32 %s190, 1
    %s192 = scalar_select %p189, %s190, %s191
    %p195 = pneg %p189
    %p196 = scmp.eq.s32.totalorder %s13, 3
    %p197 = por %p195, %p196
    %p198 = scmp.ne.s32.totalorder %s190, %s193
    %p199 = scmp.eq.s32.totalorder %s13, 0
    %p200 = por %p198, %p199
    %p201 = scmp.ne.s32.totalorder %s190, %s193
    %p202 = scmp.eq.s32.totalorder %s18, 3
    %p203 = por %p201, %p202
    %p204 = scmp.ne.s32.totalorder %s193, %s194
    %p205 = scmp.eq.s32.totalorder %s18, 0
    %p206 = por %p204, %p205
    %p207 = scmp.ne.s32.totalorder %s193, %s194
    %p208 = scmp.eq.s32.totalorder %s19, 3
    %p209 = por %p207, %p208
    %p211 = scmp.ne.s32.totalorder %s194, %s210
    %p212 = scmp.eq.s32.totalorder %s19, 0
    %p213 = por %p211, %p212
    %p214 = scmp.lt.s32.totalorder %s22, %s21
    %s215 = scalar_select %p214, %s22, %s21
    %p216 = scmp.lt.s32.totalorder %s31, %s35
    %s217 = scalar_select %p216, %s31, %s35
    %s218 = ssub.s32 %s215, %s217
    %p219 = scmp.eq.s32.totalorder %s218, 0
    %s221 = sadd.s32 %s220, 1
    %s222 = scalar_select %p219, %s220, %s221
    %p225 = pneg %p219
    %p226 = scmp.eq.s32.totalorder %s13, 3
    %p227 = por %p225, %p226
    %p228 = scmp.ne.s32.totalorder %s220, %s223
    %p229 = scmp.eq.s32.totalorder %s13, 0
    %p230 = por %p228, %p229
    %p231 = scmp.ne.s32.totalorder %s220, %s223
    %p232 = scmp.eq.s32.totalorder %s18, 3
    %p233 = por %p231, %p232
    %p234 = scmp.ne.s32.totalorder %s223, %s224
    %p235 = scmp.eq.s32.totalorder %s18, 0
    %p236 = por %p234, %p235
    %p237 = scmp.ne.s32.totalorder %s223, %s224
    %p238 = scmp.eq.s32.totalorder %s19, 3
    %p239 = por %p237, %p238
    %p241 = scmp.ne.s32.totalorder %s224, %s240
    %p242 = scmp.eq.s32.totalorder %s19, 0
    %p243 = por %p241, %p242
    %s244 = ssub.s32 %s20, %s39
    %s245 = ssub.s32 %s21, %s35
    %s246 = sor.u32 %s244, %s245
    %p247 = scmp.eq.s32.totalorder %s246, 0
    %s249 = sadd.s32 %s248, 1
    %s250 = scalar_select %p247, %s248, %s249
    %p253 = pneg %p247
    %p254 = scmp.eq.s32.totalorder %s13, 3
    %p255 = por %p253, %p254
    %p256 = scmp.ne.s32.totalorder %s248, %s251
    %p257 = scmp.eq.s32.totalorder %s13, 0
    %p258 = por %p256, %p257
    %p259 = scmp.ne.s32.totalorder %s248, %s251
    %p260 = scmp.eq.s32.totalorder %s18, 3
    %p261 = por %p259, %p260
    %p262 = scmp.ne.s32.totalorder %s251, %s252
    %p263 = scmp.eq.s32.totalorder %s18, 0
    %p264 = por %p262, %p263
    %p265 = scmp.ne.s32.totalorder %s251, %s252
    %p266 = scmp.eq.s32.totalorder %s19, 3
    %p267 = por %p265, %p266
    %p269 = scmp.ne.s32.totalorder %s252, %s268
    %p270 = scmp.eq.s32.totalorder %s19, 0
    %p271 = por %p269, %p270
    %p272 = scmp.le.s32.totalorder 1, %s13
    %p273 = scmp.lt.s32.totalorder %s13, 5
    %p274 = pnand %p272, %p273
    %p275 = pneg %p274
    // Predicated region
    $region9: #{transformer_forward.12} parent=5 // pred_check
      _
    $region10: #{transformer_forward.12} parent=5 // pred_check_branch
      %277 = sbr.rel (%p274) target = $region12
    $region11: #{transformer_forward.12} parent=5 // pred_region
      %s278 = ssub.s32 %s13, 1
      // Predicated region
      $region13: #{transformer_forward.12} parent=11 // pred_check
        %p279 = pneg %p150
      $region14: #{transformer_forward.12} parent=11 // pred_check_branch
        %281 = sbr.rel (%p279) target = $region16
      $region15: #{transformer_forward.12} parent=11 // pred_region
        %p282 = scmp.lt.s32.totalorder %s24, 0
        %s283 = scalar_select %p282, %s24, 0
        %s284 = smul.addr %s283, 8
        %s285 = scalar_lea.vmem %s3, %s284
      $region16: #{transformer_forward.12} parent=11 // pred_fallthru
        _
      // Predicated region
      $region17: #{transformer_forward.12} parent=11 // pred_check
        %p286 = pneg %p176
      $region18: #{transformer_forward.12} parent=11 // pred_check_branch
        %288 = sbr.rel (%p286) target = $region20
      $region19: #{transformer_forward.12} parent=11 // pred_region
        %p289 = scmp.lt.s32.totalorder %s24, 0
        %s290 = scalar_select %p289, %s24, 0
        %s291 = smul.addr %s290, 8
        %s292 = scalar_lea.vmem %s4, %s291
      $region20: #{transformer_forward.12} parent=11 // pred_fallthru
        _
      // Predicated region
      $region21: #{transformer_forward.12} parent=11 // pred_check
        %p293 = pneg %p206
      $region22: #{transformer_forward.12} parent=11 // pred_check_branch
        %295 = sbr.rel (%p293) target = $region24
      $region23: #{transformer_forward.12} parent=11 // pred_region
        %p296 = scmp.lt.s32.totalorder %s25, %s24
        %s297 = scalar_select %p296, %s25, %s24
        %p298 = scmp.lt.s32.totalorder %s297, 0
        %s299 = scalar_select %p298, %s297, 0
        %s300 = smul.addr %s299, 8
        %s301 = scalar_lea.vmem %s5, %s300
        %p302 = scmp.lt.s32.totalorder %s25, %s24
        %s303 = scalar_select %p302, %s25, %s24
      $region24: #{transformer_forward.12} parent=11 // pred_fallthru
        _
      // Predicated region
      $region25: #{transformer_forward.12} parent=11 // pred_check
        %p304 = pneg %p236
      $region26: #{transformer_forward.12} parent=11 // pred_check_branch
        %306 = sbr.rel (%p304) target = $region28
      $region27: #{transformer_forward.12} parent=11 // pred_region
        %p307 = scmp.lt.s32.totalorder %s25, %s24
        %s308 = scalar_select %p307, %s25, %s24
        %p309 = scmp.lt.s32.totalorder %s308, 0
        %s310 = scalar_select %p309, %s308, 0
        %s311 = smul.addr %s310, 8
        %s312 = scalar_lea.vmem %s6, %s311
        %p313 = scmp.lt.s32.totalorder %s25, %s24
        %s314 = scalar_select %p313, %s25, %s24
      $region28: #{transformer_forward.12} parent=11 // pred_fallthru
        _
    $region12: #{transformer_forward.12} parent=5 // pred_fallthru
      _
    %p315 = scmp.lt.s32.totalorder %s13, 4
    // Predicated region
    $region29: #{transformer_forward.12} parent=5 // pred_check
      %p316 = pneg %p315
    $region30: #{transformer_forward.12} parent=5 // pred_check_branch
      %318 = sbr.rel (%p316) target = $region32
    $region31: #{transformer_forward.12} parent=5 // pred_region
      // Predicated region
      $region33: #{transformer_forward.12} parent=31 // pred_check
        %p319 = pneg %p54
      $region34: #{transformer_forward.12} parent=31 // pred_check_branch
        %321 = sbr.rel (%p319) target = $region36
      $region35: #{transformer_forward.12} parent=31 // pred_region
        %p322 = scmp.lt.s32.totalorder %s20, 3
        %s323 = scalar_select %p322, %s20, 3
        %p324 = scmp.lt.s32.totalorder %s21, 0
        %s325 = scalar_select %p324, %s21, 0
        %s326 = sadd.s32 %s325, %s323
        %s327 = smul.addr %s326, 4
        %s328 = scalar_lea.vmem %s0, %s327
      $region36: #{transformer_forward.12} parent=31 // pred_fallthru
        _
      // Predicated region
      $region37: #{transformer_forward.12} parent=31 // pred_check
        %p329 = pneg %p86
      $region38: #{transformer_forward.12} parent=31 // pred_check_branch
        %331 = sbr.rel (%p329) target = $region40
      $region39: #{transformer_forward.12} parent=31 // pred_region
        %p332 = scmp.lt.s32.totalorder %s22, %s21
        %s333 = scalar_select %p332, %s22, %s21
        %p334 = scmp.lt.s32.totalorder %s20, 3
        %s335 = scalar_select %p334, %s20, 3
        %p336 = scmp.lt.s32.totalorder %s333, 0
        %s337 = scalar_select %p336, %s333, 0
        %s338 = sadd.s32 %s337, %s335
        %s339 = smul.addr %s338, 4
        %s340 = scalar_lea.vmem %s1, %s339
        %p341 = scmp.lt.s32.totalorder %s22, %s21
        %s342 = scalar_select %p341, %s22, %s21
      $region40: #{transformer_forward.12} parent=31 // pred_fallthru
        _
      // Predicated region
      $region41: #{transformer_forward.12} parent=31 // pred_check
        %p343 = pneg %p118
      $region42: #{transformer_forward.12} parent=31 // pred_check_branch
        %345 = sbr.rel (%p343) target = $region44
      $region43: #{transformer_forward.12} parent=31 // pred_region
        %p346 = scmp.lt.s32.totalorder %s22, %s21
        %s347 = scalar_select %p346, %s22, %s21
        %p348 = scmp.lt.s32.totalorder %s20, 3
        %s349 = scalar_select %p348, %s20, 3
        %p350 = scmp.lt.s32.totalorder %s347, 0
        %s351 = scalar_select %p350, %s347, 0
        %s352 = sadd.s32 %s351, %s349
        %s353 = smul.addr %s352, 4
        %s354 = scalar_lea.vmem %s2, %s353
        %p355 = scmp.lt.s32.totalorder %s22, %s21
        %s356 = scalar_select %p355, %s22, %s21
      $region44: #{transformer_forward.12} parent=31 // pred_fallthru
        _
    $region32: #{transformer_forward.12} parent=5 // pred_fallthru
      _
    %p357 = scmp.le.s32.totalorder 1, %s13
    %p358 = scmp.lt.s32.totalorder %s13, 5
    %p359 = pnand %p357, %p358
    %p360 = pneg %p359
    // Predicated region
    $region45: #{transformer_forward.12} parent=5 // pred_check
      _
    $region46: #{transformer_forward.12} parent=5 // pred_check_branch
      %362 = sbr.rel (%p359) target = $region48
    $region47: #{transformer_forward.12} parent=5 // pred_region
      %s363 = ssub.s32 %s13, 1
      %p364 = scmp.lt.s32.totalorder %s23, 3
      %s365 = scalar_select %p364, %s23, 3
      %p366 = scmp.lt.s32.totalorder %s24, 0
      %s367 = scalar_select %p366, %s24, 0
      %s368 = sadd.s32 %s367, %s365
      %s369 = smul.addr %s368, 4
      %s370 = scalar_lea.vmem %s0, %s369
      %p371 = pneg %p60
      %p372 = pneg %p57
      %p373 = scmp.lt.s32.totalorder %s25, %s24
      %s374 = scalar_select %p373, %s25, %s24
      %p375 = scmp.lt.s32.totalorder %s23, 3
      %s376 = scalar_select %p375, %s23, 3
      %p377 = scmp.lt.s32.totalorder %s374, 0
      %s378 = scalar_select %p377, %s374, 0
      %s379 = sadd.s32 %s378, %s376
      %s380 = smul.addr %s379, 4
      %s381 = scalar_lea.vmem %s1, %s380
      %p382 = pneg %p92
      %p383 = pneg %p89
      %p384 = scmp.lt.s32.totalorder %s25, %s24
      %s385 = scalar_select %p384, %s25, %s24
      %p386 = scmp.lt.s32.totalorder %s23, 3
      %s387 = scalar_select %p386, %s23, 3
      %p388 = scmp.lt.s32.totalorder %s385, 0
      %s389 = scalar_select %p388, %s385, 0
      %s390 = sadd.s32 %s389, %s387
      %s391 = smul.addr %s390, 4
      %s392 = scalar_lea.vmem %s2, %s391
      %p393 = pneg %p124
      %p394 = pneg %p121
      %p395 = scmp.lt.s32.totalorder %s24, 0
      %s396 = scalar_select %p395, %s24, 0
      %s397 = smul.addr %s396, 8
      %s398 = scalar_lea.vmem %s3, %s397
      %p399 = pneg %p150
      %p400 = pneg %p147
      %p401 = scmp.lt.s32.totalorder %s24, 0
      %s402 = scalar_select %p401, %s24, 0
      %s403 = smul.addr %s402, 8
      %s404 = scalar_lea.vmem %s4, %s403
      %p405 = pneg %p176
      %p406 = pneg %p173
      %p407 = scmp.lt.s32.totalorder %s25, %s24
      %s408 = scalar_select %p407, %s25, %s24
      %p409 = scmp.lt.s32.totalorder %s408, 0
      %s410 = scalar_select %p409, %s408, 0
      %s411 = smul.addr %s410, 8
      %s412 = scalar_lea.vmem %s5, %s411
      %p413 = pneg %p206
      %p414 = pneg %p203
      %p415 = scmp.lt.s32.totalorder %s25, %s24
      %s416 = scalar_select %p415, %s25, %s24
      %p417 = scmp.lt.s32.totalorder %s416, 0
      %s418 = scalar_select %p417, %s416, 0
      %s419 = smul.addr %s418, 8
      %s420 = scalar_lea.vmem %s6, %s419
      %p421 = pneg %p236
      %p422 = pneg %p233
      %p423 = pneg %p264
      %p424 = pneg %p261
      %p425 = scmp.lt.s32.totalorder %s23, 3
      %s426 = scalar_select %p425, %s23, 3
      %p427 = scmp.lt.s32.totalorder %s24, 0
      %s428 = scalar_select %p427, %s24, 0
      %s429 = sadd.s32 %s428, %s426
      %s430 = smul.addr %s429, 4
      %s431 = scalar_lea.vmem %s7, %s430
      %p432 = scmp.lt.s32.totalorder %s23, 3
      %s433 = scalar_select %p432, %s23, 3
      %p434 = scmp.lt.s32.totalorder %s24, 0
      %s435 = scalar_select %p434, %s24, 0
      %s436 = sadd.s32 %s435, %s433
      %s437 = smul.addr %s436, 4
      %s438 = scalar_lea.vmem %s0, %s437
      %p439 = scmp.lt.s32.totalorder %s25, %s24
      %s440 = scalar_select %p439, %s25, %s24
      %p441 = scmp.lt.s32.totalorder %s23, 3
      %s442 = scalar_select %p441, %s23, 3
      %p443 = scmp.lt.s32.totalorder %s440, 0
      %s444 = scalar_select %p443, %s440, 0
      %s445 = sadd.s32 %s444, %s442
      %s446 = smul.addr %s445, 4
      %s447 = scalar_lea.vmem %s1, %s446
      %p448 = scmp.lt.s32.totalorder %s25, %s24
      %s449 = scalar_select %p448, %s25, %s24
      %p450 = scmp.lt.s32.totalorder %s25, %s24
      %s451 = scalar_select %p450, %s25, %s24
      %p452 = scmp.lt.s32.totalorder %s23, 3
      %s453 = scalar_select %p452, %s23, 3
      %p454 = scmp.lt.s32.totalorder %s451, 0
      %s455 = scalar_select %p454, %s451, 0
      %s456 = sadd.s32 %s455, %s453
      %s457 = smul.addr %s456, 4
      %s458 = scalar_lea.vmem %s2, %s457
      %p459 = scmp.lt.s32.totalorder %s25, %s24
      %s460 = scalar_select %p459, %s25, %s24
      %p461 = scmp.lt.s32.totalorder %s24, 0
      %s462 = scalar_select %p461, %s24, 0
      %s463 = smul.addr %s462, 8
      %s464 = scalar_lea.vmem %s3, %s463
      %p465 = scmp.lt.s32.totalorder %s24, 0
      %s466 = scalar_select %p465, %s24, 0
      %s467 = smul.addr %s466, 8
      %s468 = scalar_lea.vmem %s4, %s467
      %p469 = scmp.lt.s32.totalorder %s25, %s24
      %s470 = scalar_select %p469, %s25, %s24
      %p471 = scmp.lt.s32.totalorder %s470, 0
      %s472 = scalar_select %p471, %s470, 0
      %s473 = smul.addr %s472, 8
      %s474 = scalar_lea.vmem %s5, %s473
      %p475 = scmp.lt.s32.totalorder %s25, %s24
      %s476 = scalar_select %p475, %s25, %s24
      %p477 = scmp.lt.s32.totalorder %s25, %s24
      %s478 = scalar_select %p477, %s25, %s24
      %p479 = scmp.lt.s32.totalorder %s478, 0
      %s480 = scalar_select %p479, %s478, 0
      %s481 = smul.addr %s480, 8
      %s482 = scalar_lea.vmem %s6, %s481
      %p483 = scmp.lt.s32.totalorder %s25, %s24
      %s484 = scalar_select %p483, %s25, %s24
      %p485 = scmp.lt.s32.totalorder %s23, 3
      %s486 = scalar_select %p485, %s23, 3
      %p487 = scmp.lt.s32.totalorder %s24, 0
      %s488 = scalar_select %p487, %s24, 0
      %s489 = sadd.s32 %s488, %s486
      %s490 = smul.addr %s489, 4
      %s491 = scalar_lea.vmem %s7, %s490
      %p493 = scmp.eq.s32.totalorder %s25, 0
      // Predicated region
      $region49: #{transformer_forward.12} parent=47 // pred_check
        %p494 = pneg %p493
      $region50: #{transformer_forward.12} parent=47 // pred_check_branch
        %496 = sbr.rel (%p494) target = $region52
      $region51: #{transformer_forward.12} parent=47 // pred_region
        %vm497 = vcmask 7168
        %498 = vst.msk [vmem:[#allocation3] sm:$0xff] %vm497, -1e+30
        %499 = vst.msk [vmem:[#allocation4] sm:$0xff] %vm497, 0.0
        %500 = vst [vmem:[#allocation5] sm:$0xff] 0.0
        %v501 = vld [vmem:[%s438] sm:$0xf]
        %v502 = vunpack.c.l.bf16 %v501
        %v503 = vld [vmem:[%s464] sm:$0xff]
        %v504 = vmul.f32 %v502, %v503
        %505 = vrot.lane.b32.xlu0 %v502, 64
        %v506 = vpop.permute.xlu0 %505
        %v507 = vld [vmem:[%s468] sm:$0xff]
        %v508 = vmul.f32 %v506, %v507
        %v509 = vadd.f32 %v504, %v508
        %v510 = vmul.f32 %v509, 0.088388346
        %v511 = vpack.c.bf16 %v510, %v510
        %512 = vst [vmem:[#allocation2] sm:$0xf] %v511
      $region52: #{transformer_forward.12} parent=47 // pred_fallthru
        _
      %p513 = scmp.lt.s32.totalorder %s25, %s24
      // Predicated region
      $region53: #{transformer_forward.12} parent=47 // pred_check
        %p514 = pneg %p513
      $region54: #{transformer_forward.12} parent=47 // pred_check_branch
        %516 = sbr.rel (%p514) target = $region56
      $region55: #{transformer_forward.12} parent=47 // pred_region
        %v517 = vld [vmem:[%s447] sm:$0xf]
        %v518 = vunpack.c.l.bf16 %v517
        %v519 = vld [vmem:[%s474] sm:$0xff]
        %v520 = vmul.f32 %v518, %v519
        %521 = vrot.lane.b32.xlu0 %v518, 64
        %v522 = vpop.permute.xlu0 %521
        %v523 = vld [vmem:[%s482] sm:$0xff]
        %v524 = vmul.f32 %v522, %v523
        %v525 = vadd.f32 %v520, %v524
        %v526 = vpack.c.bf16 %v525, %v525
        %v527 = vld [vmem:[#allocation2] sm:$0xf]
        %528 = vmatpush.bf16.xpose.msra.mxu0 0
        %529 = vmatpush.bf16.xpose.msra.mxu0 0
        %530 = vmatpush.bf16.xpose.msra.mxu0 0
        %531 = vmatpush.bf16.xpose.msra.mxu0 0
        %532 = vmatpush.bf16.xpose.msra.mxu0 0
        %533 = vmatpush.bf16.xpose.msra.mxu0 0
        %534 = vmatpush.bf16.xpose.msra.mxu0 0
        %535 = vmatpush.bf16.xpose.msra.mxu0 %v526
        %536 = vmatmul.bf16.gmra.mxu0 %v527
        %v537 = vpop.f32.mrf.mxu0
        %v538 = vadd.f32 0.0, %v537
        %v539 = vpop.f32.mrf.mxu0
        %540 = vdwg.mxu0
        %v541 = vld [vmem:[#allocation3] sm:$0xff]
        %vm542 = vcmask 64512
        %v543 = vsel %vm542, %v538, -inf
        %544 = vmax.xlane.f32.xlu0 %v543
        %v545 = vpop.xlane.xlu0 %544
        %v546 = vmax.f32 %v541, %v545
        %v547 = vsub.f32 %v541, %v546
        %v548 = vmul.f32 %v547, 1.442695
        %v549 = vpow.pop %v548
        %551 = vset.pattern.permute.xlu0 0
        %552 = vperm.xlu0 %551, %v546
        %v553 = vpop.permute.xlu0 %552
        %v555 = vsub.f32 %v538, %v553
        %v556 = vmul.f32 %v555, 1.442695
        %v557 = vpow.pop %v556
        %v558 = vld [vmem:[#allocation4] sm:$0xff]
        %v559 = vmul.f32 %v549, %v558
        %v560 = vsel %vm542, %v557, 0.0
        %561 = vadd.xlane.f32.xlu0 %v560
        %v562 = vpop.xlane.xlu0 %561
        %v563 = vadd.f32 %v559, %v562
        %vm564 = vcmask 7168
        %565 = vst.msk [vmem:[#allocation4] sm:$0xff] %vm564, %v563
        %v566 = vld [vmem:[#allocation5] sm:$0xff]
        %568 = vset.pattern.permute.xlu0 0
        %569 = vperm.xlu0 %568, %v549
        %v570 = vpop.permute.xlu0 %569
        %v572 = vmul.f32 %v570, %v566
        %v573 = vpack.c.bf16 %v557, %v557
        %v574 = vld [vmem:[%s458] sm:$0xf]
        %v576 = vsel %vm542, %v573, 0
        %vm578 = vcmask 1043456
        %v580 = vsel %vm578, %v574, 0
        %582 = vmatpush.bf16.msra.mxu0 0
        %583 = vmatpush.bf16.msra.mxu0 0
        %584 = vmatpush.bf16.msra.mxu0 0
        %585 = vmatpush.bf16.msra.mxu0 0
        %586 = vmatpush.bf16.msra.mxu0 0
        %587 = vmatpush.bf16.msra.mxu0 0
        %588 = vmatpush.bf16.msra.mxu0 0
        %589 = vmatpush.bf16.msra.mxu0 %v580
        %590 = vmatmul.bf16.gmra.mxu0 %v576
        %v591 = vpop.f32.mrf.mxu0
        %v592 = vadd.f32 0.0, %v591
        %v593 = vpop.f32.mrf.mxu0
        %594 = vdwg.mxu0
        %v595 = vadd.f32 %v572, %v592
        %596 = vst [vmem:[#allocation5] sm:$0xff] %v595
        %597 = vst.msk [vmem:[#allocation3] sm:$0xff] %vm564, %v546
      $region56: #{transformer_forward.12} parent=47 // pred_fallthru
        _
      %p598 = scmp.eq.s32.totalorder %s25, %s24
      // Predicated region
      $region57: #{transformer_forward.12} parent=47 // pred_check
        %p599 = pneg %p598
      $region58: #{transformer_forward.12} parent=47 // pred_check_branch
        %601 = sbr.rel (%p599) target = $region60
      $region59: #{transformer_forward.12} parent=47 // pred_region
        %v602 = vld [vmem:[%s447] sm:$0xf]
        %v603 = vunpack.c.l.bf16 %v602
        %v604 = vld [vmem:[%s474] sm:$0xff]
        %v605 = vmul.f32 %v603, %v604
        %606 = vrot.lane.b32.xlu0 %v603, 64
        %v607 = vpop.permute.xlu0 %606
        %v608 = vld [vmem:[%s482] sm:$0xff]
        %v609 = vmul.f32 %v607, %v608
        %v610 = vadd.f32 %v605, %v609
        %v611 = vpack.c.bf16 %v610, %v610
        %v612 = vld [vmem:[#allocation2] sm:$0xf]
        %613 = vmatpush.bf16.xpose.msra.mxu0 0
        %614 = vmatpush.bf16.xpose.msra.mxu0 0
        %615 = vmatpush.bf16.xpose.msra.mxu0 0
        %616 = vmatpush.bf16.xpose.msra.mxu0 0
        %617 = vmatpush.bf16.xpose.msra.mxu0 0
        %618 = vmatpush.bf16.xpose.msra.mxu0 0
        %619 = vmatpush.bf16.xpose.msra.mxu0 0
        %620 = vmatpush.bf16.xpose.msra.mxu0 %v611
        %621 = vmatmul.bf16.gmra.mxu0 %v612
        %v622 = vpop.f32.mrf.mxu0
        %v623 = vadd.f32 0.0, %v622
        %v624 = vpop.f32.mrf.mxu0
        %625 = vdwg.mxu0
        %s626 = smul.u32 %s24, 8
        %v627 = vlaneseq
        %v628 = vshrl.u32 %v627, 7
        %v629 = vstv %s626
        %v630 = vadd.s32 %v629, %v628
        %s631 = smul.u32 %s25, 8
        %v632 = vlaneseq
        %v633 = vand.u32 %v632, 127
        %v634 = vstv %s631
        %v635 = vadd.s32 %v634, %v633
        %vm636 = vcmp.le.s32.totalorder %v635, %v630
        %v637 = vsel %vm636, %v623, -1e+30
        %v638 = vld [vmem:[#allocation3] sm:$0xff]
        %vm639 = vcmask 64512
        %v640 = vsel %vm639, %v637, -inf
        %641 = vmax.xlane.f32.xlu0 %v640
        %v642 = vpop.xlane.xlu0 %641
        %v643 = vmax.f32 %v638, %v642
        %v644 = vsub.f32 %v638, %v643
        %v645 = vmul.f32 %v644, 1.442695
        %v646 = vpow.pop %v645
        %648 = vset.pattern.permute.xlu0 0
        %649 = vperm.xlu0 %648, %v643
        %v650 = vpop.permute.xlu0 %649
        %v652 = vsub.f32 %v637, %v650
        %v653 = vmul.f32 %v652, 1.442695
        %v654 = vpow.pop %v653
        %v655 = vld [vmem:[#allocation4] sm:$0xff]
        %v656 = vmul.f32 %v646, %v655
        %v657 = vsel %vm639, %v654, 0.0
        %658 = vadd.xlane.f32.xlu0 %v657
        %v659 = vpop.xlane.xlu0 %658
        %v660 = vadd.f32 %v656, %v659
        %vm661 = vcmask 7168
        %662 = vst.msk [vmem:[#allocation4] sm:$0xff] %vm661, %v660
        %v663 = vld [vmem:[#allocation5] sm:$0xff]
        %665 = vset.pattern.permute.xlu0 0
        %666 = vperm.xlu0 %665, %v646
        %v667 = vpop.permute.xlu0 %666
        %v669 = vmul.f32 %v667, %v663
        %v670 = vpack.c.bf16 %v654, %v654
        %v671 = vld [vmem:[%s458] sm:$0xf]
        %v673 = vsel %vm639, %v670, 0
        %vm675 = vcmask 1043456
        %v677 = vsel %vm675, %v671, 0
        %679 = vmatpush.bf16.msra.mxu0 0
        %680 = vmatpush.bf16.msra.mxu0 0
        %681 = vmatpush.bf16.msra.mxu0 0
        %682 = vmatpush.bf16.msra.mxu0 0
        %683 = vmatpush.bf16.msra.mxu0 0
        %684 = vmatpush.bf16.msra.mxu0 0
        %685 = vmatpush.bf16.msra.mxu0 0
        %686 = vmatpush.bf16.msra.mxu0 %v677
        %687 = vmatmul.bf16.gmra.mxu0 %v673
        %v688 = vpop.f32.mrf.mxu0
        %v689 = vadd.f32 0.0, %v688
        %v690 = vpop.f32.mrf.mxu0
        %691 = vdwg.mxu0
        %v692 = vadd.f32 %v669, %v689
        %693 = vst [vmem:[#allocation5] sm:$0xff] %v692
        %694 = vst.msk [vmem:[#allocation3] sm:$0xff] %vm661, %v643
      $region60: #{transformer_forward.12} parent=47 // pred_fallthru
        _
      // Predicated region
      $region61: #{transformer_forward.12} parent=47 // pred_check
        %p695 = pneg %p493
      $region62: #{transformer_forward.12} parent=47 // pred_check_branch
        %697 = sbr.rel (%p695) target = $region64
      $region63: #{transformer_forward.12} parent=47 // pred_region
        %v698 = vld [vmem:[#allocation4] sm:$0xff]
        %v699 = vrcp.pop %v698
        %v700 = vld [vmem:[#allocation5] sm:$0xff]
        %702 = vset.pattern.permute.xlu0 0
        %703 = vperm.xlu0 %702, %v699
        %v704 = vpop.permute.xlu0 %703
        %v706 = vmul.f32 %v700, %v704
        %v707 = vpack.c.bf16 %v706, %v706
        %708 = vst [vmem:[%s491] sm:$0xf] %v707
      $region64: #{transformer_forward.12} parent=47 // pred_fallthru
        _
      %p709 = scmp.lt.s32.totalorder %s23, 3
      %s710 = scalar_select %p709, %s23, 3
      %p711 = scmp.lt.s32.totalorder %s24, 0
      %s712 = scalar_select %p711, %s24, 0
      %s713 = sadd.s32 %s712, %s710
      %s714 = smul.addr %s713, 4
      %s715 = scalar_lea.vmem %s7, %s714
      // Predicated region
      $region65: #{transformer_forward.12} parent=47 // pred_check
        %p716 = pneg %p261
      $region66: #{transformer_forward.12} parent=47 // pred_check_branch
        %718 = sbr.rel (%p716) target = $region68
      $region67: #{transformer_forward.12} parent=47 // pred_region
        _
      $region68: #{transformer_forward.12} parent=47 // pred_fallthru
        _
    $region48: #{transformer_forward.12} parent=5 // pred_fallthru
      _
    %p719 = scmp.le.s32.totalorder 2, %s13
    // Predicated region
    $region69: #{transformer_forward.12} parent=5 // pred_check
      %p720 = pneg %p719
    $region70: #{transformer_forward.12} parent=5 // pred_check_branch
      %722 = sbr.rel (%p720) target = $region72
    $region71: #{transformer_forward.12} parent=5 // pred_region
      %s723 = ssub.s32 %s13, 2
      // Predicated region
      $region73: #{transformer_forward.12} parent=71 // pred_check
        %p724 = pneg %p267
      $region74: #{transformer_forward.12} parent=71 // pred_check_branch
        %726 = sbr.rel (%p724) target = $region76
      $region75: #{transformer_forward.12} parent=71 // pred_region
        %p727 = scmp.lt.s32.totalorder %s26, 3
        %s728 = scalar_select %p727, %s26, 3
        %p729 = scmp.lt.s32.totalorder %s27, 0
        %s730 = scalar_select %p729, %s27, 0
        %s731 = sadd.s32 %s730, %s728
        %s732 = smul.addr %s731, 4
        %s733 = scalar_lea.vmem %s7, %s732
      $region76: #{transformer_forward.12} parent=71 // pred_fallthru
        _
    $region72: #{transformer_forward.12} parent=5 // pred_fallthru
      _
  $region6: #{transformer_forward.12} parent=0 // loop_footer
    %s17 = sadd.s32 1, %s13
  $region7: #{transformer_forward.12} parent=0 // loop_footer_branch
    %12 = sbr.rel target = $region3
  $region8: #{transformer_forward.12} parent=0 // loop_exit
    _

// kernel: transformer_forward.15
$region0: #{transformer_forward.15}
  #allocation0 [shape = 'u32[]', space=smem, size = 0x4, offset = 0x4, fixed_abs, tag = 'smem constant byte address 0x4 - core index']
  #allocation1 [shape = 'u32[72,128]{1,0:T(1,128)}', space=vmem, size = 0x9000, scoped, tag = 'internal scratch']
  #allocation2 [shape = 'f32[16,256]{1,0:T(8,128)}', space=vmem, size = 0x4000, scoped, tag = 'scratch operand']
  %s0 = inlined_call_operand.vmem [shape: bf16[16,512], index: 0, kind: input, shape index: {}]
  %s1 = inlined_call_operand.hbm [shape: bf16[512,256], index: 1, kind: input, shape index: {}]
  %s2 = inlined_call_operand.vmem [shape: bf16[16,256], index: 2, kind: input, shape index: {}]
  %s3 = inlined_call_operand.vmem [shape: bf16[16,256], index: 3, kind: output, shape index: {}]
  %s4 = sld [smem:[#allocation0]]
  $region34: #{transformer_forward.15} parent=0
    _
  %s6 = ssub.s32 1, %s4
  %s7 = scalar_select 0, %s6, %s4
  $region1: #{transformer_forward.15} parent=0
    #allocation3 [shape = 'u8[262144]{0}', space=vmem, size = 0x40000, scoped, tag = 'input window, operand 1, single buffered']
    #allocation4 [shape = 's32[1]{0}', space=sflag, size = 0x4, scoped, tag = 'scoped memory for transformer_forward.15']
    %8 = vsyncpa [#allocation4], 0
    // Predicated region
    $region2: #{transformer_forward.15} parent=1 // pred_check
      _
    $region3: #{transformer_forward.15} parent=1 // pred_check_branch
      %10 = sbr.rel (0) target = $region5
    $region4: #{transformer_forward.15} parent=1 // pred_region
      _
    $region5: #{transformer_forward.15} parent=1 // pred_fallthru
      _
    // Predicated region
    $region6: #{transformer_forward.15} parent=1 // pred_check
      _
    $region7: #{transformer_forward.15} parent=1 // pred_check_branch
      %12 = sbr.rel (0) target = $region9
    $region8: #{transformer_forward.15} parent=1 // pred_region
      %14 = vsyncadd [#allocation4], 0
      %s15 = sshll.u32 %s1, 4
      %s16 = int_to_ptr.hbm [resolvable:$true] %s15
      %s17 = sshll.u32 [#allocation3], 4
      %s18 = int_to_ptr.vmem [resolvable:$true] %s17
      %23 = dma.hbm_to_vmem [thread:$0]  %s16, 8192, %s18, [#allocation4], 128, 128, 8
    $region9: #{transformer_forward.15} parent=1 // pred_fallthru
      _
    // Predicated region
    $region10: #{transformer_forward.15} parent=1 // pred_check
      _
    $region11: #{transformer_forward.15} parent=1 // pred_check_branch
      %25 = sbr.rel (0) target = $region13
    $region12: #{transformer_forward.15} parent=1 // pred_region
      _
    $region13: #{transformer_forward.15} parent=1 // pred_fallthru
      _
    // Predicated region
    $region14: #{transformer_forward.15} parent=1 // pred_check
      _
    $region15: #{transformer_forward.15} parent=1 // pred_check_branch
      %27 = sbr.rel (0) target = $region17
    $region16: #{transformer_forward.15} parent=1 // pred_region
      %29 = dma.done [#allocation4], 8192
    $region17: #{transformer_forward.15} parent=1 // pred_fallthru
      _
    %p30 = scmp.eq.s32.totalorder 0, 0
    // Predicated region
    $region18: #{transformer_forward.15} parent=1 // pred_check
      %p31 = pneg %p30
    $region19: #{transformer_forward.15} parent=1 // pred_check_branch
      %33 = sbr.rel (%p31) target = $region21
    $region20: #{transformer_forward.15} parent=1 // pred_region
      %34 = vst [vmem:[#allocation2] sm:$0xff] 0.0
      %35 = vst [vmem:[#allocation2 + $0x8] sm:$0xff] 0.0
      %36 = vst [vmem:[#allocation2 + $0x10] sm:$0xff] 0.0
      %37 = vst [vmem:[#allocation2 + $0x18] sm:$0xff] 0.0
    $region21: #{transformer_forward.15} parent=1 // pred_fallthru
      _
    %v38 = vld [vmem:[#allocation2] sm:$0xff]
    %v39 = vld [vmem:[#allocation2 + $0x8] sm:$0xff]
    %v40 = vld [vmem:[#allocation2 + $0x10] sm:$0xff]
    %v41 = vld [vmem:[#allocation2 + $0x18] sm:$0xff]
    %v42 = vld [vmem:[%s0] sm:$0xff]
    %v43 = vld [vmem:[%s0 + $0x8] sm:$0xff]
    %v44 = vld [vmem:[%s0 + $0x10] sm:$0xff]
    %v45 = vld [vmem:[%s0 + $0x18] sm:$0xff]
    %v46 = vld [vmem:[#allocation3] sm:$0xff]
    %v47 = vld [vmem:[#allocation3 + $0x8] sm:$0xff]
    %v48 = vld [vmem:[#allocation3 + $0x10] sm:$0xff]
    %v49 = vld [vmem:[#allocation3 + $0x18] sm:$0xff]
    %v50 = vld [vmem:[#allocation3 + $0x20] sm:$0xff]
    %v51 = vld [vmem:[#allocation3 + $0x28] sm:$0xff]
    %v52 = vld [vmem:[#allocation3 + $0x30] sm:$0xff]
    %v53 = vld [vmem:[#allocation3 + $0x38] sm:$0xff]
    %v54 = vld [vmem:[#allocation3 + $0x40] sm:$0xff]
    %v55 = vld [vmem:[#allocation3 + $0x48] sm:$0xff]
    %v56 = vld [vmem:[#allocation3 + $0x50] sm:$0xff]
    %v57 = vld [vmem:[#allocation3 + $0x58] sm:$0xff]
    %v58 = vld [vmem:[#allocation3 + $0x60] sm:$0xff]
    %v59 = vld [vmem:[#allocation3 + $0x68] sm:$0xff]
    %v60 = vld [vmem:[#allocation3 + $0x70] sm:$0xff]
    %v61 = vld [vmem:[#allocation3 + $0x78] sm:$0xff]
    %v62 = vld [vmem:[#allocation3 + $0x80] sm:$0xff]
    %v63 = vld [vmem:[#allocation3 + $0x88] sm:$0xff]
    %v64 = vld [vmem:[#allocation3 + $0x90] sm:$0xff]
    %v65 = vld [vmem:[#allocation3 + $0x98] sm:$0xff]
    %v66 = vld [vmem:[#allocation3 + $0xa0] sm:$0xff]
    %v67 = vld [vmem:[#allocation3 + $0xa8] sm:$0xff]
    %v68 = vld [vmem:[#allocation3 + $0xb0] sm:$0xff]
    %v69 = vld [vmem:[#allocation3 + $0xb8] sm:$0xff]
    %v70 = vld [vmem:[#allocation3 + $0xc0] sm:$0xff]
    %v71 = vld [vmem:[#allocation3 + $0xc8] sm:$0xff]
    %v72 = vld [vmem:[#allocation3 + $0xd0] sm:$0xff]
    %v73 = vld [vmem:[#allocation3 + $0xd8] sm:$0xff]
    %v74 = vld [vmem:[#allocation3 + $0xe0] sm:$0xff]
    %v75 = vld [vmem:[#allocation3 + $0xe8] sm:$0xff]
    %v76 = vld [vmem:[#allocation3 + $0xf0] sm:$0xff]
    %v77 = vld [vmem:[#allocation3 + $0xf8] sm:$0xff]
    %v78 = vld [vmem:[#allocation3 + $0x100] sm:$0xff]
    %v79 = vld [vmem:[#allocation3 + $0x108] sm:$0xff]
    %v80 = vld [vmem:[#allocation3 + $0x110] sm:$0xff]
    %v81 = vld [vmem:[#allocation3 + $0x118] sm:$0xff]
    %v82 = vld [vmem:[#allocation3 + $0x120] sm:$0xff]
    %v83 = vld [vmem:[#allocation3 + $0x128] sm:$0xff]
    %v84 = vld [vmem:[#allocation3 + $0x130] sm:$0xff]
    %v85 = vld [vmem:[#allocation3 + $0x138] sm:$0xff]
    %v86 = vld [vmem:[#allocation3 + $0x140] sm:$0xff]
    %v87 = vld [vmem:[#allocation3 + $0x148] sm:$0xff]
    %v88 = vld [vmem:[#allocation3 + $0x150] sm:$0xff]
    %v89 = vld [vmem:[#allocation3 + $0x158] sm:$0xff]
    %v90 = vld [vmem:[#allocation3 + $0x160] sm:$0xff]
    %v91 = vld [vmem:[#allocation3 + $0x168] sm:$0xff]
    %v92 = vld [vmem:[#allocation3 + $0x170] sm:$0xff]
    %v93 = vld [vmem:[#allocation3 + $0x178] sm:$0xff]
    %v94 = vld [vmem:[#allocation3 + $0x180] sm:$0xff]
    %v95 = vld [vmem:[#allocation3 + $0x188] sm:$0xff]
    %v96 = vld [vmem:[#allocation3 + $0x190] sm:$0xff]
    %v97 = vld [vmem:[#allocation3 + $0x198] sm:$0xff]
    %v98 = vld [vmem:[#allocation3 + $0x1a0] sm:$0xff]
    %v99 = vld [vmem:[#allocation3 + $0x1a8] sm:$0xff]
    %v100 = vld [vmem:[#allocation3 + $0x1b0] sm:$0xff]
    %v101 = vld [vmem:[#allocation3 + $0x1b8] sm:$0xff]
    %v102 = vld [vmem:[#allocation3 + $0x1c0] sm:$0xff]
    %v103 = vld [vmem:[#allocation3 + $0x1c8] sm:$0xff]
    %v104 = vld [vmem:[#allocation3 + $0x1d0] sm:$0xff]
    %v105 = vld [vmem:[#allocation3 + $0x1d8] sm:$0xff]
    %v106 = vld [vmem:[#allocation3 + $0x1e0] sm:$0xff]
    %v107 = vld [vmem:[#allocation3 + $0x1e8] sm:$0xff]
    %v108 = vld [vmem:[#allocation3 + $0x1f0] sm:$0xff]
    %v109 = vld [vmem:[#allocation3 + $0x1f8] sm:$0xff]
    %v114 = vunpack.c.l.b16 %v42
    %v115 = vunpack.c.h.b16 %v42
    %v116 = vunpack.c.l.b16 %v43
    %v117 = vunpack.c.h.b16 %v43
    %v118 = vunpack.c.l.b16 %v44
    %v119 = vunpack.c.h.b16 %v44
    %v120 = vunpack.c.l.b16 %v45
    %v121 = vunpack.c.h.b16 %v45
    %v122 = vpack.c.b16 %v118, %v114
    %v123 = vpack.c.b16 %v119, %v115
    %v124 = vpack.c.b16 %v120, %v116
    %v125 = vpack.c.b16 %v121, %v117
    %v194 = vunpack.c.l.b16 %v46
    %v195 = vunpack.c.h.b16 %v46
    %v196 = vunpack.c.l.b16 %v47
    %v197 = vunpack.c.h.b16 %v47
    %v198 = vunpack.c.l.b16 %v48
    %v199 = vunpack.c.h.b16 %v48
    %v200 = vunpack.c.l.b16 %v49
    %v201 = vunpack.c.h.b16 %v49
    %v202 = vunpack.c.l.b16 %v50
    %v203 = vunpack.c.h.b16 %v50
    %v204 = vunpack.c.l.b16 %v51
    %v205 = vunpack.c.h.b16 %v51
    %v206 = vunpack.c.l.b16 %v52
    %v207 = vunpack.c.h.b16 %v52
    %v208 = vunpack.c.l.b16 %v53
    %v209 = vunpack.c.h.b16 %v53
    %v210 = vunpack.c.l.b16 %v54
    %v211 = vunpack.c.h.b16 %v54
    %v212 = vunpack.c.l.b16 %v55
    %v213 = vunpack.c.h.b16 %v55
    %v214 = vunpack.c.l.b16 %v56
    %v215 = vunpack.c.h.b16 %v56
    %v216 = vunpack.c.l.b16 %v57
    %v217 = vunpack.c.h.b16 %v57
    %v218 = vunpack.c.l.b16 %v58
    %v219 = vunpack.c.h.b16 %v58
    %v220 = vunpack.c.l.b16 %v59
    %v221 = vunpack.c.h.b16 %v59
    %v222 = vunpack.c.l.b16 %v60
    %v223 = vunpack.c.h.b16 %v60
    %v224 = vunpack.c.l.b16 %v61
    %v225 = vunpack.c.h.b16 %v61
    %v226 = vunpack.c.l.b16 %v62
    %v227 = vunpack.c.h.b16 %v62
    %v228 = vunpack.c.l.b16 %v63
    %v229 = vunpack.c.h.b16 %v63
    %v230 = vunpack.c.l.b16 %v64
    %v231 = vunpack.c.h.b16 %v64
    %v232 = vunpack.c.l.b16 %v65
    %v233 = vunpack.c.h.b16 %v65
    %v234 = vunpack.c.l.b16 %v66
    %v235 = vunpack.c.h.b16 %v66
    %v236 = vunpack.c.l.b16 %v67
    %v237 = vunpack.c.h.b16 %v67
    %v238 = vunpack.c.l.b16 %v68
    %v239 = vunpack.c.h.b16 %v68
    %v240 = vunpack.c.l.b16 %v69
    %v241 = vunpack.c.h.b16 %v69
    %v242 = vunpack.c.l.b16 %v70
    %v243 = vunpack.c.h.b16 %v70
    %v244 = vunpack.c.l.b16 %v71
    %v245 = vunpack.c.h.b16 %v71
    %v246 = vunpack.c.l.b16 %v72
    %v247 = vunpack.c.h.b16 %v72
    %v248 = vunpack.c.l.b16 %v73
    %v249 = vunpack.c.h.b16 %v73
    %v250 = vunpack.c.l.b16 %v74
    %v251 = vunpack.c.h.b16 %v74
    %v252 = vunpack.c.l.b16 %v75
    %v253 = vunpack.c.h.b16 %v75
    %v254 = vunpack.c.l.b16 %v76
    %v255 = vunpack.c.h.b16 %v76
    %v256 = vunpack.c.l.b16 %v77
    %v257 = vunpack.c.h.b16 %v77
    %v258 = vunpack.c.l.b16 %v78
    %v259 = vunpack.c.h.b16 %v78
    %v260 = vunpack.c.l.b16 %v79
    %v261 = vunpack.c.h.b16 %v79
    %v262 = vunpack.c.l.b16 %v80
    %v263 = vunpack.c.h.b16 %v80
    %v264 = vunpack.c.l.b16 %v81
    %v265 = vunpack.c.h.b16 %v81
    %v266 = vunpack.c.l.b16 %v82
    %v267 = vunpack.c.h.b16 %v82
    %v268 = vunpack.c.l.b16 %v83
    %v269 = vunpack.c.h.b16 %v83
    %v270 = vunpack.c.l.b16 %v84
    %v271 = vunpack.c.h.b16 %v84
    %v272 = vunpack.c.l.b16 %v85
    %v273 = vunpack.c.h.b16 %v85
    %v274 = vunpack.c.l.b16 %v86
    %v275 = vunpack.c.h.b16 %v86
    %v276 = vunpack.c.l.b16 %v87
    %v277 = vunpack.c.h.b16 %v87
    %v278 = vunpack.c.l.b16 %v88
    %v279 = vunpack.c.h.b16 %v88
    %v280 = vunpack.c.l.b16 %v89
    %v281 = vunpack.c.h.b16 %v89
    %v282 = vunpack.c.l.b16 %v90
    %v283 = vunpack.c.h.b16 %v90
    %v284 = vunpack.c.l.b16 %v91
    %v285 = vunpack.c.h.b16 %v91
    %v286 = vunpack.c.l.b16 %v92
    %v287 = vunpack.c.h.b16 %v92
    %v288 = vunpack.c.l.b16 %v93
    %v289 = vunpack.c.h.b16 %v93
    %v290 = vunpack.c.l.b16 %v94
    %v291 = vunpack.c.h.b16 %v94
    %v292 = vunpack.c.l.b16 %v95
    %v293 = vunpack.c.h.b16 %v95
    %v294 = vunpack.c.l.b16 %v96
    %v295 = vunpack.c.h.b16 %v96
    %v296 = vunpack.c.l.b16 %v97
    %v297 = vunpack.c.h.b16 %v97
    %v298 = vunpack.c.l.b16 %v98
    %v299 = vunpack.c.h.b16 %v98
    %v300 = vunpack.c.l.b16 %v99
    %v301 = vunpack.c.h.b16 %v99
    %v302 = vunpack.c.l.b16 %v100
    %v303 = vunpack.c.h.b16 %v100
    %v304 = vunpack.c.l.b16 %v101
    %v305 = vunpack.c.h.b16 %v101
    %v306 = vunpack.c.l.b16 %v102
    %v307 = vunpack.c.h.b16 %v102
    %v308 = vunpack.c.l.b16 %v103
    %v309 = vunpack.c.h.b16 %v103
    %v310 = vunpack.c.l.b16 %v104
    %v311 = vunpack.c.h.b16 %v104
    %v312 = vunpack.c.l.b16 %v105
    %v313 = vunpack.c.h.b16 %v105
    %v314 = vunpack.c.l.b16 %v106
    %v315 = vunpack.c.h.b16 %v106
    %v316 = vunpack.c.l.b16 %v107
    %v317 = vunpack.c.h.b16 %v107
    %v318 = vunpack.c.l.b16 %v108
    %v319 = vunpack.c.h.b16 %v108
    %v320 = vunpack.c.l.b16 %v109
    %v321 = vunpack.c.h.b16 %v109
    %v322 = vpack.c.b16 %v196, %v194
    %v323 = vpack.c.b16 %v197, %v195
    %v324 = vpack.c.b16 %v200, %v198
    %v325 = vpack.c.b16 %v201, %v199
    %v326 = vpack.c.b16 %v204, %v202
    %v327 = vpack.c.b16 %v205, %v203
    %v328 = vpack.c.b16 %v208, %v206
    %v329 = vpack.c.b16 %v209, %v207
    %v330 = vpack.c.b16 %v212, %v210
    %v331 = vpack.c.b16 %v213, %v211
    %v332 = vpack.c.b16 %v216, %v214
    %v333 = vpack.c.b16 %v217, %v215
    %v334 = vpack.c.b16 %v220, %v218
    %v335 = vpack.c.b16 %v221, %v219
    %v336 = vpack.c.b16 %v224, %v222
    %v337 = vpack.c.b16 %v225, %v223
    %v338 = vpack.c.b16 %v228, %v226
    %v339 = vpack.c.b16 %v229, %v227
    %v340 = vpack.c.b16 %v232, %v230
    %v341 = vpack.c.b16 %v233, %v231
    %v342 = vpack.c.b16 %v236, %v234
    %v343 = vpack.c.b16 %v237, %v235
    %v344 = vpack.c.b16 %v240, %v238
    %v345 = vpack.c.b16 %v241, %v239
    %v346 = vpack.c.b16 %v244, %v242
    %v347 = vpack.c.b16 %v245, %v243
    %v348 = vpack.c.b16 %v248, %v246
    %v349 = vpack.c.b16 %v249, %v247
    %v350 = vpack.c.b16 %v252, %v250
    %v351 = vpack.c.b16 %v253, %v251
    %v352 = vpack.c.b16 %v256, %v254
    %v353 = vpack.c.b16 %v257, %v255
    %v354 = vpack.c.b16 %v260, %v258
    %v355 = vpack.c.b16 %v261, %v259
    %v356 = vpack.c.b16 %v264, %v262
    %v357 = vpack.c.b16 %v265, %v263
    %v358 = vpack.c.b16 %v268, %v266
    %v359 = vpack.c.b16 %v269, %v267
    %v360 = vpack.c.b16 %v272, %v270
    %v361 = vpack.c.b16 %v273, %v271
    %v362 = vpack.c.b16 %v276, %v274
    %v363 = vpack.c.b16 %v277, %v275
    %v364 = vpack.c.b16 %v280, %v278
    %v365 = vpack.c.b16 %v281, %v279
    %v366 = vpack.c.b16 %v284, %v282
    %v367 = vpack.c.b16 %v285, %v283
    %v368 = vpack.c.b16 %v288, %v286
    %v369 = vpack.c.b16 %v289, %v287
    %v370 = vpack.c.b16 %v292, %v290
    %v371 = vpack.c.b16 %v293, %v291
    %v372 = vpack.c.b16 %v296, %v294
    %v373 = vpack.c.b16 %v297, %v295
    %v374 = vpack.c.b16 %v300, %v298
    %v375 = vpack.c.b16 %v301, %v299
    %v376 = vpack.c.b16 %v304, %v302
    %v377 = vpack.c.b16 %v305, %v303
    %v378 = vpack.c.b16 %v308, %v306
    %v379 = vpack.c.b16 %v309, %v307
    %v380 = vpack.c.b16 %v312, %v310
    %v381 = vpack.c.b16 %v313, %v311
    %v382 = vpack.c.b16 %v316, %v314
    %v383 = vpack.c.b16 %v317, %v315
    %v384 = vpack.c.b16 %v320, %v318
    %v385 = vpack.c.b16 %v321, %v319
    %450 = vmatpush.bf16.msra.mxu0 %v336
    %451 = vmatpush.bf16.msra.mxu0 %v334
    %452 = vmatpush.bf16.msra.mxu0 %v332
    %453 = vmatpush.bf16.msra.mxu0 %v330
    %454 = vmatpush.bf16.msra.mxu0 %v328
    %455 = vmatpush.bf16.msra.mxu0 %v326
    %456 = vmatpush.bf16.msra.mxu0 %v324
    %457 = vmatpush.bf16.msra.mxu0 %v322
    %458 = vmatmul.bf16.gmra.mxu0 %v122
    %v459 = vpop.f32.mrf.mxu0
    %v460 = vadd.f32 0.0, %v459
    %v461 = vpop.f32.mrf.mxu0
    %v462 = vadd.f32 0.0, %v461
    %463 = vdwg.mxu0
    %464 = vmatpush.bf16.msra.mxu0 %v352
    %465 = vmatpush.bf16.msra.mxu0 %v350
    %466 = vmatpush.bf16.msra.mxu0 %v348
    %467 = vmatpush.bf16.msra.mxu0 %v346
    %468 = vmatpush.bf16.msra.mxu0 %v344
    %469 = vmatpush.bf16.msra.mxu0 %v342
    %470 = vmatpush.bf16.msra.mxu0 %v340
    %471 = vmatpush.bf16.msra.mxu0 %v338
    %472 = vmatmul.bf16.gmra.mxu0 %v123
    %v473 = vpop.f32.mrf.mxu0
    %v474 = vadd.f32 %v460, %v473
    %v475 = vpop.f32.mrf.mxu0
    %v476 = vadd.f32 %v462, %v475
    %477 = vdwg.mxu0
    %478 = vmatpush.bf16.msra.mxu0 %v368
    %479 = vmatpush.bf16.msra.mxu0 %v366
    %480 = vmatpush.bf16.msra.mxu0 %v364
    %481 = vmatpush.bf16.msra.mxu0 %v362
    %482 = vmatpush.bf16.msra.mxu0 %v360
    %483 = vmatpush.bf16.msra.mxu0 %v358
    %484 = vmatpush.bf16.msra.mxu0 %v356
    %485 = vmatpush.bf16.msra.mxu0 %v354
    %486 = vmatmul.bf16.gmra.mxu0 %v124
    %v487 = vpop.f32.mrf.mxu0
    %v488 = vadd.f32 %v474, %v487
    %v489 = vpop.f32.mrf.mxu0
    %v490 = vadd.f32 %v476, %v489
    %491 = vdwg.mxu0
    %492 = vmatpush.bf16.msra.mxu0 %v384
    %493 = vmatpush.bf16.msra.mxu0 %v382
    %494 = vmatpush.bf16.msra.mxu0 %v380
    %495 = vmatpush.bf16.msra.mxu0 %v378
    %496 = vmatpush.bf16.msra.mxu0 %v376
    %497 = vmatpush.bf16.msra.mxu0 %v374
    %498 = vmatpush.bf16.msra.mxu0 %v372
    %499 = vmatpush.bf16.msra.mxu0 %v370
    %500 = vmatmul.bf16.gmra.mxu0 %v125
    %v501 = vpop.f32.mrf.mxu0
    %v502 = vadd.f32 %v488, %v501
    %v503 = vpop.f32.mrf.mxu0
    %v504 = vadd.f32 %v490, %v503
    %505 = vdwg.mxu0
    %506 = vmatpush.bf16.msra.mxu0 %v337
    %507 = vmatpush.bf16.msra.mxu0 %v335
    %508 = vmatpush.bf16.msra.mxu0 %v333
    %509 = vmatpush.bf16.msra.mxu0 %v331
    %510 = vmatpush.bf16.msra.mxu0 %v329
    %511 = vmatpush.bf16.msra.mxu0 %v327
    %512 = vmatpush.bf16.msra.mxu0 %v325
    %513 = vmatpush.bf16.msra.mxu0 %v323
    %514 = vmatmul.bf16.gmra.mxu0 %v122
    %v515 = vpop.f32.mrf.mxu0
    %v516 = vadd.f32 0.0, %v515
    %v517 = vpop.f32.mrf.mxu0
    %v518 = vadd.f32 0.0, %v517
    %519 = vdwg.mxu0
    %520 = vmatpush.bf16.msra.mxu0 %v353
    %521 = vmatpush.bf16.msra.mxu0 %v351
    %522 = vmatpush.bf16.msra.mxu0 %v349
    %523 = vmatpush.bf16.msra.mxu0 %v347
    %524 = vmatpush.bf16.msra.mxu0 %v345
    %525 = vmatpush.bf16.msra.mxu0 %v343
    %526 = vmatpush.bf16.msra.mxu0 %v341
    %527 = vmatpush.bf16.msra.mxu0 %v339
    %528 = vmatmul.bf16.gmra.mxu0 %v123
    %v529 = vpop.f32.mrf.mxu0
    %v530 = vadd.f32 %v516, %v529
    %v531 = vpop.f32.mrf.mxu0
    %v532 = vadd.f32 %v518, %v531
    %533 = vdwg.mxu0
    %534 = vmatpush.bf16.msra.mxu0 %v369
    %535 = vmatpush.bf16.msra.mxu0 %v367
    %536 = vmatpush.bf16.msra.mxu0 %v365
    %537 = vmatpush.bf16.msra.mxu0 %v363
    %538 = vmatpush.bf16.msra.mxu0 %v361
    %539 = vmatpush.bf16.msra.mxu0 %v359
    %540 = vmatpush.bf16.msra.mxu0 %v357
    %541 = vmatpush.bf16.msra.mxu0 %v355
    %542 = vmatmul.bf16.gmra.mxu0 %v124
    %v543 = vpop.f32.mrf.mxu0
    %v544 = vadd.f32 %v530, %v543
    %v545 = vpop.f32.mrf.mxu0
    %v546 = vadd.f32 %v532, %v545
    %547 = vdwg.mxu0
    %548 = vmatpush.bf16.msra.mxu0 %v385
    %549 = vmatpush.bf16.msra.mxu0 %v383
    %550 = vmatpush.bf16.msra.mxu0 %v381
    %551 = vmatpush.bf16.msra.mxu0 %v379
    %552 = vmatpush.bf16.msra.mxu0 %v377
    %553 = vmatpush.bf16.msra.mxu0 %v375
    %554 = vmatpush.bf16.msra.mxu0 %v373
    %555 = vmatpush.bf16.msra.mxu0 %v371
    %556 = vmatmul.bf16.gmra.mxu0 %v125
    %v557 = vpop.f32.mrf.mxu0
    %v558 = vadd.f32 %v544, %v557
    %v559 = vpop.f32.mrf.mxu0
    %v560 = vadd.f32 %v546, %v559
    %561 = vdwg.mxu0
    %v562 = vadd.f32 %v38, %v502
    %v563 = vadd.f32 %v39, %v558
    %v564 = vadd.f32 %v40, %v504
    %v565 = vadd.f32 %v41, %v560
    %566 = vst [vmem:[#allocation2] sm:$0xff] %v562
    %567 = vst [vmem:[#allocation2 + $0x8] sm:$0xff] %v563
    %568 = vst [vmem:[#allocation2 + $0x10] sm:$0xff] %v564
    %569 = vst [vmem:[#allocation2 + $0x18] sm:$0xff] %v565
    // Predicated region
    $region22: #{transformer_forward.15} parent=1 // pred_check
      %p570 = pneg %p30
    $region23: #{transformer_forward.15} parent=1 // pred_check_branch
      %572 = sbr.rel (%p570) target = $region25
    $region24: #{transformer_forward.15} parent=1 // pred_region
      %v573 = vld [vmem:[#allocation2] sm:$0xff]
      %v574 = vld [vmem:[#allocation2 + $0x8] sm:$0xff]
      %v575 = vld [vmem:[#allocation2 + $0x10] sm:$0xff]
      %v576 = vld [vmem:[#allocation2 + $0x18] sm:$0xff]
      %v577 = vld [vmem:[%s2] sm:$0xff]
      %v578 = vld [vmem:[%s2 + $0x8] sm:$0xff]
      %v579 = vunpack.c.l.bf16 %v577
      %v580 = vunpack.c.h.bf16 %v577
      %v581 = vunpack.c.l.bf16 %v578
      %v582 = vunpack.c.h.bf16 %v578
      %v583 = vadd.f32 %v573, %v579
      %v584 = vadd.f32 %v574, %v580
      %v585 = vadd.f32 %v575, %v581
      %v586 = vadd.f32 %v576, %v582
      %v587 = vpack.c.bf16 %v584, %v583
      %v588 = vpack.c.bf16 %v586, %v585
      %589 = vst [vmem:[%s3] sm:$0xff] %v587
      %590 = vst [vmem:[%s3 + $0x8] sm:$0xff] %v588
    $region25: #{transformer_forward.15} parent=1 // pred_fallthru
      _
    // Predicated region
    $region26: #{transformer_forward.15} parent=1 // pred_check
      _
    $region27: #{transformer_forward.15} parent=1 // pred_check_branch
      %592 = sbr.rel (0) target = $region29
    $region28: #{transformer_forward.15} parent=1 // pred_region
      _
    $region29: #{transformer_forward.15} parent=1 // pred_fallthru
      _
    // Predicated region
    $region30: #{transformer_forward.15} parent=1 // pred_check
      _
    $region31: #{transformer_forward.15} parent=1 // pred_check_branch
      %594 = sbr.rel (0) target = $region33
    $region32: #{transformer_forward.15} parent=1 // pred_region
      _
    $region33: #{transformer_forward.15} parent=1 // pred_fallthru
      _
    %595 = vsyncpa [#allocation4], 1

// kernel: transformer_forward.21
$region0: #{transformer_forward.21}
  #allocation0 [shape = 'u32[]', space=smem, size = 0x4, offset = 0x4, fixed_abs, tag = 'smem constant byte address 0x4 - core index']
  #allocation1 [shape = 'u32[72,128]{1,0:T(1,128)}', space=vmem, size = 0x9000, scoped, tag = 'internal scratch']
  #allocation2 [shape = 'bf16[16,256]{1,0:T(8,128)(2,1)}', space=vmem, size = 0x2000, scoped, tag = 'scratch operand']
  %s0 = inlined_call_operand.vmem [shape: bf16[16,256], index: 0, kind: input, shape index: {}]
  %s1 = inlined_call_operand.vmem [shape: f32[1,256], index: 1, kind: input, shape index: {}]
  %s2 = inlined_call_operand.vmem [shape: bf16[256,128], index: 2, kind: input, shape index: {}]
  %s3 = inlined_call_operand.hbm [shape: f32[16,128], index: 3, kind: output, shape index: {}]
  %s4 = sld [smem:[#allocation0]]
  $region26: #{transformer_forward.21} parent=0
    _
  %s6 = ssub.s32 1, %s4
  %s7 = scalar_select 0, %s6, %s4
  $region1: #{transformer_forward.21} parent=0
    #allocation3 [shape = 'u8[8192]{0}', space=vmem, size = 0x2000, scoped, tag = 'output window, operand 0, single buffered']
    #allocation4 [shape = 's32[1]{0}', space=sflag, size = 0x4, scoped, tag = 'scoped memory for transformer_forward.21']
    %8 = vsyncpa [#allocation4], 0
    // Predicated region
    $region2: #{transformer_forward.21} parent=1 // pred_check
      _
    $region3: #{transformer_forward.21} parent=1 // pred_check_branch
      %10 = sbr.rel (0) target = $region5
    $region4: #{transformer_forward.21} parent=1 // pred_region
      _
    $region5: #{transformer_forward.21} parent=1 // pred_fallthru
      _
    // Predicated region
    $region6: #{transformer_forward.21} parent=1 // pred_check
      _
    $region7: #{transformer_forward.21} parent=1 // pred_check_branch
      %12 = sbr.rel (0) target = $region9
    $region8: #{transformer_forward.21} parent=1 // pred_region
      _
    $region9: #{transformer_forward.21} parent=1 // pred_fallthru
      _
    // Predicated region
    $region10: #{transformer_forward.21} parent=1 // pred_check
      _
    $region11: #{transformer_forward.21} parent=1 // pred_check_branch
      %14 = sbr.rel (0) target = $region13
    $region12: #{transformer_forward.21} parent=1 // pred_region
      _
    $region13: #{transformer_forward.21} parent=1 // pred_fallthru
      _
    %p15 = scmp.eq.s32.totalorder 0, 0
    // Predicated region
    $region14: #{transformer_forward.21} parent=1 // pred_check
      %p16 = pneg %p15
    $region15: #{transformer_forward.21} parent=1 // pred_check_branch
      %18 = sbr.rel (%p16) target = $region17
    $region16: #{transformer_forward.21} parent=1 // pred_region
      %v19 = vld [vmem:[%s0] sm:$0xff]
      %v20 = vld [vmem:[%s0 + $0x8] sm:$0xff]
      %v21 = vunpack.c.l.bf16 %v19
      %v22 = vunpack.c.h.bf16 %v19
      %v23 = vunpack.c.l.bf16 %v20
      %v24 = vunpack.c.h.bf16 %v20
      %v25 = vmul.f32 %v21, %v21
      %v26 = vmul.f32 %v22, %v22
      %v27 = vmul.f32 %v23, %v23
      %v28 = vmul.f32 %v24, %v24
      %v29 = vadd.f32 %v25, %v26
      %30 = vadd.xlane.f32.xlu0 %v29
      %v31 = vpop.xlane.xlu0 %30
      %v32 = vadd.f32 %v27, %v28
      %33 = vadd.xlane.f32.xlu0 %v32
      %v34 = vpop.xlane.xlu0 %33
      %v35 = vmul.f32 %v31, 0.00390625
      %v36 = vmul.f32 %v34, 0.00390625
      %v37 = vadd.f32 %v35, 1e-06
      %v38 = vadd.f32 %v36, 1e-06
      %v39 = vrsqrt.pop %v37
      %v40 = vmul.f32 %v39, %v37
      %v41 = vmul.f32 %v40, %v39
      %v42 = vmul.f32 0.5, %v41
      %v43 = vsub.f32 1.5, %v42
      %v44 = vmul.f32 %v39, %v43
      %vm45 = vweird.f32 %v37
      %vm46 = vweird.f32 %v39
      %vm47 = vmor %vm45, %vm46
      %v48 = vsel %vm47, %v39, %v44
      %v49 = vrsqrt.pop %v38
      %v50 = vmul.f32 %v49, %v38
      %v51 = vmul.f32 %v50, %v49
      %v52 = vmul.f32 0.5, %v51
      %v53 = vsub.f32 1.5, %v52
      %v54 = vmul.f32 %v49, %v53
      %vm55 = vweird.f32 %v38
      %vm56 = vweird.f32 %v49
      %vm57 = vmor %vm55, %vm56
      %v58 = vsel %vm57, %v49, %v54
      %v59 = vmul.f32 %v21, %v48
      %v60 = vmul.f32 %v22, %v48
      %v61 = vmul.f32 %v23, %v58
      %v62 = vmul.f32 %v24, %v58
      %v63 = vld [vmem:[%s1] sm:$0x3]
      %v65 = vperm.slane %v63, 0
      %v66 = vperm.slane %v63, 1
      %v69 = vmul.f32 %v59, %v65
      %v70 = vmul.f32 %v60, %v66
      %v71 = vmul.f32 %v61, %v65
      %v72 = vmul.f32 %v62, %v66
      %v73 = vpack.c.bf16 %v70, %v69
      %v74 = vpack.c.bf16 %v72, %v71
      %75 = vst [vmem:[#allocation2] sm:$0xff] %v73
      %76 = vst [vmem:[#allocation2 + $0x8] sm:$0xff] %v74
    $region17: #{transformer_forward.21} parent=1 // pred_fallthru
      _
    %v77 = vld [vmem:[#allocation2] sm:$0xff]
    %v78 = vld [vmem:[#allocation2 + $0x8] sm:$0xff]
    %v79 = vld [vmem:[%s2] sm:$0xf]
    %v80 = vld [vmem:[%s2 + $0x4] sm:$0xf]
    %v81 = vld [vmem:[%s2 + $0x8] sm:$0xf]
    %v82 = vld [vmem:[%s2 + $0xc] sm:$0xf]
    %v83 = vld [vmem:[%s2 + $0x10] sm:$0xf]
    %v84 = vld [vmem:[%s2 + $0x14] sm:$0xf]
    %v85 = vld [vmem:[%s2 + $0x18] sm:$0xf]
    %v86 = vld [vmem:[%s2 + $0x1c] sm:$0xf]
    %v87 = vld [vmem:[%s2 + $0x20] sm:$0xf]
    %v88 = vld [vmem:[%s2 + $0x24] sm:$0xf]
    %v89 = vld [vmem:[%s2 + $0x28] sm:$0xf]
    %v90 = vld [vmem:[%s2 + $0x2c] sm:$0xf]
    %v91 = vld [vmem:[%s2 + $0x30] sm:$0xf]
    %v92 = vld [vmem:[%s2 + $0x34] sm:$0xf]
    %v93 = vld [vmem:[%s2 + $0x38] sm:$0xf]
    %v94 = vld [vmem:[%s2 + $0x3c] sm:$0xf]
    %v95 = vld [vmem:[%s2 + $0x40] sm:$0xf]
    %v96 = vld [vmem:[%s2 + $0x44] sm:$0xf]
    %v97 = vld [vmem:[%s2 + $0x48] sm:$0xf]
    %v98 = vld [vmem:[%s2 + $0x4c] sm:$0xf]
    %v99 = vld [vmem:[%s2 + $0x50] sm:$0xf]
    %v100 = vld [vmem:[%s2 + $0x54] sm:$0xf]
    %v101 = vld [vmem:[%s2 + $0x58] sm:$0xf]
    %v102 = vld [vmem:[%s2 + $0x5c] sm:$0xf]
    %v103 = vld [vmem:[%s2 + $0x60] sm:$0xf]
    %v104 = vld [vmem:[%s2 + $0x64] sm:$0xf]
    %v105 = vld [vmem:[%s2 + $0x68] sm:$0xf]
    %v106 = vld [vmem:[%s2 + $0x6c] sm:$0xf]
    %v107 = vld [vmem:[%s2 + $0x70] sm:$0xf]
    %v108 = vld [vmem:[%s2 + $0x74] sm:$0xf]
    %v109 = vld [vmem:[%s2 + $0x78] sm:$0xf]
    %v110 = vld [vmem:[%s2 + $0x7c] sm:$0xf]
    %v113 = vunpack.c.l.b16 %v77
    %v114 = vunpack.c.h.b16 %v77
    %v115 = vunpack.c.l.b16 %v78
    %v116 = vunpack.c.h.b16 %v78
    %v117 = vpack.c.b16 %v115, %v113
    %v118 = vpack.c.b16 %v116, %v114
    %v153 = vunpack.c.l.b16 %v79
    %v154 = vunpack.c.l.b16 %v80
    %v155 = vunpack.c.l.b16 %v81
    %v156 = vunpack.c.l.b16 %v82
    %v157 = vunpack.c.l.b16 %v83
    %v158 = vunpack.c.l.b16 %v84
    %v159 = vunpack.c.l.b16 %v85
    %v160 = vunpack.c.l.b16 %v86
    %v161 = vunpack.c.l.b16 %v87
    %v162 = vunpack.c.l.b16 %v88
    %v163 = vunpack.c.l.b16 %v89
    %v164 = vunpack.c.l.b16 %v90
    %v165 = vunpack.c.l.b16 %v91
    %v166 = vunpack.c.l.b16 %v92
    %v167 = vunpack.c.l.b16 %v93
    %v168 = vunpack.c.l.b16 %v94
    %v169 = vunpack.c.l.b16 %v95
    %v170 = vunpack.c.l.b16 %v96
    %v171 = vunpack.c.l.b16 %v97
    %v172 = vunpack.c.l.b16 %v98
    %v173 = vunpack.c.l.b16 %v99
    %v174 = vunpack.c.l.b16 %v100
    %v175 = vunpack.c.l.b16 %v101
    %v176 = vunpack.c.l.b16 %v102
    %v177 = vunpack.c.l.b16 %v103
    %v178 = vunpack.c.l.b16 %v104
    %v179 = vunpack.c.l.b16 %v105
    %v180 = vunpack.c.l.b16 %v106
    %v181 = vunpack.c.l.b16 %v107
    %v182 = vunpack.c.l.b16 %v108
    %v183 = vunpack.c.l.b16 %v109
    %v184 = vunpack.c.l.b16 %v110
    %v185 = vpack.c.b16 %v154, %v153
    %v186 = vpack.c.b16 %v156, %v155
    %v187 = vpack.c.b16 %v158, %v157
    %v188 = vpack.c.b16 %v160, %v159
    %v189 = vpack.c.b16 %v162, %v161
    %v190 = vpack.c.b16 %v164, %v163
    %v191 = vpack.c.b16 %v166, %v165
    %v192 = vpack.c.b16 %v168, %v167
    %v193 = vpack.c.b16 %v170, %v169
    %v194 = vpack.c.b16 %v172, %v171
    %v195 = vpack.c.b16 %v174, %v173
    %v196 = vpack.c.b16 %v176, %v175
    %v197 = vpack.c.b16 %v178, %v177
    %v198 = vpack.c.b16 %v180, %v179
    %v199 = vpack.c.b16 %v182, %v181
    %v200 = vpack.c.b16 %v184, %v183
    %217 = vmatpush.bf16.msra.mxu0 %v192
    %218 = vmatpush.bf16.msra.mxu0 %v191
    %219 = vmatpush.bf16.msra.mxu0 %v190
    %220 = vmatpush.bf16.msra.mxu0 %v189
    %221 = vmatpush.bf16.msra.mxu0 %v188
    %222 = vmatpush.bf16.msra.mxu0 %v187
    %223 = vmatpush.bf16.msra.mxu0 %v186
    %224 = vmatpush.bf16.msra.mxu0 %v185
    %225 = vmatmul.bf16.gmra.mxu0 %v117
    %v226 = vpop.f32.mrf.mxu0
    %v227 = vadd.f32 0.0, %v226
    %v228 = vpop.f32.mrf.mxu0
    %v229 = vadd.f32 0.0, %v228
    %230 = vdwg.mxu0
    %231 = vmatpush.bf16.msra.mxu0 %v200
    %232 = vmatpush.bf16.msra.mxu0 %v199
    %233 = vmatpush.bf16.msra.mxu0 %v198
    %234 = vmatpush.bf16.msra.mxu0 %v197
    %235 = vmatpush.bf16.msra.mxu0 %v196
    %236 = vmatpush.bf16.msra.mxu0 %v195
    %237 = vmatpush.bf16.msra.mxu0 %v194
    %238 = vmatpush.bf16.msra.mxu0 %v193
    %239 = vmatmul.bf16.gmra.mxu0 %v118
    %v240 = vpop.f32.mrf.mxu0
    %v241 = vadd.f32 %v227, %v240
    %v242 = vpop.f32.mrf.mxu0
    %v243 = vadd.f32 %v229, %v242
    %244 = vdwg.mxu0
    %245 = vst [vmem:[#allocation3] sm:$0xff] %v241
    %246 = vst [vmem:[#allocation3 + $0x8] sm:$0xff] %v243
    // Predicated region
    $region18: #{transformer_forward.21} parent=1 // pred_check
      _
    $region19: #{transformer_forward.21} parent=1 // pred_check_branch
      %248 = sbr.rel (0) target = $region21
    $region20: #{transformer_forward.21} parent=1 // pred_region
      %250 = vsyncadd [#allocation4], 0
      %s251 = sshll.u32 [#allocation3], 4
      %s252 = int_to_ptr.vmem [resolvable:$true] %s251
      %s253 = sshll.u32 %s3, 4
      %s254 = int_to_ptr.hbm [resolvable:$true] %s253
      %259 = dma.vmem_to_hbm [thread:$0]  %s252, 256, %s254, [#allocation4], 128, 128, 8
    $region21: #{transformer_forward.21} parent=1 // pred_fallthru
      _
    // Predicated region
    $region22: #{transformer_forward.21} parent=1 // pred_check
      _
    $region23: #{transformer_forward.21} parent=1 // pred_check_branch
      %261 = sbr.rel (0) target = $region25
    $region24: #{transformer_forward.21} parent=1 // pred_region
      %263 = dma.done [#allocation4], 256
    $region25: #{transformer_forward.21} parent=1 // pred_fallthru
      _
    %264 = vsyncpa [#allocation4], 1

// kernel: transformer_forward.20
$region0: #{transformer_forward.20}
  #allocation0 [shape = 'u32[]', space=smem, size = 0x4, offset = 0x4, fixed_abs, tag = 'smem constant byte address 0x4 - core index']
  #allocation1 [shape = 'u32[72,128]{1,0:T(1,128)}', space=vmem, size = 0x9000, scoped, tag = 'internal scratch']
  #allocation2 [shape = 'f32[16,256]{1,0:T(8,128)}', space=vmem, size = 0x4000, scoped, tag = 'scratch operand']
  %s0 = inlined_call_operand.vmem [shape: bf16[16,512], index: 0, kind: input, shape index: {}]
  %s1 = inlined_call_operand.vmem [shape: bf16[512,256], index: 1, kind: input, shape index: {}]
  %s2 = inlined_call_operand.vmem [shape: bf16[16,256], index: 2, kind: input, shape index: {}]
  %s3 = inlined_call_operand.vmem [shape: bf16[16,256], index: 3, kind: output, shape index: {}]
  %s4 = sld [smem:[#allocation0]]
  $region30: #{transformer_forward.20} parent=0
    _
  %s6 = ssub.s32 1, %s4
  %s7 = scalar_select 0, %s6, %s4
  // Predicated region
  $region2: #{transformer_forward.20} parent=0 // pred_check
    _
  $region3: #{transformer_forward.20} parent=0 // pred_check_branch
    %9 = sbr.rel (0) target = $region5
  $region4: #{transformer_forward.20} parent=0 // pred_region
    _
  $region5: #{transformer_forward.20} parent=0 // pred_fallthru
    _
  // Predicated region
  $region6: #{transformer_forward.20} parent=0 // pred_check
    _
  $region7: #{transformer_forward.20} parent=0 // pred_check_branch
    %11 = sbr.rel (0) target = $region9
  $region8: #{transformer_forward.20} parent=0 // pred_region
    _
  $region9: #{transformer_forward.20} parent=0 // pred_fallthru
    _
  // Predicated region
  $region10: #{transformer_forward.20} parent=0 // pred_check
    _
  $region11: #{transformer_forward.20} parent=0 // pred_check_branch
    %13 = sbr.rel (0) target = $region13
  $region12: #{transformer_forward.20} parent=0 // pred_region
    _
  $region13: #{transformer_forward.20} parent=0 // pred_fallthru
    _
  %p14 = scmp.eq.s32.totalorder 0, 0
  // Predicated region
  $region14: #{transformer_forward.20} parent=0 // pred_check
    %p15 = pneg %p14
  $region15: #{transformer_forward.20} parent=0 // pred_check_branch
    %17 = sbr.rel (%p15) target = $region17
  $region16: #{transformer_forward.20} parent=0 // pred_region
    %18 = vst [vmem:[#allocation2] sm:$0xff] 0.0
    %19 = vst [vmem:[#allocation2 + $0x8] sm:$0xff] 0.0
    %20 = vst [vmem:[#allocation2 + $0x10] sm:$0xff] 0.0
    %21 = vst [vmem:[#allocation2 + $0x18] sm:$0xff] 0.0
  $region17: #{transformer_forward.20} parent=0 // pred_fallthru
    _
  %v22 = vld [vmem:[#allocation2] sm:$0xff]
  %v23 = vld [vmem:[#allocation2 + $0x8] sm:$0xff]
  %v24 = vld [vmem:[#allocation2 + $0x10] sm:$0xff]
  %v25 = vld [vmem:[#allocation2 + $0x18] sm:$0xff]
  %v26 = vld [vmem:[%s0] sm:$0xff]
  %v27 = vld [vmem:[%s0 + $0x8] sm:$0xff]
  %v28 = vld [vmem:[%s0 + $0x10] sm:$0xff]
  %v29 = vld [vmem:[%s0 + $0x18] sm:$0xff]
  %v30 = vld [vmem:[%s1] sm:$0xff]
  %v31 = vld [vmem:[%s1 + $0x8] sm:$0xff]
  %v32 = vld [vmem:[%s1 + $0x10] sm:$0xff]
  %v33 = vld [vmem:[%s1 + $0x18] sm:$0xff]
  %v34 = vld [vmem:[%s1 + $0x20] sm:$0xff]
  %v35 = vld [vmem:[%s1 + $0x28] sm:$0xff]
  %v36 = vld [vmem:[%s1 + $0x30] sm:$0xff]
  %v37 = vld [vmem:[%s1 + $0x38] sm:$0xff]
  %v38 = vld [vmem:[%s1 + $0x40] sm:$0xff]
  %v39 = vld [vmem:[%s1 + $0x48] sm:$0xff]
  %v40 = vld [vmem:[%s1 + $0x50] sm:$0xff]
  %v41 = vld [vmem:[%s1 + $0x58] sm:$0xff]
  %v42 = vld [vmem:[%s1 + $0x60] sm:$0xff]
  %v43 = vld [vmem:[%s1 + $0x68] sm:$0xff]
  %v44 = vld [vmem:[%s1 + $0x70] sm:$0xff]
  %v45 = vld [vmem:[%s1 + $0x78] sm:$0xff]
  %v46 = vld [vmem:[%s1 + $0x80] sm:$0xff]
  %v47 = vld [vmem:[%s1 + $0x88] sm:$0xff]
  %v48 = vld [vmem:[%s1 + $0x90] sm:$0xff]
  %v49 = vld [vmem:[%s1 + $0x98] sm:$0xff]
  %v50 = vld [vmem:[%s1 + $0xa0] sm:$0xff]
  %v51 = vld [vmem:[%s1 + $0xa8] sm:$0xff]
  %v52 = vld [vmem:[%s1 + $0xb0] sm:$0xff]
  %v53 = vld [vmem:[%s1 + $0xb8] sm:$0xff]
  %v54 = vld [vmem:[%s1 + $0xc0] sm:$0xff]
  %v55 = vld [vmem:[%s1 + $0xc8] sm:$0xff]
  %v56 = vld [vmem:[%s1 + $0xd0] sm:$0xff]
  %v57 = vld [vmem:[%s1 + $0xd8] sm:$0xff]
  %v58 = vld [vmem:[%s1 + $0xe0] sm:$0xff]
  %v59 = vld [vmem:[%s1 + $0xe8] sm:$0xff]
  %v60 = vld [vmem:[%s1 + $0xf0] sm:$0xff]
  %v61 = vld [vmem:[%s1 + $0xf8] sm:$0xff]
  %v62 = vld [vmem:[%s1 + $0x100] sm:$0xff]
  %v63 = vld [vmem:[%s1 + $0x108] sm:$0xff]
  %v64 = vld [vmem:[%s1 + $0x110] sm:$0xff]
  %v65 = vld [vmem:[%s1 + $0x118] sm:$0xff]
  %v66 = vld [vmem:[%s1 + $0x120] sm:$0xff]
  %v67 = vld [vmem:[%s1 + $0x128] sm:$0xff]
  %v68 = vld [vmem:[%s1 + $0x130] sm:$0xff]
  %v69 = vld [vmem:[%s1 + $0x138] sm:$0xff]
  %v70 = vld [vmem:[%s1 + $0x140] sm:$0xff]
  %v71 = vld [vmem:[%s1 + $0x148] sm:$0xff]
  %v72 = vld [vmem:[%s1 + $0x150] sm:$0xff]
  %v73 = vld [vmem:[%s1 + $0x158] sm:$0xff]
  %v74 = vld [vmem:[%s1 + $0x160] sm:$0xff]
  %v75 = vld [vmem:[%s1 + $0x168] sm:$0xff]
  %v76 = vld [vmem:[%s1 + $0x170] sm:$0xff]
  %v77 = vld [vmem:[%s1 + $0x178] sm:$0xff]
  %v78 = vld [vmem:[%s1 + $0x180] sm:$0xff]
  %v79 = vld [vmem:[%s1 + $0x188] sm:$0xff]
  %v80 = vld [vmem:[%s1 + $0x190] sm:$0xff]
  %v81 = vld [vmem:[%s1 + $0x198] sm:$0xff]
  %v82 = vld [vmem:[%s1 + $0x1a0] sm:$0xff]
  %v83 = vld [vmem:[%s1 + $0x1a8] sm:$0xff]
  %v84 = vld [vmem:[%s1 + $0x1b0] sm:$0xff]
  %v85 = vld [vmem:[%s1 + $0x1b8] sm:$0xff]
  %v86 = vld [vmem:[%s1 + $0x1c0] sm:$0xff]
  %v87 = vld [vmem:[%s1 + $0x1c8] sm:$0xff]
  %v88 = vld [vmem:[%s1 + $0x1d0] sm:$0xff]
  %v89 = vld [vmem:[%s1 + $0x1d8] sm:$0xff]
  %v90 = vld [vmem:[%s1 + $0x1e0] sm:$0xff]
  %v91 = vld [vmem:[%s1 + $0x1e8] sm:$0xff]
  %v92 = vld [vmem:[%s1 + $0x1f0] sm:$0xff]
  %v93 = vld [vmem:[%s1 + $0x1f8] sm:$0xff]
  %v98 = vunpack.c.l.b16 %v26
  %v99 = vunpack.c.h.b16 %v26
  %v100 = vunpack.c.l.b16 %v27
  %v101 = vunpack.c.h.b16 %v27
  %v102 = vunpack.c.l.b16 %v28
  %v103 = vunpack.c.h.b16 %v28
  %v104 = vunpack.c.l.b16 %v29
  %v105 = vunpack.c.h.b16 %v29
  %v106 = vpack.c.b16 %v102, %v98
  %v107 = vpack.c.b16 %v103, %v99
  %v108 = vpack.c.b16 %v104, %v100
  %v109 = vpack.c.b16 %v105, %v101
  %v178 = vunpack.c.l.b16 %v30
  %v179 = vunpack.c.h.b16 %v30
  %v180 = vunpack.c.l.b16 %v31
  %v181 = vunpack.c.h.b16 %v31
  %v182 = vunpack.c.l.b16 %v32
  %v183 = vunpack.c.h.b16 %v32
  %v184 = vunpack.c.l.b16 %v33
  %v185 = vunpack.c.h.b16 %v33
  %v186 = vunpack.c.l.b16 %v34
  %v187 = vunpack.c.h.b16 %v34
  %v188 = vunpack.c.l.b16 %v35
  %v189 = vunpack.c.h.b16 %v35
  %v190 = vunpack.c.l.b16 %v36
  %v191 = vunpack.c.h.b16 %v36
  %v192 = vunpack.c.l.b16 %v37
  %v193 = vunpack.c.h.b16 %v37
  %v194 = vunpack.c.l.b16 %v38
  %v195 = vunpack.c.h.b16 %v38
  %v196 = vunpack.c.l.b16 %v39
  %v197 = vunpack.c.h.b16 %v39
  %v198 = vunpack.c.l.b16 %v40
  %v199 = vunpack.c.h.b16 %v40
  %v200 = vunpack.c.l.b16 %v41
  %v201 = vunpack.c.h.b16 %v41
  %v202 = vunpack.c.l.b16 %v42
  %v203 = vunpack.c.h.b16 %v42
  %v204 = vunpack.c.l.b16 %v43
  %v205 = vunpack.c.h.b16 %v43
  %v206 = vunpack.c.l.b16 %v44
  %v207 = vunpack.c.h.b16 %v44
  %v208 = vunpack.c.l.b16 %v45
  %v209 = vunpack.c.h.b16 %v45
  %v210 = vunpack.c.l.b16 %v46
  %v211 = vunpack.c.h.b16 %v46
  %v212 = vunpack.c.l.b16 %v47
  %v213 = vunpack.c.h.b16 %v47
  %v214 = vunpack.c.l.b16 %v48
  %v215 = vunpack.c.h.b16 %v48
  %v216 = vunpack.c.l.b16 %v49
  %v217 = vunpack.c.h.b16 %v49
  %v218 = vunpack.c.l.b16 %v50
  %v219 = vunpack.c.h.b16 %v50
  %v220 = vunpack.c.l.b16 %v51
  %v221 = vunpack.c.h.b16 %v51
  %v222 = vunpack.c.l.b16 %v52
  %v223 = vunpack.c.h.b16 %v52
  %v224 = vunpack.c.l.b16 %v53
  %v225 = vunpack.c.h.b16 %v53
  %v226 = vunpack.c.l.b16 %v54
  %v227 = vunpack.c.h.b16 %v54
  %v228 = vunpack.c.l.b16 %v55
  %v229 = vunpack.c.h.b16 %v55
  %v230 = vunpack.c.l.b16 %v56
  %v231 = vunpack.c.h.b16 %v56
  %v232 = vunpack.c.l.b16 %v57
  %v233 = vunpack.c.h.b16 %v57
  %v234 = vunpack.c.l.b16 %v58
  %v235 = vunpack.c.h.b16 %v58
  %v236 = vunpack.c.l.b16 %v59
  %v237 = vunpack.c.h.b16 %v59
  %v238 = vunpack.c.l.b16 %v60
  %v239 = vunpack.c.h.b16 %v60
  %v240 = vunpack.c.l.b16 %v61
  %v241 = vunpack.c.h.b16 %v61
  %v242 = vunpack.c.l.b16 %v62
  %v243 = vunpack.c.h.b16 %v62
  %v244 = vunpack.c.l.b16 %v63
  %v245 = vunpack.c.h.b16 %v63
  %v246 = vunpack.c.l.b16 %v64
  %v247 = vunpack.c.h.b16 %v64
  %v248 = vunpack.c.l.b16 %v65
  %v249 = vunpack.c.h.b16 %v65
  %v250 = vunpack.c.l.b16 %v66
  %v251 = vunpack.c.h.b16 %v66
  %v252 = vunpack.c.l.b16 %v67
  %v253 = vunpack.c.h.b16 %v67
  %v254 = vunpack.c.l.b16 %v68
  %v255 = vunpack.c.h.b16 %v68
  %v256 = vunpack.c.l.b16 %v69
  %v257 = vunpack.c.h.b16 %v69
  %v258 = vunpack.c.l.b16 %v70
  %v259 = vunpack.c.h.b16 %v70
  %v260 = vunpack.c.l.b16 %v71
  %v261 = vunpack.c.h.b16 %v71
  %v262 = vunpack.c.l.b16 %v72
  %v263 = vunpack.c.h.b16 %v72
  %v264 = vunpack.c.l.b16 %v73
  %v265 = vunpack.c.h.b16 %v73
  %v266 = vunpack.c.l.b16 %v74
  %v267 = vunpack.c.h.b16 %v74
  %v268 = vunpack.c.l.b16 %v75
  %v269 = vunpack.c.h.b16 %v75
  %v270 = vunpack.c.l.b16 %v76
  %v271 = vunpack.c.h.b16 %v76
  %v272 = vunpack.c.l.b16 %v77
  %v273 = vunpack.c.h.b16 %v77
  %v274 = vunpack.c.l.b16 %v78
  %v275 = vunpack.c.h.b16 %v78
  %v276 = vunpack.c.l.b16 %v79
  %v277 = vunpack.c.h.b16 %v79
  %v278 = vunpack.c.l.b16 %v80
  %v279 = vunpack.c.h.b16 %v80
  %v280 = vunpack.c.l.b16 %v81
  %v281 = vunpack.c.h.b16 %v81
  %v282 = vunpack.c.l.b16 %v82
  %v283 = vunpack.c.h.b16 %v82
  %v284 = vunpack.c.l.b16 %v83
  %v285 = vunpack.c.h.b16 %v83
  %v286 = vunpack.c.l.b16 %v84
  %v287 = vunpack.c.h.b16 %v84
  %v288 = vunpack.c.l.b16 %v85
  %v289 = vunpack.c.h.b16 %v85
  %v290 = vunpack.c.l.b16 %v86
  %v291 = vunpack.c.h.b16 %v86
  %v292 = vunpack.c.l.b16 %v87
  %v293 = vunpack.c.h.b16 %v87
  %v294 = vunpack.c.l.b16 %v88
  %v295 = vunpack.c.h.b16 %v88
  %v296 = vunpack.c.l.b16 %v89
  %v297 = vunpack.c.h.b16 %v89
  %v298 = vunpack.c.l.b16 %v90
  %v299 = vunpack.c.h.b16 %v90
  %v300 = vunpack.c.l.b16 %v91
  %v301 = vunpack.c.h.b16 %v91
  %v302 = vunpack.c.l.b16 %v92
  %v303 = vunpack.c.h.b16 %v92
  %v304 = vunpack.c.l.b16 %v93
  %v305 = vunpack.c.h.b16 %v93
  %v306 = vpack.c.b16 %v180, %v178
  %v307 = vpack.c.b16 %v181, %v179
  %v308 = vpack.c.b16 %v184, %v182
  %v309 = vpack.c.b16 %v185, %v183
  %v310 = vpack.c.b16 %v188, %v186
  %v311 = vpack.c.b16 %v189, %v187
  %v312 = vpack.c.b16 %v192, %v190
  %v313 = vpack.c.b16 %v193, %v191
  %v314 = vpack.c.b16 %v196, %v194
  %v315 = vpack.c.b16 %v197, %v195
  %v316 = vpack.c.b16 %v200, %v198
  %v317 = vpack.c.b16 %v201, %v199
  %v318 = vpack.c.b16 %v204, %v202
  %v319 = vpack.c.b16 %v205, %v203
  %v320 = vpack.c.b16 %v208, %v206
  %v321 = vpack.c.b16 %v209, %v207
  %v322 = vpack.c.b16 %v212, %v210
  %v323 = vpack.c.b16 %v213, %v211
  %v324 = vpack.c.b16 %v216, %v214
  %v325 = vpack.c.b16 %v217, %v215
  %v326 = vpack.c.b16 %v220, %v218
  %v327 = vpack.c.b16 %v221, %v219
  %v328 = vpack.c.b16 %v224, %v222
  %v329 = vpack.c.b16 %v225, %v223
  %v330 = vpack.c.b16 %v228, %v226
  %v331 = vpack.c.b16 %v229, %v227
  %v332 = vpack.c.b16 %v232, %v230
  %v333 = vpack.c.b16 %v233, %v231
  %v334 = vpack.c.b16 %v236, %v234
  %v335 = vpack.c.b16 %v237, %v235
  %v336 = vpack.c.b16 %v240, %v238
  %v337 = vpack.c.b16 %v241, %v239
  %v338 = vpack.c.b16 %v244, %v242
  %v339 = vpack.c.b16 %v245, %v243
  %v340 = vpack.c.b16 %v248, %v246
  %v341 = vpack.c.b16 %v249, %v247
  %v342 = vpack.c.b16 %v252, %v250
  %v343 = vpack.c.b16 %v253, %v251
  %v344 = vpack.c.b16 %v256, %v254
  %v345 = vpack.c.b16 %v257, %v255
  %v346 = vpack.c.b16 %v260, %v258
  %v347 = vpack.c.b16 %v261, %v259
  %v348 = vpack.c.b16 %v264, %v262
  %v349 = vpack.c.b16 %v265, %v263
  %v350 = vpack.c.b16 %v268, %v266
  %v351 = vpack.c.b16 %v269, %v267
  %v352 = vpack.c.b16 %v272, %v270
  %v353 = vpack.c.b16 %v273, %v271
  %v354 = vpack.c.b16 %v276, %v274
  %v355 = vpack.c.b16 %v277, %v275
  %v356 = vpack.c.b16 %v280, %v278
  %v357 = vpack.c.b16 %v281, %v279
  %v358 = vpack.c.b16 %v284, %v282
  %v359 = vpack.c.b16 %v285, %v283
  %v360 = vpack.c.b16 %v288, %v286
  %v361 = vpack.c.b16 %v289, %v287
  %v362 = vpack.c.b16 %v292, %v290
  %v363 = vpack.c.b16 %v293, %v291
  %v364 = vpack.c.b16 %v296, %v294
  %v365 = vpack.c.b16 %v297, %v295
  %v366 = vpack.c.b16 %v300, %v298
  %v367 = vpack.c.b16 %v301, %v299
  %v368 = vpack.c.b16 %v304, %v302
  %v369 = vpack.c.b16 %v305, %v303
  %434 = vmatpush.bf16.msra.mxu0 %v320
  %435 = vmatpush.bf16.msra.mxu0 %v318
  %436 = vmatpush.bf16.msra.mxu0 %v316
  %437 = vmatpush.bf16.msra.mxu0 %v314
  %438 = vmatpush.bf16.msra.mxu0 %v312
  %439 = vmatpush.bf16.msra.mxu0 %v310
  %440 = vmatpush.bf16.msra.mxu0 %v308
  %441 = vmatpush.bf16.msra.mxu0 %v306
  %442 = vmatmul.bf16.gmra.mxu0 %v106
  %v443 = vpop.f32.mrf.mxu0
  %v444 = vadd.f32 0.0, %v443
  %v445 = vpop.f32.mrf.mxu0
  %v446 = vadd.f32 0.0, %v445
  %447 = vdwg.mxu0
  %448 = vmatpush.bf16.msra.mxu0 %v336
  %449 = vmatpush.bf16.msra.mxu0 %v334
  %450 = vmatpush.bf16.msra.mxu0 %v332
  %451 = vmatpush.bf16.msra.mxu0 %v330
  %452 = vmatpush.bf16.msra.mxu0 %v328
  %453 = vmatpush.bf16.msra.mxu0 %v326
  %454 = vmatpush.bf16.msra.mxu0 %v324
  %455 = vmatpush.bf16.msra.mxu0 %v322
  %456 = vmatmul.bf16.gmra.mxu0 %v107
  %v457 = vpop.f32.mrf.mxu0
  %v458 = vadd.f32 %v444, %v457
  %v459 = vpop.f32.mrf.mxu0
  %v460 = vadd.f32 %v446, %v459
  %461 = vdwg.mxu0
  %462 = vmatpush.bf16.msra.mxu0 %v352
  %463 = vmatpush.bf16.msra.mxu0 %v350
  %464 = vmatpush.bf16.msra.mxu0 %v348
  %465 = vmatpush.bf16.msra.mxu0 %v346
  %466 = vmatpush.bf16.msra.mxu0 %v344
  %467 = vmatpush.bf16.msra.mxu0 %v342
  %468 = vmatpush.bf16.msra.mxu0 %v340
  %469 = vmatpush.bf16.msra.mxu0 %v338
  %470 = vmatmul.bf16.gmra.mxu0 %v108
  %v471 = vpop.f32.mrf.mxu0
  %v472 = vadd.f32 %v458, %v471
  %v473 = vpop.f32.mrf.mxu0
  %v474 = vadd.f32 %v460, %v473
  %475 = vdwg.mxu0
  %476 = vmatpush.bf16.msra.mxu0 %v368
  %477 = vmatpush.bf16.msra.mxu0 %v366
  %478 = vmatpush.bf16.msra.mxu0 %v364
  %479 = vmatpush.bf16.msra.mxu0 %v362
  %480 = vmatpush.bf16.msra.mxu0 %v360
  %481 = vmatpush.bf16.msra.mxu0 %v358
  %482 = vmatpush.bf16.msra.mxu0 %v356
  %483 = vmatpush.bf16.msra.mxu0 %v354
  %484 = vmatmul.bf16.gmra.mxu0 %v109
  %v485 = vpop.f32.mrf.mxu0
  %v486 = vadd.f32 %v472, %v485
  %v487 = vpop.f32.mrf.mxu0
  %v488 = vadd.f32 %v474, %v487
  %489 = vdwg.mxu0
  %490 = vmatpush.bf16.msra.mxu0 %v321
  %491 = vmatpush.bf16.msra.mxu0 %v319
  %492 = vmatpush.bf16.msra.mxu0 %v317
  %493 = vmatpush.bf16.msra.mxu0 %v315
  %494 = vmatpush.bf16.msra.mxu0 %v313
  %495 = vmatpush.bf16.msra.mxu0 %v311
  %496 = vmatpush.bf16.msra.mxu0 %v309
  %497 = vmatpush.bf16.msra.mxu0 %v307
  %498 = vmatmul.bf16.gmra.mxu0 %v106
  %v499 = vpop.f32.mrf.mxu0
  %v500 = vadd.f32 0.0, %v499
  %v501 = vpop.f32.mrf.mxu0
  %v502 = vadd.f32 0.0, %v501
  %503 = vdwg.mxu0
  %504 = vmatpush.bf16.msra.mxu0 %v337
  %505 = vmatpush.bf16.msra.mxu0 %v335
  %506 = vmatpush.bf16.msra.mxu0 %v333
  %507 = vmatpush.bf16.msra.mxu0 %v331
  %508 = vmatpush.bf16.msra.mxu0 %v329
  %509 = vmatpush.bf16.msra.mxu0 %v327
  %510 = vmatpush.bf16.msra.mxu0 %v325
  %511 = vmatpush.bf16.msra.mxu0 %v323
  %512 = vmatmul.bf16.gmra.mxu0 %v107
  %v513 = vpop.f32.mrf.mxu0
  %v514 = vadd.f32 %v500, %v513
  %v515 = vpop.f32.mrf.mxu0
  %v516 = vadd.f32 %v502, %v515
  %517 = vdwg.mxu0
  %518 = vmatpush.bf16.msra.mxu0 %v353
  %519 = vmatpush.bf16.msra.mxu0 %v351
  %520 = vmatpush.bf16.msra.mxu0 %v349
  %521 = vmatpush.bf16.msra.mxu0 %v347
  %522 = vmatpush.bf16.msra.mxu0 %v345
  %523 = vmatpush.bf16.msra.mxu0 %v343
  %524 = vmatpush.bf16.msra.mxu0 %v341
  %525 = vmatpush.bf16.msra.mxu0 %v339
  %526 = vmatmul.bf16.gmra.mxu0 %v108
  %v527 = vpop.f32.mrf.mxu0
  %v528 = vadd.f32 %v514, %v527
  %v529 = vpop.f32.mrf.mxu0
  %v530 = vadd.f32 %v516, %v529
  %531 = vdwg.mxu0
  %532 = vmatpush.bf16.msra.mxu0 %v369
  %533 = vmatpush.bf16.msra.mxu0 %v367
  %534 = vmatpush.bf16.msra.mxu0 %v365
  %535 = vmatpush.bf16.msra.mxu0 %v363
  %536 = vmatpush.bf16.msra.mxu0 %v361
  %537 = vmatpush.bf16.msra.mxu0 %v359
  %538 = vmatpush.bf16.msra.mxu0 %v357
  %539 = vmatpush.bf16.msra.mxu0 %v355
  %540 = vmatmul.bf16.gmra.mxu0 %v109
  %v541 = vpop.f32.mrf.mxu0
  %v542 = vadd.f32 %v528, %v541
  %v543 = vpop.f32.mrf.mxu0
  %v544 = vadd.f32 %v530, %v543
  %545 = vdwg.mxu0
  %v546 = vadd.f32 %v22, %v486
  %v547 = vadd.f32 %v23, %v542
  %v548 = vadd.f32 %v24, %v488
  %v549 = vadd.f32 %v25, %v544
  %550 = vst [vmem:[#allocation2] sm:$0xff] %v546
  %551 = vst [vmem:[#allocation2 + $0x8] sm:$0xff] %v547
  %552 = vst [vmem:[#allocation2 + $0x10] sm:$0xff] %v548
  %553 = vst [vmem:[#allocation2 + $0x18] sm:$0xff] %v549
  // Predicated region
  $region18: #{transformer_forward.20} parent=0 // pred_check
    %p554 = pneg %p14
  $region19: #{transformer_forward.20} parent=0 // pred_check_branch
    %556 = sbr.rel (%p554) target = $region21
  $region20: #{transformer_forward.20} parent=0 // pred_region
    %v557 = vld [vmem:[#allocation2] sm:$0xff]
    %v558 = vld [vmem:[#allocation2 + $0x8] sm:$0xff]
    %v559 = vld [vmem:[#allocation2 + $0x10] sm:$0xff]
    %v560 = vld [vmem:[#allocation2 + $0x18] sm:$0xff]
    %v561 = vld [vmem:[%s2] sm:$0xff]
    %v562 = vld [vmem:[%s2 + $0x8] sm:$0xff]
    %v563 = vunpack.c.l.bf16 %v561
    %v564 = vunpack.c.h.bf16 %v561
    %v565 = vunpack.c.l.bf16 %v562
    %v566 = vunpack.c.h.bf16 %v562
    %v567 = vadd.f32 %v557, %v563
    %v568 = vadd.f32 %v558, %v564
    %v569 = vadd.f32 %v559, %v565
    %v570 = vadd.f32 %v560, %v566
    %v571 = vpack.c.bf16 %v568, %v567
    %v572 = vpack.c.bf16 %v570, %v569
    %573 = vst [vmem:[%s3] sm:$0xff] %v571
    %574 = vst [vmem:[%s3 + $0x8] sm:$0xff] %v572
  $region21: #{transformer_forward.20} parent=0 // pred_fallthru
    _
  // Predicated region
  $region22: #{transformer_forward.20} parent=0 // pred_check
    _
  $region23: #{transformer_forward.20} parent=0 // pred_check_branch
    %576 = sbr.rel (0) target = $region25
  $region24: #{transformer_forward.20} parent=0 // pred_region
    _
  $region25: #{transformer_forward.20} parent=0 // pred_fallthru
    _
  // Predicated region
  $region26: #{transformer_forward.20} parent=0 // pred_check
    _
  $region27: #{transformer_forward.20} parent=0 // pred_check_branch
    %578 = sbr.rel (0) target = $region29
  $region28: #{transformer_forward.20} parent=0 // pred_region
    _
  $region29: #{transformer_forward.20} parent=0 // pred_fallthru
    _

</llo_original>
